<compile_context>
chip_gen: v6e
topology: v6e:2x2x1
jax: 0.10.0
libtpu: 0.0.40
codegen_flags: <defaults>
</compile_context>

<pallas_src>
import functools

import numpy as np
import jax
import jax.numpy as jnp
from jax.experimental import pallas as pl
from jax.experimental.pallas import tpu as pltpu


def _adaptive_avg_pool_matrix(out_size, in_size):
    """Row-stochastic matrix reproducing torch.nn.AdaptiveAvgPool2d bin rule."""
    P = np.zeros((out_size, in_size), dtype=np.float32)
    for i in range(out_size):
        start = (i * in_size) // out_size
        end = -(-((i + 1) * in_size) // out_size)  # ceil((i+1)*in/out)
        P[i, start:end] = 1.0 / (end - start)
    return P


def _bilinear_upsample_matrix(out_size, in_size):
    """Bilinear interp matrix, align_corners=False (current F.upsample default)."""
    U = np.zeros((out_size, in_size), dtype=np.float32)
    scale = in_size / out_size
    for i in range(out_size):
        src = (i + 0.5) * scale - 0.5
        src = max(src, 0.0)
        i0 = min(int(np.floor(src)), in_size - 1)
        i1 = min(i0 + 1, in_size - 1)
        frac = src - i0
        U[i, i0] += 1.0 - frac
        U[i, i1] += frac
    return U


def pyramid_pooling_module(x, conv_weights, pyramid_sizes=(1, 2, 3, 6), hw_tile=None):
    """x: (N, C, H, W).  conv_weights: (S, C//S, C) 1x1-conv weights (no bias).

    Returns (N, S*(C//S) + C, H, W) = concat([stage outputs..., input], channel axis).
    Storage dtype follows x.dtype (use bfloat16 for the HBM-bound production
    config); all matmul accumulation is float32.
    """
    N, C, H, W = x.shape
    S = len(pyramid_sizes)
    assert C % S == 0, "in_channels must be divisible by len(pyramid_sizes)"
    C_out = C // S
    SC = S * C_out                       # == C
    assert C % 8 == 0, "channel count must be a multiple of 8 (TPU sublane width)"
    HW = H * W
    T = int(sum(s * s for s in pyramid_sizes))   # total pooled cells (50 by default)
    dt = x.dtype
    itemsize = jnp.dtype(dt).itemsize

    # ---- spatial tiling: lane-dense (multiple-of-128) HW tiles --------------
    hw_pad = -(-HW // 128) * 128

    def _vmem_need(tile):
        # double-buffered x/out/poolT/upT tiles + worst-case double-buffered w
        # + f32 scratch accumulators.
        return (2 * 2 * C * tile * itemsize
                + 2 * 2 * tile * T * itemsize
                + 2 * SC * C * itemsize
                + (C * T + SC * T) * 4)

    if hw_tile is None:
        hw_tile = 128
        for cand in (1024, 896, 768, 640, 512, 384, 256):
            if cand <= hw_pad and -(-hw_pad // cand) * cand - hw_pad <= hw_pad // 16:
                hw_tile = cand
                break
    hw_tile = min(int(hw_tile), hw_pad)
    assert hw_tile % 128 == 0, "hw_tile must be a multiple of 128 lanes"
    # keep per-step VMEM comfortably under v7x's 64 MiB per-TC budget
    while hw_tile > 128 and _vmem_need(hw_tile) > 48 * 2**20:
        hw_tile -= 128
    hw_pad = -(-hw_pad // hw_tile) * hw_tile
    J = hw_pad // hw_tile
    last_j = J - 1

    # ---- host glue: factored per-stage pool / upsample operators ------------
    poolT_np = np.zeros((hw_pad, T), dtype=np.float32)   # pooled = x_row @ poolT
    upT_np = np.zeros((T, hw_pad), dtype=np.float32)     # up     = z_row @ upT
    stage_offsets = []
    off = 0
    for s in pyramid_sizes:
        Ph = _adaptive_avg_pool_matrix(s, H)
        Pw = _adaptive_avg_pool_matrix(s, W)
        Uh = _bilinear_upsample_matrix(H, s)
        Uw = _bilinear_upsample_matrix(W, s)
        poolT_np[:HW, off:off + s * s] = np.kron(Ph, Pw).T   # (HW, s^2)
        upT_np[off:off + s * s, :HW] = np.kron(Uh, Uw).T     # (s^2, HW)
        stage_offsets.append(off)
        off += s * s
    poolT_all = jnp.asarray(poolT_np, dtype=dt)
    upT_all = jnp.asarray(upT_np, dtype=dt)
    w_stack = jnp.asarray(conv_weights, dtype=dt).reshape(SC, C)

    x_flat = x.reshape(N, C, HW)
    if hw_pad != HW:
        x_flat = jnp.pad(x_flat, ((0, 0), (0, 0), (0, hw_pad - HW)))

    # ---- kernel --------------------------------------------------------------
    def _ppm_kernel(x_ref, poolT_ref, w_ref, upT_ref, o_ref,
                    pooled_ref, z_ref, copy_sem, *, dma_identity):
        p = pl.program_id(1)          # 0: pool + identity phase, 1: conv + upsample
        j = pl.program_id(2)          # spatial (HW) tile index

        # ---- phase 0: identity channels + pooled accumulation ---------------
        @pl.when(p == 0)
        def _phase0():
            if dma_identity:
                # Identity branch of torch.cat: copy the x tile into the tail
                # output channels via DMA so it overlaps the pooling matmul.
                cp = pltpu.make_async_copy(x_ref, o_ref, copy_sem)
                cp.start()

            @pl.when(j == 0)
            def _init():
                pooled_ref[...] = jnp.zeros_like(pooled_ref)

            pooled_ref[...] += jnp.dot(x_ref[...], poolT_ref[...],
                                       preferred_element_type=jnp.float32)
            if dma_identity:
                cp.wait()
            else:
                o_ref[...] = x_ref[...]

        # ---- phase 1, first tile: per-stage 1x1 convs (no dense mask matmul)
        @pl.when(jnp.logical_and(p == 1, j == 0))
        def _conv1x1():
            pooled = pooled_ref[...]                           # (C, T) f32
            row_blocks = []
            for i, s in enumerate(pyramid_sizes):
                c0, t0, ss = i * C_out, stage_offsets[i], s * s
                z_s = jnp.dot(w_ref[c0:c0 + C_out, :].astype(jnp.float32),
                              pooled[:, t0:t0 + ss],
                              preferred_element_type=jnp.float32)   # (C_out, s^2)
                pieces = []
                if t0:
                    pieces.append(jnp.zeros((C_out, t0), jnp.float32))
                pieces.append(z_s)
                if t0 + ss < T:
                    pieces.append(jnp.zeros((C_out, T - t0 - ss), jnp.float32))
                row_blocks.append(pieces[0] if len(pieces) == 1
                                  else jnp.concatenate(pieces, axis=1))
            z_ref[...] = jnp.concatenate(row_blocks, axis=0)   # block-diag (SC, T)

        # ---- phase 1: bilinear upsample of all stages for this HW tile ------
        @pl.when(p == 1)
        def _upsample():
            up = jnp.dot(z_ref[...].astype(upT_ref.dtype), upT_ref[...],
                         preferred_element_type=jnp.float32)   # (SC, hw_tile)
            o_ref[...] = up.astype(o_ref.dtype)

    # ---- cost / VMEM budget (derived from actual tile sizes) -----------------
    flops = 2 * N * (C * hw_pad * T + C_out * C * T + SC * T * hw_pad)
    bytes_accessed = itemsize * (N * C * hw_pad            # x read
                                 + N * 2 * C * hw_pad      # output write
                                 + 2 * T * hw_pad + SC * C)
    cost = pl.CostEstimate(flops=int(flops), transcendentals=0,
                           bytes_accessed=int(bytes_accessed))
    vmem_limit = int(min(100 * 2**20, max(32 * 2**20, int(1.25 * _vmem_need(hw_tile)))))

    def _invoke(w_single_buffer, dma_identity):
        w_kwargs = {}
        if w_single_buffer:
            # Grid-invariant operand: single-buffer it (double-buffering a
            # constant block is pure VMEM waste).
            w_kwargs["pipeline_mode"] = pl.Buffered(1)
        grid_spec = pltpu.PrefetchScalarGridSpec(
            num_scalar_prefetch=0,
            grid=(N, 2, J),
            in_specs=[
                # x: HW tile j during phase 0; pinned to the last tile during
                # phase 1 (unchanged block index -> no redundant DMA).
                pl.BlockSpec((None, C, hw_tile),
                             lambda n, p, j: (n, 0, (1 - p) * j + p * last_j)),
                pl.BlockSpec((hw_tile, T),
                             lambda n, p, j: ((1 - p) * j + p * last_j, 0)),
                # 1x1-conv weights: grid-invariant (fetched from HBM once).
                pl.BlockSpec((SC, C), lambda n, p, j: (0, 0), **w_kwargs),
                # upsample operator: only advances during phase 1.
                pl.BlockSpec((T, hw_tile), lambda n, p, j: (0, p * j)),
            ],
            # phase 0 writes the identity channels [C:2C), phase 1 the stage
            # channels [0:C); every (C, hw_tile) output block is written once
            # and every store is full-lane dense.
            out_specs=pl.BlockSpec((None, C, hw_tile),
                                   lambda n, p, j: (n, 1 - p, j)),
            scratch_shapes=[
                pltpu.VMEM((C, T), jnp.float32),    # pooled accumulator
                pltpu.VMEM((SC, T), jnp.float32),   # block-diagonal conv output
                pltpu.SemaphoreType.DMA(()),        # identity-copy semaphore
            ],
        )
        return pl.pallas_call(
            functools.partial(_ppm_kernel, dma_identity=dma_identity),
            out_shape=jax.ShapeDtypeStruct((N, 2 * C, hw_pad), dt),
            grid_spec=grid_spec,
            compiler_params=pltpu.CompilerParams(
                dimension_semantics=("parallel", "arbitrary", "arbitrary"),
                vmem_limit_bytes=vmem_limit),
            cost_estimate=cost,
        )(x_flat, poolT_all, w_stack, upT_all)

    # Fastest-supported variant first; degrade gracefully on JAX/Mosaic builds
    # that reject pl.Buffered(1) or the in-kernel VMEM->VMEM identity DMA.
    out_flat = None
    last_err = None
    for cfg in ((True, True), (False, True), (False, False)):
        try:
            out_flat = _invoke(*cfg)
            break
        except Exception as e:   # feature detection across JAX versions
            last_err = e
    if out_flat is None:
        raise last_err

    out_flat = out_flat[:, :, :HW]
    return out_flat.reshape(N, SC + C, H, W)


def _reference(x, conv_weights, pyramid_sizes=(1, 2, 3, 6)):
    """Pure-JAX reference reproducing pool -> 1x1 conv -> bilinear upsample."""
    N, C, H, W = x.shape
    outs = []
    for idx, s in enumerate(pyramid_sizes):
        Ph = jnp.asarray(_adaptive_avg_pool_matrix(s, H))
        Pw = jnp.asarray(_adaptive_avg_pool_matrix(s, W))
        Uh = jnp.asarray(_bilinear_upsample_matrix(H, s))
        Uw = jnp.asarray(_bilinear_upsample_matrix(W, s))
        pooled = jnp.einsum('ah,nchw,bw->ncab', Ph, x, Pw)
        conv = jnp.einsum('oc,ncab->noab', conv_weights[idx], pooled)
        up = jnp.einsum('ia,noab,jb->noij', Uh, conv, Uw)
        outs.append(up)
    outs.append(x)
    return jnp.concatenate(outs, axis=1)


if __name__ == "__main__":
    key = jax.random.PRNGKey(0)
    kx, kw = jax.random.split(key)

    N, C, H, W = 2, 8, 16, 16
    pyramid_sizes = (1, 2, 3, 6)
    S = len(pyramid_sizes)
    C_out = C // S   # int(in_channels / len(pyramid_sizes)) = 2

    x = jax.random.normal(kx, (N, C, H, W), dtype=jnp.float32)
    # Deterministic 1x1 conv weights: one (C_out, C) matrix per pyramid stage
    # (== nn.Conv2d(C, C_out, kernel_size=1, bias=False).weight[..., 0, 0]).
    conv_weights = 0.1 * jax.random.normal(kw, (S, C_out, C), dtype=jnp.float32)

    ref = _reference(x, conv_weights, pyramid_sizes)

    # 1) f32 path, forced multi-tile spatial pipeline (hw_tile=128 -> 2 HW tiles).
    out = jax.block_until_ready(
        pyramid_pooling_module(x, conv_weights, pyramid_sizes, hw_tile=128))
    assert out.shape == (N, S * C_out + C, H, W), out.shape
    assert jnp.allclose(out, ref, atol=2e-4, rtol=2e-4), "f32 mismatch vs reference"

    # 2) bf16 storage (f32 accumulation) -- the HBM-bound production config.
    out_bf16 = jax.block_until_ready(
        pyramid_pooling_module(x.astype(jnp.bfloat16), conv_weights, pyramid_sizes))
    assert jnp.allclose(out_bf16.astype(jnp.float32), ref, atol=5e-2, rtol=5e-2), \
        "bf16 mismatch vs reference"

    # 3) spatial size that is not a multiple of 128 exercises the lane-padding path.
    x2 = jax.random.normal(jax.random.PRNGKey(1), (1, C, 10, 12), dtype=jnp.float32)
    out2 = jax.block_until_ready(
        pyramid_pooling_module(x2, conv_weights, pyramid_sizes))
    ref2 = _reference(x2, conv_weights, pyramid_sizes)
    assert jnp.allclose(out2, ref2, atol=2e-4, rtol=2e-4), "padded-HW mismatch"

    print("KERNEL_OK")
</pallas_src>

<mosaic_0001>
module attributes {stable_mosaic.version = 11 : i64} {
  func.func @_ppm_kernel(%arg0: i32, %arg1: i32, %arg2: i32, %arg3: memref<1x8x128xf32, #tpu.memory_space<vmem>>, %arg4: memref<128x50xf32, #tpu.memory_space<vmem>>, %arg5: memref<8x8xf32, #tpu.memory_space<vmem>>, %arg6: memref<50x128xf32, #tpu.memory_space<vmem>>, %arg7: memref<1x8x128xf32, #tpu.memory_space<vmem>>, %arg8: memref<8x50xf32, #tpu.memory_space<vmem>>, %arg9: memref<8x50xf32, #tpu.memory_space<vmem>>, %arg10: memref<!tpu.dma_semaphore, #tpu.memory_space<semaphore_mem>>) attributes {dimension_semantics = [#tpu.dimension_semantics<parallel>, #tpu.dimension_semantics<arbitrary>, #tpu.dimension_semantics<arbitrary>], iteration_bounds = array<i64: 2, 2, 2>, scalar_prefetch = 0 : i64, scratch_operands = 3 : i64, tpu.core_type = #tpu.core_type<tc>, window_params = [{transform_indices = @transform_0, window_bounds = array<i64: 1, 8, 128>}, {transform_indices = @transform_1, window_bounds = array<i64: 128, 50>}, {pipeline_mode = #tpu.pipeline_mode<synchronous>, transform_indices = @transform_2, window_bounds = array<i64: 8, 8>}, {transform_indices = @transform_3, window_bounds = array<i64: 50, 128>}, {transform_indices = @transform_4, window_bounds = array<i64: 1, 8, 128>}]} {
    %c0_i32 = arith.constant 0 : i32
    %0 = arith.cmpi eq, %arg1, %c0_i32 : i32
    %1 = arith.extui %0 : i1 to i32
    %c0_i32_0 = arith.constant 0 : i32
    %2 = arith.cmpi ne, %1, %c0_i32_0 : i32
    scf.if %2 {
      tpu.enqueue_dma source(%arg3 : memref<1x8x128xf32, #tpu.memory_space<vmem>>) target(%arg7 : memref<1x8x128xf32, #tpu.memory_space<vmem>>) target_semaphore(%arg10 : memref<!tpu.dma_semaphore, #tpu.memory_space<semaphore_mem>>)
      %c0_i32_5 = arith.constant 0 : i32
      %11 = arith.cmpi eq, %arg2, %c0_i32_5 : i32
      %12 = arith.extui %11 : i1 to i32
      %c0_i32_6 = arith.constant 0 : i32
      %13 = arith.cmpi ne, %12, %c0_i32_6 : i32
      scf.if %13 {
        %cst_15 = arith.constant 0.000000e+00 : f32
        %21 = vector.broadcast %cst_15 : f32 to vector<8x50xf32>
        %c0_16 = arith.constant 0 : index
        %c0_17 = arith.constant 0 : index
        %22 = vector.load %arg8[%c0_16, %c0_17] : memref<8x50xf32, #tpu.memory_space<vmem>>, vector<8x50xf32>
        tpu.vector_store %arg8[%c0_16, %c0_17], %21 {strides = array<i32>} : memref<8x50xf32, #tpu.memory_space<vmem>>, vector<8x50xf32>,
      } else {
      }
      %c0 = arith.constant 0 : index
      %c0_7 = arith.constant 0 : index
      %14 = vector.load %arg8[%c0, %c0_7] : memref<8x50xf32, #tpu.memory_space<vmem>>, vector<8x50xf32>
      %c0_8 = arith.constant 0 : index
      %c0_9 = arith.constant 0 : index
      %c0_10 = arith.constant 0 : index
      %15 = vector.load %arg3[%c0_8, %c0_9, %c0_10] : memref<1x8x128xf32, #tpu.memory_space<vmem>>, vector<1x8x128xf32>
      %16 = vector.shape_cast %15 : vector<1x8x128xf32> to vector<8x128xf32>
      %c0_11 = arith.constant 0 : index
      %c0_12 = arith.constant 0 : index
      %17 = vector.load %arg4[%c0_11, %c0_12] : memref<128x50xf32, #tpu.memory_space<vmem>>, vector<128x50xf32>
      %cst = arith.constant dense<0.000000e+00> : vector<8x50xf32>
      %18 = tpu.matmul %16, %17, %cst {dimension_numbers = #tpu.dot_dimension_numbers<[1], [0], [0], [1], [0, 0, 1, 1], [], []>} : vector<8x128xf32>, vector<128x50xf32>, vector<8x50xf32> -> vector<8x50xf32>
      %19 = arith.addf %14, %18 : vector<8x50xf32>
      %c0_13 = arith.constant 0 : index
      %c0_14 = arith.constant 0 : index
      %20 = vector.load %arg8[%c0_13, %c0_14] : memref<8x50xf32, #tpu.memory_space<vmem>>, vector<8x50xf32>
      tpu.vector_store %arg8[%c0_13, %c0_14], %19 {strides = array<i32>} : memref<8x50xf32, #tpu.memory_space<vmem>>, vector<8x50xf32>,
      tpu.wait_dma2 semaphore(%arg10 : memref<!tpu.dma_semaphore, #tpu.memory_space<semaphore_mem>>) src(%arg3 : memref<1x8x128xf32, #tpu.memory_space<vmem>>) dst(%arg7 : memref<1x8x128xf32, #tpu.memory_space<vmem>>)
    } else {
    }
    %c1_i32 = arith.constant 1 : i32
    %3 = arith.cmpi eq, %arg1, %c1_i32 : i32
    %c0_i32_1 = arith.constant 0 : i32
    %4 = arith.cmpi eq, %arg2, %c0_i32_1 : i32
    %5 = arith.andi %3, %4 : i1
    %6 = arith.extui %5 : i1 to i32
    %c0_i32_2 = arith.constant 0 : i32
    %7 = arith.cmpi ne, %6, %c0_i32_2 : i32
    scf.if %7 {
      %c0 = arith.constant 0 : index
      %c0_5 = arith.constant 0 : index
      %11 = vector.load %arg8[%c0, %c0_5] : memref<8x50xf32, #tpu.memory_space<vmem>>, vector<8x50xf32>
      %c0_6 = arith.constant 0 : index
      %c0_7 = arith.constant 0 : index
      %12 = vector.load %arg5[%c0_6, %c0_7] : memref<8x8xf32, #tpu.memory_space<vmem>>, vector<2x8xf32>
      %13 = vector.extract_strided_slice %11 {offsets = [0, 0], sizes = [8, 1], strides = [1, 1]} : vector<8x50xf32> to vector<8x1xf32>
      %cst = arith.constant dense<0.000000e+00> : vector<2x1xf32>
      %14 = tpu.matmul %12, %13, %cst {dimension_numbers = #tpu.dot_dimension_numbers<[1], [0], [0], [1], [0, 0, 1, 1], [], []>} : vector<2x8xf32>, vector<8x1xf32>, vector<2x1xf32> -> vector<2x1xf32>
      %cst_8 = arith.constant 0.000000e+00 : f32
      %15 = vector.broadcast %cst_8 : f32 to vector<2x49xf32>
      %16 = tpu.concatenate %14, %15 in 1 : vector<2x1xf32>, vector<2x49xf32> -> vector<2x50xf32>
      %c2 = arith.constant 2 : index
      %c0_9 = arith.constant 0 : index
      %17 = vector.load %arg5[%c2, %c0_9] : memref<8x8xf32, #tpu.memory_space<vmem>>, vector<2x8xf32>
      %18 = vector.extract_strided_slice %11 {offsets = [0, 1], sizes = [8, 4], strides = [1, 1]} : vector<8x50xf32> to vector<8x4xf32>
      %cst_10 = arith.constant dense<0.000000e+00> : vector<2x4xf32>
      %19 = tpu.matmul %17, %18, %cst_10 {dimension_numbers = #tpu.dot_dimension_numbers<[1], [0], [0], [1], [0, 0, 1, 1], [], []>} : vector<2x8xf32>, vector<8x4xf32>, vector<2x4xf32> -> vector<2x4xf32>
      %cst_11 = arith.constant 0.000000e+00 : f32
      %20 = vector.broadcast %cst_11 : f32 to vector<2x1xf32>
      %cst_12 = arith.constant 0.000000e+00 : f32
      %21 = vector.broadcast %cst_12 : f32 to vector<2x45xf32>
      %22 = tpu.concatenate %20, %19, %21 in 1 : vector<2x1xf32>, vector<2x4xf32>, vector<2x45xf32> -> vector<2x50xf32>
      %c4 = arith.constant 4 : index
      %c0_13 = arith.constant 0 : index
      %23 = vector.load %arg5[%c4, %c0_13] : memref<8x8xf32, #tpu.memory_space<vmem>>, vector<2x8xf32>
      %24 = vector.extract_strided_slice %11 {offsets = [0, 5], sizes = [8, 9], strides = [1, 1]} : vector<8x50xf32> to vector<8x9xf32>
      %cst_14 = arith.constant dense<0.000000e+00> : vector<2x9xf32>
      %25 = tpu.matmul %23, %24, %cst_14 {dimension_numbers = #tpu.dot_dimension_numbers<[1], [0], [0], [1], [0, 0, 1, 1], [], []>} : vector<2x8xf32>, vector<8x9xf32>, vector<2x9xf32> -> vector<2x9xf32>
      %cst_15 = arith.constant 0.000000e+00 : f32
      %26 = vector.broadcast %cst_15 : f32 to vector<2x5xf32>
      %cst_16 = arith.constant 0.000000e+00 : f32
      %27 = vector.broadcast %cst_16 : f32 to vector<2x36xf32>
      %28 = tpu.concatenate %26, %25, %27 in 1 : vector<2x5xf32>, vector<2x9xf32>, vector<2x36xf32> -> vector<2x50xf32>
      %c6 = arith.constant 6 : index
      %c0_17 = arith.constant 0 : index
      %29 = vector.load %arg5[%c6, %c0_17] : memref<8x8xf32, #tpu.memory_space<vmem>>, vector<2x8xf32>
      %30 = vector.extract_strided_slice %11 {offsets = [0, 14], sizes = [8, 36], strides = [1, 1]} : vector<8x50xf32> to vector<8x36xf32>
      %cst_18 = arith.constant dense<0.000000e+00> : vector<2x36xf32>
      %31 = tpu.matmul %29, %30, %cst_18 {dimension_numbers = #tpu.dot_dimension_numbers<[1], [0], [0], [1], [0, 0, 1, 1], [], []>} : vector<2x8xf32>, vector<8x36xf32>, vector<2x36xf32> -> vector<2x36xf32>
      %cst_19 = arith.constant 0.000000e+00 : f32
      %32 = vector.broadcast %cst_19 : f32 to vector<2x14xf32>
      %33 = tpu.concatenate %32, %31 in 1 : vector<2x14xf32>, vector<2x36xf32> -> vector<2x50xf32>
      %34 = tpu.concatenate %16, %22, %28, %33 in 0 : vector<2x50xf32>, vector<2x50xf32>, vector<2x50xf32>, vector<2x50xf32> -> vector<8x50xf32>
      %c0_20 = arith.constant 0 : index
      %c0_21 = arith.constant 0 : index
      %35 = vector.load %arg9[%c0_20, %c0_21] : memref<8x50xf32, #tpu.memory_space<vmem>>, vector<8x50xf32>
      tpu.vector_store %arg9[%c0_20, %c0_21], %34 {strides = array<i32>} : memref<8x50xf32, #tpu.memory_space<vmem>>, vector<8x50xf32>,
    } else {
    }
    %c1_i32_3 = arith.constant 1 : i32
    %8 = arith.cmpi eq, %arg1, %c1_i32_3 : i32
    %9 = arith.extui %8 : i1 to i32
    %c0_i32_4 = arith.constant 0 : i32
    %10 = arith.cmpi ne, %9, %c0_i32_4 : i32
    scf.if %10 {
      %c0 = arith.constant 0 : index
      %c0_5 = arith.constant 0 : index
      %11 = vector.load %arg9[%c0, %c0_5] : memref<8x50xf32, #tpu.memory_space<vmem>>, vector<8x50xf32>
      %c0_6 = arith.constant 0 : index
      %c0_7 = arith.constant 0 : index
      %12 = vector.load %arg6[%c0_6, %c0_7] : memref<50x128xf32, #tpu.memory_space<vmem>>, vector<50x128xf32>
      %cst = arith.constant dense<0.000000e+00> : vector<8x128xf32>
      %13 = tpu.matmul %11, %12, %cst {dimension_numbers = #tpu.dot_dimension_numbers<[1], [0], [0], [1], [0, 0, 1, 1], [], []>} : vector<8x50xf32>, vector<50x128xf32>, vector<8x128xf32> -> vector<8x128xf32>
      %c0_8 = arith.constant 0 : index
      %c0_9 = arith.constant 0 : index
      %c0_10 = arith.constant 0 : index
      %14 = vector.load %arg7[%c0_8, %c0_9, %c0_10] : memref<1x8x128xf32, #tpu.memory_space<vmem>>, vector<1x8x128xf32>
      %15 = vector.shape_cast %14 : vector<1x8x128xf32> to vector<8x128xf32>
      %16 = vector.shape_cast %13 : vector<8x128xf32> to vector<1x8x128xf32>
      tpu.vector_store %arg7[%c0_8, %c0_9, %c0_10], %16 {strides = array<i32>} : memref<1x8x128xf32, #tpu.memory_space<vmem>>, vector<1x8x128xf32>,
    } else {
    }
    return
  }
  func.func @transform_0(%arg0: i32, %arg1: i32, %arg2: i32) -> (i32, i32, i32) {
    %c1_i32 = arith.constant 1 : i32
    %0 = arith.subi %c1_i32, %arg1 : i32
    %1 = arith.muli %0, %arg2 : i32
    %c1_i32_0 = arith.constant 1 : i32
    %2 = arith.muli %arg1, %c1_i32_0 : i32
    %3 = arith.addi %1, %2 : i32
    %c0_i32 = arith.constant 0 : i32
    %c0_i32_1 = arith.constant 0 : i32
    return %arg0, %c0_i32, %3 : i32, i32, i32
  }
  func.func @transform_1(%arg0: i32, %arg1: i32, %arg2: i32) -> (i32, i32) {
    %c1_i32 = arith.constant 1 : i32
    %0 = arith.subi %c1_i32, %arg1 : i32
    %1 = arith.muli %0, %arg2 : i32
    %c1_i32_0 = arith.constant 1 : i32
    %2 = arith.muli %arg1, %c1_i32_0 : i32
    %3 = arith.addi %1, %2 : i32
    %c0_i32 = arith.constant 0 : i32
    %c0_i32_1 = arith.constant 0 : i32
    return %3, %c0_i32 : i32, i32
  }
  func.func @transform_2(%arg0: i32, %arg1: i32, %arg2: i32) -> (i32, i32) {
    %c0_i32 = arith.constant 0 : i32
    %c0_i32_0 = arith.constant 0 : i32
    %c0_i32_1 = arith.constant 0 : i32
    return %c0_i32, %c0_i32_0 : i32, i32
  }
  func.func @transform_3(%arg0: i32, %arg1: i32, %arg2: i32) -> (i32, i32) {
    %0 = arith.muli %arg1, %arg2 : i32
    %c0_i32 = arith.constant 0 : i32
    %c0_i32_0 = arith.constant 0 : i32
    return %c0_i32, %0 : i32, i32
  }
  func.func @transform_4(%arg0: i32, %arg1: i32, %arg2: i32) -> (i32, i32, i32) {
    %c1_i32 = arith.constant 1 : i32
    %0 = arith.subi %c1_i32, %arg1 : i32
    %c0_i32 = arith.constant 0 : i32
    return %arg0, %0, %arg2 : i32, i32, i32
  }
}

module attributes {stable_mosaic.version = 11 : i64} {
  func.func @_ppm_kernel(%arg0: i32, %arg1: i32, %arg2: i32, %arg3: memref<1x8x128xf32, #tpu.memory_space<vmem>>, %arg4: memref<128x50xf32, #tpu.memory_space<vmem>>, %arg5: memref<8x8xf32, #tpu.memory_space<vmem>>, %arg6: memref<50x128xf32, #tpu.memory_space<vmem>>, %arg7: memref<1x8x128xf32, #tpu.memory_space<vmem>>, %arg8: memref<8x50xf32, #tpu.memory_space<vmem>>, %arg9: memref<8x50xf32, #tpu.memory_space<vmem>>, %arg10: memref<!tpu.dma_semaphore, #tpu.memory_space<semaphore_mem>>) attributes {dimension_semantics = [#tpu.dimension_semantics<parallel>, #tpu.dimension_semantics<arbitrary>, #tpu.dimension_semantics<arbitrary>], iteration_bounds = array<i64: 2, 2, 2>, scalar_prefetch = 0 : i64, scratch_operands = 3 : i64, tpu.core_type = #tpu.core_type<tc>, window_params = [{transform_indices = @transform_0, window_bounds = array<i64: 1, 8, 128>}, {transform_indices = @transform_1, window_bounds = array<i64: 128, 50>}, {pipeline_mode = #tpu.pipeline_mode<synchronous>, transform_indices = @transform_2, window_bounds = array<i64: 8, 8>}, {transform_indices = @transform_3, window_bounds = array<i64: 50, 128>}, {transform_indices = @transform_4, window_bounds = array<i64: 1, 8, 128>}]} {
    %c0_i32 = arith.constant 0 : i32
    %0 = arith.cmpi eq, %arg1, %c0_i32 : i32
    %1 = arith.extui %0 : i1 to i32
    %c0_i32_0 = arith.constant 0 : i32
    %2 = arith.cmpi ne, %1, %c0_i32_0 : i32
    scf.if %2 {
      tpu.enqueue_dma source(%arg3 : memref<1x8x128xf32, #tpu.memory_space<vmem>>) target(%arg7 : memref<1x8x128xf32, #tpu.memory_space<vmem>>) target_semaphore(%arg10 : memref<!tpu.dma_semaphore, #tpu.memory_space<semaphore_mem>>)
      %c0_i32_5 = arith.constant 0 : i32
      %11 = arith.cmpi eq, %arg2, %c0_i32_5 : i32
      %12 = arith.extui %11 : i1 to i32
      %c0_i32_6 = arith.constant 0 : i32
      %13 = arith.cmpi ne, %12, %c0_i32_6 : i32
      scf.if %13 {
        %cst_15 = arith.constant 0.000000e+00 : f32
        %21 = vector.broadcast %cst_15 : f32 to vector<8x50xf32>
        %c0_16 = arith.constant 0 : index
        %c0_17 = arith.constant 0 : index
        %22 = vector.load %arg8[%c0_16, %c0_17] : memref<8x50xf32, #tpu.memory_space<vmem>>, vector<8x50xf32>
        tpu.vector_store %arg8[%c0_16, %c0_17], %21 {strides = array<i32>} : memref<8x50xf32, #tpu.memory_space<vmem>>, vector<8x50xf32>,
      } else {
      }
      %c0 = arith.constant 0 : index
      %c0_7 = arith.constant 0 : index
      %14 = vector.load %arg8[%c0, %c0_7] : memref<8x50xf32, #tpu.memory_space<vmem>>, vector<8x50xf32>
      %c0_8 = arith.constant 0 : index
      %c0_9 = arith.constant 0 : index
      %c0_10 = arith.constant 0 : index
      %15 = vector.load %arg3[%c0_8, %c0_9, %c0_10] : memref<1x8x128xf32, #tpu.memory_space<vmem>>, vector<1x8x128xf32>
      %16 = vector.shape_cast %15 : vector<1x8x128xf32> to vector<8x128xf32>
      %c0_11 = arith.constant 0 : index
      %c0_12 = arith.constant 0 : index
      %17 = vector.load %arg4[%c0_11, %c0_12] : memref<128x50xf32, #tpu.memory_space<vmem>>, vector<128x50xf32>
      %cst = arith.constant dense<0.000000e+00> : vector<8x50xf32>
      %18 = tpu.matmul %16, %17, %cst {dimension_numbers = #tpu.dot_dimension_numbers<[1], [0], [0], [1], [0, 0, 1, 1], [], []>} : vector<8x128xf32>, vector<128x50xf32>, vector<8x50xf32> -> vector<8x50xf32>
      %19 = arith.addf %14, %18 : vector<8x50xf32>
      %c0_13 = arith.constant 0 : index
      %c0_14 = arith.constant 0 : index
      %20 = vector.load %arg8[%c0_13, %c0_14] : memref<8x50xf32, #tpu.memory_space<vmem>>, vector<8x50xf32>
      tpu.vector_store %arg8[%c0_13, %c0_14], %19 {strides = array<i32>} : memref<8x50xf32, #tpu.memory_space<vmem>>, vector<8x50xf32>,
      tpu.wait_dma2 semaphore(%arg10 : memref<!tpu.dma_semaphore, #tpu.memory_space<semaphore_mem>>) src(%arg3 : memref<1x8x128xf32, #tpu.memory_space<vmem>>) dst(%arg7 : memref<1x8x128xf32, #tpu.memory_space<vmem>>)
    } else {
    }
    %c1_i32 = arith.constant 1 : i32
    %3 = arith.cmpi eq, %arg1, %c1_i32 : i32
    %c0_i32_1 = arith.constant 0 : i32
    %4 = arith.cmpi eq, %arg2, %c0_i32_1 : i32
    %5 = arith.andi %3, %4 : i1
    %6 = arith.extui %5 : i1 to i32
    %c0_i32_2 = arith.constant 0 : i32
    %7 = arith.cmpi ne, %6, %c0_i32_2 : i32
    scf.if %7 {
      %c0 = arith.constant 0 : index
      %c0_5 = arith.constant 0 : index
      %11 = vector.load %arg8[%c0, %c0_5] : memref<8x50xf32, #tpu.memory_space<vmem>>, vector<8x50xf32>
      %c0_6 = arith.constant 0 : index
      %c0_7 = arith.constant 0 : index
      %12 = vector.load %arg5[%c0_6, %c0_7] : memref<8x8xf32, #tpu.memory_space<vmem>>, vector<2x8xf32>
      %13 = vector.extract_strided_slice %11 {offsets = [0, 0], sizes = [8, 1], strides = [1, 1]} : vector<8x50xf32> to vector<8x1xf32>
      %cst = arith.constant dense<0.000000e+00> : vector<2x1xf32>
      %14 = tpu.matmul %12, %13, %cst {dimension_numbers = #tpu.dot_dimension_numbers<[1], [0], [0], [1], [0, 0, 1, 1], [], []>} : vector<2x8xf32>, vector<8x1xf32>, vector<2x1xf32> -> vector<2x1xf32>
      %cst_8 = arith.constant 0.000000e+00 : f32
      %15 = vector.broadcast %cst_8 : f32 to vector<2x49xf32>
      %16 = tpu.concatenate %14, %15 in 1 : vector<2x1xf32>, vector<2x49xf32> -> vector<2x50xf32>
      %c2 = arith.constant 2 : index
      %c0_9 = arith.constant 0 : index
      %17 = vector.load %arg5[%c2, %c0_9] : memref<8x8xf32, #tpu.memory_space<vmem>>, vector<2x8xf32>
      %18 = vector.extract_strided_slice %11 {offsets = [0, 1], sizes = [8, 4], strides = [1, 1]} : vector<8x50xf32> to vector<8x4xf32>
      %cst_10 = arith.constant dense<0.000000e+00> : vector<2x4xf32>
      %19 = tpu.matmul %17, %18, %cst_10 {dimension_numbers = #tpu.dot_dimension_numbers<[1], [0], [0], [1], [0, 0, 1, 1], [], []>} : vector<2x8xf32>, vector<8x4xf32>, vector<2x4xf32> -> vector<2x4xf32>
      %cst_11 = arith.constant 0.000000e+00 : f32
      %20 = vector.broadcast %cst_11 : f32 to vector<2x1xf32>
      %cst_12 = arith.constant 0.000000e+00 : f32
      %21 = vector.broadcast %cst_12 : f32 to vector<2x45xf32>
      %22 = tpu.concatenate %20, %19, %21 in 1 : vector<2x1xf32>, vector<2x4xf32>, vector<2x45xf32> -> vector<2x50xf32>
      %c4 = arith.constant 4 : index
      %c0_13 = arith.constant 0 : index
      %23 = vector.load %arg5[%c4, %c0_13] : memref<8x8xf32, #tpu.memory_space<vmem>>, vector<2x8xf32>
      %24 = vector.extract_strided_slice %11 {offsets = [0, 5], sizes = [8, 9], strides = [1, 1]} : vector<8x50xf32> to vector<8x9xf32>
      %cst_14 = arith.constant dense<0.000000e+00> : vector<2x9xf32>
      %25 = tpu.matmul %23, %24, %cst_14 {dimension_numbers = #tpu.dot_dimension_numbers<[1], [0], [0], [1], [0, 0, 1, 1], [], []>} : vector<2x8xf32>, vector<8x9xf32>, vector<2x9xf32> -> vector<2x9xf32>
      %cst_15 = arith.constant 0.000000e+00 : f32
      %26 = vector.broadcast %cst_15 : f32 to vector<2x5xf32>
      %cst_16 = arith.constant 0.000000e+00 : f32
      %27 = vector.broadcast %cst_16 : f32 to vector<2x36xf32>
      %28 = tpu.concatenate %26, %25, %27 in 1 : vector<2x5xf32>, vector<2x9xf32>, vector<2x36xf32> -> vector<2x50xf32>
      %c6 = arith.constant 6 : index
      %c0_17 = arith.constant 0 : index
      %29 = vector.load %arg5[%c6, %c0_17] : memref<8x8xf32, #tpu.memory_space<vmem>>, vector<2x8xf32>
      %30 = vector.extract_strided_slice %11 {offsets = [0, 14], sizes = [8, 36], strides = [1, 1]} : vector<8x50xf32> to vector<8x36xf32>
      %cst_18 = arith.constant dense<0.000000e+00> : vector<2x36xf32>
      %31 = tpu.matmul %29, %30, %cst_18 {dimension_numbers = #tpu.dot_dimension_numbers<[1], [0], [0], [1], [0, 0, 1, 1], [], []>} : vector<2x8xf32>, vector<8x36xf32>, vector<2x36xf32> -> vector<2x36xf32>
      %cst_19 = arith.constant 0.000000e+00 : f32
      %32 = vector.broadcast %cst_19 : f32 to vector<2x14xf32>
      %33 = tpu.concatenate %32, %31 in 1 : vector<2x14xf32>, vector<2x36xf32> -> vector<2x50xf32>
      %34 = tpu.concatenate %16, %22, %28, %33 in 0 : vector<2x50xf32>, vector<2x50xf32>, vector<2x50xf32>, vector<2x50xf32> -> vector<8x50xf32>
      %c0_20 = arith.constant 0 : index
      %c0_21 = arith.constant 0 : index
      %35 = vector.load %arg9[%c0_20, %c0_21] : memref<8x50xf32, #tpu.memory_space<vmem>>, vector<8x50xf32>
      tpu.vector_store %arg9[%c0_20, %c0_21], %34 {strides = array<i32>} : memref<8x50xf32, #tpu.memory_space<vmem>>, vector<8x50xf32>,
    } else {
    }
    %c1_i32_3 = arith.constant 1 : i32
    %8 = arith.cmpi eq, %arg1, %c1_i32_3 : i32
    %9 = arith.extui %8 : i1 to i32
    %c0_i32_4 = arith.constant 0 : i32
    %10 = arith.cmpi ne, %9, %c0_i32_4 : i32
    scf.if %10 {
      %c0 = arith.constant 0 : index
      %c0_5 = arith.constant 0 : index
      %11 = vector.load %arg9[%c0, %c0_5] : memref<8x50xf32, #tpu.memory_space<vmem>>, vector<8x50xf32>
      %c0_6 = arith.constant 0 : index
      %c0_7 = arith.constant 0 : index
      %12 = vector.load %arg6[%c0_6, %c0_7] : memref<50x128xf32, #tpu.memory_space<vmem>>, vector<50x128xf32>
      %cst = arith.constant dense<0.000000e+00> : vector<8x128xf32>
      %13 = tpu.matmul %11, %12, %cst {dimension_numbers = #tpu.dot_dimension_numbers<[1], [0], [0], [1], [0, 0, 1, 1], [], []>} : vector<8x50xf32>, vector<50x128xf32>, vector<8x128xf32> -> vector<8x128xf32>
      %c0_8 = arith.constant 0 : index
      %c0_9 = arith.constant 0 : index
      %c0_10 = arith.constant 0 : index
      %14 = vector.load %arg7[%c0_8, %c0_9, %c0_10] : memref<1x8x128xf32, #tpu.memory_space<vmem>>, vector<1x8x128xf32>
      %15 = vector.shape_cast %14 : vector<1x8x128xf32> to vector<8x128xf32>
      %16 = vector.shape_cast %13 : vector<8x128xf32> to vector<1x8x128xf32>
      tpu.vector_store %arg7[%c0_8, %c0_9, %c0_10], %16 {strides = array<i32>} : memref<1x8x128xf32, #tpu.memory_space<vmem>>, vector<1x8x128xf32>,
    } else {
    }
    return
  }
  func.func @transform_0(%arg0: i32, %arg1: i32, %arg2: i32) -> (i32, i32, i32) {
    %c1_i32 = arith.constant 1 : i32
    %0 = arith.subi %c1_i32, %arg1 : i32
    %1 = arith.muli %0, %arg2 : i32
    %c1_i32_0 = arith.constant 1 : i32
    %2 = arith.muli %arg1, %c1_i32_0 : i32
    %3 = arith.addi %1, %2 : i32
    %c0_i32 = arith.constant 0 : i32
    %c0_i32_1 = arith.constant 0 : i32
    return %arg0, %c0_i32, %3 : i32, i32, i32
  }
  func.func @transform_1(%arg0: i32, %arg1: i32, %arg2: i32) -> (i32, i32) {
    %c1_i32 = arith.constant 1 : i32
    %0 = arith.subi %c1_i32, %arg1 : i32
    %1 = arith.muli %0, %arg2 : i32
    %c1_i32_0 = arith.constant 1 : i32
    %2 = arith.muli %arg1, %c1_i32_0 : i32
    %3 = arith.addi %1, %2 : i32
    %c0_i32 = arith.constant 0 : i32
    %c0_i32_1 = arith.constant 0 : i32
    return %3, %c0_i32 : i32, i32
  }
  func.func @transform_2(%arg0: i32, %arg1: i32, %arg2: i32) -> (i32, i32) {
    %c0_i32 = arith.constant 0 : i32
    %c0_i32_0 = arith.constant 0 : i32
    %c0_i32_1 = arith.constant 0 : i32
    return %c0_i32, %c0_i32_0 : i32, i32
  }
  func.func @transform_3(%arg0: i32, %arg1: i32, %arg2: i32) -> (i32, i32) {
    %0 = arith.muli %arg1, %arg2 : i32
    %c0_i32 = arith.constant 0 : i32
    %c0_i32_0 = arith.constant 0 : i32
    return %c0_i32, %0 : i32, i32
  }
  func.func @transform_4(%arg0: i32, %arg1: i32, %arg2: i32) -> (i32, i32, i32) {
    %c1_i32 = arith.constant 1 : i32
    %0 = arith.subi %c1_i32, %arg1 : i32
    %c0_i32 = arith.constant 0 : i32
    return %arg0, %0, %arg2 : i32, i32, i32
  }
}

module attributes {stable_mosaic.version = 11 : i64} {
  func.func @_ppm_kernel(%arg0: i32, %arg1: i32, %arg2: i32, %arg3: memref<1x8x128xf32, #tpu.memory_space<vmem>>, %arg4: memref<128x50xf32, #tpu.memory_space<vmem>>, %arg5: memref<8x8xf32, #tpu.memory_space<vmem>>, %arg6: memref<50x128xf32, #tpu.memory_space<vmem>>, %arg7: memref<1x8x128xf32, #tpu.memory_space<vmem>>, %arg8: memref<8x50xf32, #tpu.memory_space<vmem>>, %arg9: memref<8x50xf32, #tpu.memory_space<vmem>>, %arg10: memref<!tpu.dma_semaphore, #tpu.memory_space<semaphore_mem>>) attributes {dimension_semantics = [#tpu.dimension_semantics<parallel>, #tpu.dimension_semantics<arbitrary>, #tpu.dimension_semantics<arbitrary>], iteration_bounds = array<i64: 2, 2, 2>, scalar_prefetch = 0 : i64, scratch_operands = 3 : i64, tpu.core_type = #tpu.core_type<tc>, window_params = [{transform_indices = @transform_0, window_bounds = array<i64: 1, 8, 128>}, {transform_indices = @transform_1, window_bounds = array<i64: 128, 50>}, {pipeline_mode = #tpu.pipeline_mode<synchronous>, transform_indices = @transform_2, window_bounds = array<i64: 8, 8>}, {transform_indices = @transform_3, window_bounds = array<i64: 50, 128>}, {transform_indices = @transform_4, window_bounds = array<i64: 1, 8, 128>}]} {
    %c0_i32 = arith.constant 0 : i32
    %0 = arith.cmpi eq, %arg1, %c0_i32 : i32
    %1 = arith.extui %0 : i1 to i32
    %c0_i32_0 = arith.constant 0 : i32
    %2 = arith.cmpi ne, %1, %c0_i32_0 : i32
    scf.if %2 {
      %c0_i32_5 = arith.constant 0 : i32
      %11 = arith.cmpi eq, %arg2, %c0_i32_5 : i32
      %12 = arith.extui %11 : i1 to i32
      %c0_i32_6 = arith.constant 0 : i32
      %13 = arith.cmpi ne, %12, %c0_i32_6 : i32
      scf.if %13 {
        %cst_21 = arith.constant 0.000000e+00 : f32
        %26 = vector.broadcast %cst_21 : f32 to vector<8x50xf32>
        %c0_22 = arith.constant 0 : index
        %c0_23 = arith.constant 0 : index
        %27 = vector.load %arg8[%c0_22, %c0_23] : memref<8x50xf32, #tpu.memory_space<vmem>>, vector<8x50xf32>
        tpu.vector_store %arg8[%c0_22, %c0_23], %26 {strides = array<i32>} : memref<8x50xf32, #tpu.memory_space<vmem>>, vector<8x50xf32>,
      } else {
      }
      %c0 = arith.constant 0 : index
      %c0_7 = arith.constant 0 : index
      %14 = vector.load %arg8[%c0, %c0_7] : memref<8x50xf32, #tpu.memory_space<vmem>>, vector<8x50xf32>
      %c0_8 = arith.constant 0 : index
      %c0_9 = arith.constant 0 : index
      %c0_10 = arith.constant 0 : index
      %15 = vector.load %arg3[%c0_8, %c0_9, %c0_10] : memref<1x8x128xf32, #tpu.memory_space<vmem>>, vector<1x8x128xf32>
      %16 = vector.shape_cast %15 : vector<1x8x128xf32> to vector<8x128xf32>
      %c0_11 = arith.constant 0 : index
      %c0_12 = arith.constant 0 : index
      %17 = vector.load %arg4[%c0_11, %c0_12] : memref<128x50xf32, #tpu.memory_space<vmem>>, vector<128x50xf32>
      %cst = arith.constant dense<0.000000e+00> : vector<8x50xf32>
      %18 = tpu.matmul %16, %17, %cst {dimension_numbers = #tpu.dot_dimension_numbers<[1], [0], [0], [1], [0, 0, 1, 1], [], []>} : vector<8x128xf32>, vector<128x50xf32>, vector<8x50xf32> -> vector<8x50xf32>
      %19 = arith.addf %14, %18 : vector<8x50xf32>
      %c0_13 = arith.constant 0 : index
      %c0_14 = arith.constant 0 : index
      %20 = vector.load %arg8[%c0_13, %c0_14] : memref<8x50xf32, #tpu.memory_space<vmem>>, vector<8x50xf32>
      tpu.vector_store %arg8[%c0_13, %c0_14], %19 {strides = array<i32>} : memref<8x50xf32, #tpu.memory_space<vmem>>, vector<8x50xf32>,
      %c0_15 = arith.constant 0 : index
      %c0_16 = arith.constant 0 : index
      %c0_17 = arith.constant 0 : index
      %21 = vector.load %arg3[%c0_15, %c0_16, %c0_17] : memref<1x8x128xf32, #tpu.memory_space<vmem>>, vector<1x8x128xf32>
      %22 = vector.shape_cast %21 : vector<1x8x128xf32> to vector<8x128xf32>
      %c0_18 = arith.constant 0 : index
      %c0_19 = arith.constant 0 : index
      %c0_20 = arith.constant 0 : index
      %23 = vector.load %arg7[%c0_18, %c0_19, %c0_20] : memref<1x8x128xf32, #tpu.memory_space<vmem>>, vector<1x8x128xf32>
      %24 = vector.shape_cast %23 : vector<1x8x128xf32> to vector<8x128xf32>
      %25 = vector.shape_cast %22 : vector<8x128xf32> to vector<1x8x128xf32>
      tpu.vector_store %arg7[%c0_18, %c0_19, %c0_20], %25 {strides = array<i32>} : memref<1x8x128xf32, #tpu.memory_space<vmem>>, vector<1x8x128xf32>,
    } else {
    }
    %c1_i32 = arith.constant 1 : i32
    %3 = arith.cmpi eq, %arg1, %c1_i32 : i32
    %c0_i32_1 = arith.constant 0 : i32
    %4 = arith.cmpi eq, %arg2, %c0_i32_1 : i32
    %5 = arith.andi %3, %4 : i1
    %6 = arith.extui %5 : i1 to i32
    %c0_i32_2 = arith.constant 0 : i32
    %7 = arith.cmpi ne, %6, %c0_i32_2 : i32
    scf.if %7 {
      %c0 = arith.constant 0 : index
      %c0_5 = arith.constant 0 : index
      %11 = vector.load %arg8[%c0, %c0_5] : memref<8x50xf32, #tpu.memory_space<vmem>>, vector<8x50xf32>
      %c0_6 = arith.constant 0 : index
      %c0_7 = arith.constant 0 : index
      %12 = vector.load %arg5[%c0_6, %c0_7] : memref<8x8xf32, #tpu.memory_space<vmem>>, vector<2x8xf32>
      %13 = vector.extract_strided_slice %11 {offsets = [0, 0], sizes = [8, 1], strides = [1, 1]} : vector<8x50xf32> to vector<8x1xf32>
      %cst = arith.constant dense<0.000000e+00> : vector<2x1xf32>
      %14 = tpu.matmul %12, %13, %cst {dimension_numbers = #tpu.dot_dimension_numbers<[1], [0], [0], [1], [0, 0, 1, 1], [], []>} : vector<2x8xf32>, vector<8x1xf32>, vector<2x1xf32> -> vector<2x1xf32>
      %cst_8 = arith.constant 0.000000e+00 : f32
      %15 = vector.broadcast %cst_8 : f32 to vector<2x49xf32>
      %16 = tpu.concatenate %14, %15 in 1 : vector<2x1xf32>, vector<2x49xf32> -> vector<2x50xf32>
      %c2 = arith.constant 2 : index
      %c0_9 = arith.constant 0 : index
      %17 = vector.load %arg5[%c2, %c0_9] : memref<8x8xf32, #tpu.memory_space<vmem>>, vector<2x8xf32>
      %18 = vector.extract_strided_slice %11 {offsets = [0, 1], sizes = [8, 4], strides = [1, 1]} : vector<8x50xf32> to vector<8x4xf32>
      %cst_10 = arith.constant dense<0.000000e+00> : vector<2x4xf32>
      %19 = tpu.matmul %17, %18, %cst_10 {dimension_numbers = #tpu.dot_dimension_numbers<[1], [0], [0], [1], [0, 0, 1, 1], [], []>} : vector<2x8xf32>, vector<8x4xf32>, vector<2x4xf32> -> vector<2x4xf32>
      %cst_11 = arith.constant 0.000000e+00 : f32
      %20 = vector.broadcast %cst_11 : f32 to vector<2x1xf32>
      %cst_12 = arith.constant 0.000000e+00 : f32
      %21 = vector.broadcast %cst_12 : f32 to vector<2x45xf32>
      %22 = tpu.concatenate %20, %19, %21 in 1 : vector<2x1xf32>, vector<2x4xf32>, vector<2x45xf32> -> vector<2x50xf32>
      %c4 = arith.constant 4 : index
      %c0_13 = arith.constant 0 : index
      %23 = vector.load %arg5[%c4, %c0_13] : memref<8x8xf32, #tpu.memory_space<vmem>>, vector<2x8xf32>
      %24 = vector.extract_strided_slice %11 {offsets = [0, 5], sizes = [8, 9], strides = [1, 1]} : vector<8x50xf32> to vector<8x9xf32>
      %cst_14 = arith.constant dense<0.000000e+00> : vector<2x9xf32>
      %25 = tpu.matmul %23, %24, %cst_14 {dimension_numbers = #tpu.dot_dimension_numbers<[1], [0], [0], [1], [0, 0, 1, 1], [], []>} : vector<2x8xf32>, vector<8x9xf32>, vector<2x9xf32> -> vector<2x9xf32>
      %cst_15 = arith.constant 0.000000e+00 : f32
      %26 = vector.broadcast %cst_15 : f32 to vector<2x5xf32>
      %cst_16 = arith.constant 0.000000e+00 : f32
      %27 = vector.broadcast %cst_16 : f32 to vector<2x36xf32>
      %28 = tpu.concatenate %26, %25, %27 in 1 : vector<2x5xf32>, vector<2x9xf32>, vector<2x36xf32> -> vector<2x50xf32>
      %c6 = arith.constant 6 : index
      %c0_17 = arith.constant 0 : index
      %29 = vector.load %arg5[%c6, %c0_17] : memref<8x8xf32, #tpu.memory_space<vmem>>, vector<2x8xf32>
      %30 = vector.extract_strided_slice %11 {offsets = [0, 14], sizes = [8, 36], strides = [1, 1]} : vector<8x50xf32> to vector<8x36xf32>
      %cst_18 = arith.constant dense<0.000000e+00> : vector<2x36xf32>
      %31 = tpu.matmul %29, %30, %cst_18 {dimension_numbers = #tpu.dot_dimension_numbers<[1], [0], [0], [1], [0, 0, 1, 1], [], []>} : vector<2x8xf32>, vector<8x36xf32>, vector<2x36xf32> -> vector<2x36xf32>
      %cst_19 = arith.constant 0.000000e+00 : f32
      %32 = vector.broadcast %cst_19 : f32 to vector<2x14xf32>
      %33 = tpu.concatenate %32, %31 in 1 : vector<2x14xf32>, vector<2x36xf32> -> vector<2x50xf32>
      %34 = tpu.concatenate %16, %22, %28, %33 in 0 : vector<2x50xf32>, vector<2x50xf32>, vector<2x50xf32>, vector<2x50xf32> -> vector<8x50xf32>
      %c0_20 = arith.constant 0 : index
      %c0_21 = arith.constant 0 : index
      %35 = vector.load %arg9[%c0_20, %c0_21] : memref<8x50xf32, #tpu.memory_space<vmem>>, vector<8x50xf32>
      tpu.vector_store %arg9[%c0_20, %c0_21], %34 {strides = array<i32>} : memref<8x50xf32, #tpu.memory_space<vmem>>, vector<8x50xf32>,
    } else {
    }
    %c1_i32_3 = arith.constant 1 : i32
    %8 = arith.cmpi eq, %arg1, %c1_i32_3 : i32
    %9 = arith.extui %8 : i1 to i32
    %c0_i32_4 = arith.constant 0 : i32
    %10 = arith.cmpi ne, %9, %c0_i32_4 : i32
    scf.if %10 {
      %c0 = arith.constant 0 : index
      %c0_5 = arith.constant 0 : index
      %11 = vector.load %arg9[%c0, %c0_5] : memref<8x50xf32, #tpu.memory_space<vmem>>, vector<8x50xf32>
      %c0_6 = arith.constant 0 : index
      %c0_7 = arith.constant 0 : index
      %12 = vector.load %arg6[%c0_6, %c0_7] : memref<50x128xf32, #tpu.memory_space<vmem>>, vector<50x128xf32>
      %cst = arith.constant dense<0.000000e+00> : vector<8x128xf32>
      %13 = tpu.matmul %11, %12, %cst {dimension_numbers = #tpu.dot_dimension_numbers<[1], [0], [0], [1], [0, 0, 1, 1], [], []>} : vector<8x50xf32>, vector<50x128xf32>, vector<8x128xf32> -> vector<8x128xf32>
      %c0_8 = arith.constant 0 : index
      %c0_9 = arith.constant 0 : index
      %c0_10 = arith.constant 0 : index
      %14 = vector.load %arg7[%c0_8, %c0_9, %c0_10] : memref<1x8x128xf32, #tpu.memory_space<vmem>>, vector<1x8x128xf32>
      %15 = vector.shape_cast %14 : vector<1x8x128xf32> to vector<8x128xf32>
      %16 = vector.shape_cast %13 : vector<8x128xf32> to vector<1x8x128xf32>
      tpu.vector_store %arg7[%c0_8, %c0_9, %c0_10], %16 {strides = array<i32>} : memref<1x8x128xf32, #tpu.memory_space<vmem>>, vector<1x8x128xf32>,
    } else {
    }
    return
  }
  func.func @transform_0(%arg0: i32, %arg1: i32, %arg2: i32) -> (i32, i32, i32) {
    %c1_i32 = arith.constant 1 : i32
    %0 = arith.subi %c1_i32, %arg1 : i32
    %1 = arith.muli %0, %arg2 : i32
    %c1_i32_0 = arith.constant 1 : i32
    %2 = arith.muli %arg1, %c1_i32_0 : i32
    %3 = arith.addi %1, %2 : i32
    %c0_i32 = arith.constant 0 : i32
    %c0_i32_1 = arith.constant 0 : i32
    return %arg0, %c0_i32, %3 : i32, i32, i32
  }
  func.func @transform_1(%arg0: i32, %arg1: i32, %arg2: i32) -> (i32, i32) {
    %c1_i32 = arith.constant 1 : i32
    %0 = arith.subi %c1_i32, %arg1 : i32
    %1 = arith.muli %0, %arg2 : i32
    %c1_i32_0 = arith.constant 1 : i32
    %2 = arith.muli %arg1, %c1_i32_0 : i32
    %3 = arith.addi %1, %2 : i32
    %c0_i32 = arith.constant 0 : i32
    %c0_i32_1 = arith.constant 0 : i32
    return %3, %c0_i32 : i32, i32
  }
  func.func @transform_2(%arg0: i32, %arg1: i32, %arg2: i32) -> (i32, i32) {
    %c0_i32 = arith.constant 0 : i32
    %c0_i32_0 = arith.constant 0 : i32
    %c0_i32_1 = arith.constant 0 : i32
    return %c0_i32, %c0_i32_0 : i32, i32
  }
  func.func @transform_3(%arg0: i32, %arg1: i32, %arg2: i32) -> (i32, i32) {
    %0 = arith.muli %arg1, %arg2 : i32
    %c0_i32 = arith.constant 0 : i32
    %c0_i32_0 = arith.constant 0 : i32
    return %c0_i32, %0 : i32, i32
  }
  func.func @transform_4(%arg0: i32, %arg1: i32, %arg2: i32) -> (i32, i32, i32) {
    %c1_i32 = arith.constant 1 : i32
    %0 = arith.subi %c1_i32, %arg1 : i32
    %c0_i32 = arith.constant 0 : i32
    return %arg0, %0, %arg2 : i32, i32, i32
  }
}

</mosaic_0001>

<llo_original>
// kernel: tpu_custom_call.1
$region0: #{tpu_custom_call.1}
  #allocation0 [shape = 'u32[]', space=smem, size = 0x4, offset = 0x4, fixed_abs, tag = 'smem constant byte address 0x4 - core index']
  #allocation1 [shape = 'u32[144,128]{1,0:T(1,128)}', space=vmem, size = 0x12000, scoped, tag = 'internal scratch']
  #allocation2 [shape = 'f32[8,50]{1,0:T(8,128)}', space=vmem, size = 0x1000, scoped, tag = 'scratch operand']
  #allocation3 [shape = 'f32[8,50]{1,0:T(8,128)}', space=vmem, size = 0x1000, scoped, tag = 'scratch operand']
  #allocation4 [shape = 's32[1]{0}', space=sflag, size = 0x4, scoped, tag = 'scratch operand']
  #allocation8 [shape = 's32[]', space=sflag, size = 0x4, offset = 0, fixed_abs, tag = 'sflag constant byte address 0x0 - dummy sync flag']
  %s0 = inlined_call_operand.vmem [shape: f32[2,8,256], index: 0, kind: input, shape index: {}]
  %s1 = inlined_call_operand.vmem [shape: f32[256,50], index: 1, kind: input, shape index: {}]
  %s2 = inlined_call_operand.vmem [shape: f32[8,8], index: 2, kind: input, shape index: {}]
  %s3 = inlined_call_operand.vmem [shape: f32[50,256], index: 3, kind: input, shape index: {}]
  %s4 = inlined_call_operand.hbm [shape: f32[2,16,256], index: 4, kind: output, shape index: {}]
  %s5 = sld [smem:[#allocation0]]
  $region137: #{tpu_custom_call.1} parent=0
    _
  %s7 = ssub.s32 1, %s5
  %s8 = scalar_select 0, %s7, %s5
  $region1: #{tpu_custom_call.1} parent=0
    #allocation5 [shape = 'u8[57344]{0}', space=vmem, size = 0xe000, scoped, tag = 'input window, operand 3']
    #allocation6 [shape = 'u8[8192]{0}', space=vmem, size = 0x2000, scoped, tag = 'output window, operand 0']
    #allocation7 [shape = 's32[2]{0}', space=sflag, size = 0x8, scoped, tag = 'scoped memory for tpu_custom_call.1']
    %9 = vsyncpa [#allocation7], 0
    %s10 = scalar_lea.sflag [#allocation7], 1
    %11 = vsyncpa %s10, 0
    loop: start=0, step=1, limit=10
    $region2: #{tpu_custom_call.1} parent=1 // loop_pre_header
      _
    $region3: #{tpu_custom_call.1} parent=1 // loop_header
      %s13 = sphi 0, %s17
      %p14 = scmp.ge.s32.totalorder %s13, 10
      %s20 = sphi 0, %s39
      %s21 = sphi 0, %s35
      %s22 = sphi 0, %s31
      %s23 = sphi 0, %s20
      %s24 = sphi 0, %s21
      %s25 = sphi 0, %s22
      %s26 = sphi 0, %s23
      %s27 = sphi 0, %s24
      %s28 = sphi 0, %s25
      %s50 = sphi 0, %s52
      %s53 = sphi 0, %s50
      %s54 = sphi 0, %s53
      %s70 = sphi 0, %s54
      %s82 = sphi 0, %s84
      %s85 = sphi 0, %s82
      %s86 = sphi 0, %s85
      %s102 = sphi 0, %s86
      %s106 = sphi 0, %s106
      %s108 = sphi 0, %s106
      %s109 = sphi 0, %s108
      %s123 = sphi 0, %s109
      %s131 = sphi 0, %s133
      %s134 = sphi 0, %s131
      %s135 = sphi 0, %s134
      %s151 = sphi 0, %s135
      %s163 = sphi 0, %s165
      %s166 = sphi 0, %s163
      %s167 = sphi 0, %s166
      %s183 = sphi 0, %s167
    $region4: #{tpu_custom_call.1} parent=1 // loop_header_branch
      %16 = sbr.rel (%p14) target = $region8
    $region5: #{tpu_custom_call.1} parent=1 // loop_body
      %s18 = ssub.s32 %s13, 1
      %s19 = ssub.s32 %s13, 2
      %s29 = sadd.s32 1, %s22
      %p30 = scmp.ge.s32.totalorder %s29, 2
      %s31 = scalar_select %p30, 0, %s29
      %s32 = sadd.s32 1, %s21
      %s33 = scalar_select %p30, %s32, %s21
      %p34 = scmp.ge.s32.totalorder %s33, 2
      %s35 = scalar_select %p34, 0, %s33
      %s36 = sadd.s32 1, %s20
      %s37 = scalar_select %p34, %s36, %s20
      %p38 = scmp.ge.s32.totalorder %s37, 2
      %s39 = scalar_select %p38, 0, %s37
      %s40 = ssub.s32 1, %s21
      %s41 = smul.u32 %s40, %s22
      %s42 = sadd.s32 %s41, %s21
      %s43 = ssub.s32 1, %s35
      %s44 = smul.u32 %s43, %s31
      %s45 = sadd.s32 %s44, %s35
      %s46 = ssub.s32 %s20, %s39
      %s47 = ssub.s32 %s42, %s45
      %s48 = sor.u32 %s46, %s47
      %p49 = scmp.eq.s32.totalorder %s48, 0
      %s51 = sadd.s32 %s50, 1
      %s52 = scalar_select %p49, %s50, %s51
      %p55 = pneg %p49
      %p56 = scmp.eq.s32.totalorder %s13, 7
      %p57 = por %p55, %p56
      %p58 = scmp.ne.s32.totalorder %s50, %s53
      %p59 = scmp.eq.s32.totalorder %s13, 0
      %p60 = por %p58, %p59
      %p61 = scmp.ne.s32.totalorder %s50, %s53
      %p62 = scmp.eq.s32.totalorder %s18, 7
      %p63 = por %p61, %p62
      %p64 = scmp.ne.s32.totalorder %s53, %s54
      %p65 = scmp.eq.s32.totalorder %s18, 0
      %p66 = por %p64, %p65
      %p67 = scmp.ne.s32.totalorder %s53, %s54
      %p68 = scmp.eq.s32.totalorder %s19, 7
      %p69 = por %p67, %p68
      %p71 = scmp.ne.s32.totalorder %s54, %s70
      %p72 = scmp.eq.s32.totalorder %s19, 0
      %p73 = por %p71, %p72
      %s74 = ssub.s32 1, %s21
      %s75 = smul.u32 %s74, %s22
      %s76 = sadd.s32 %s75, %s21
      %s77 = ssub.s32 1, %s35
      %s78 = smul.u32 %s77, %s31
      %s79 = sadd.s32 %s78, %s35
      %s80 = ssub.s32 %s76, %s79
      %p81 = scmp.eq.s32.totalorder %s80, 0
      %s83 = sadd.s32 %s82, 1
      %s84 = scalar_select %p81, %s82, %s83
      %p87 = pneg %p81
      %p88 = scmp.eq.s32.totalorder %s13, 7
      %p89 = por %p87, %p88
      %p90 = scmp.ne.s32.totalorder %s82, %s85
      %p91 = scmp.eq.s32.totalorder %s13, 0
      %p92 = por %p90, %p91
      %p93 = scmp.ne.s32.totalorder %s82, %s85
      %p94 = scmp.eq.s32.totalorder %s18, 7
      %p95 = por %p93, %p94
      %p96 = scmp.ne.s32.totalorder %s85, %s86
      %p97 = scmp.eq.s32.totalorder %s18, 0
      %p98 = por %p96, %p97
      %p99 = scmp.ne.s32.totalorder %s85, %s86
      %p100 = scmp.eq.s32.totalorder %s19, 7
      %p101 = por %p99, %p100
      %p103 = scmp.ne.s32.totalorder %s86, %s102
      %p104 = scmp.eq.s32.totalorder %s19, 0
      %p105 = por %p103, %p104
      %s107 = sadd.s32 %s106, 1
      %p110 = scmp.eq.s32.totalorder %s13, 7
      %p111 = scmp.ne.s32.totalorder %s106, %s108
      %p112 = scmp.eq.s32.totalorder %s13, 0
      %p113 = por %p111, %p112
      %p114 = scmp.ne.s32.totalorder %s106, %s108
      %p115 = scmp.eq.s32.totalorder %s18, 7
      %p116 = por %p114, %p115
      %p117 = scmp.ne.s32.totalorder %s108, %s109
      %p118 = scmp.eq.s32.totalorder %s18, 0
      %p119 = por %p117, %p118
      %p120 = scmp.ne.s32.totalorder %s108, %s109
      %p121 = scmp.eq.s32.totalorder %s19, 7
      %p122 = por %p120, %p121
      %p124 = scmp.ne.s32.totalorder %s109, %s123
      %p125 = scmp.eq.s32.totalorder %s19, 0
      %p126 = por %p124, %p125
      %s127 = smul.u32 %s21, %s22
      %s128 = smul.u32 %s35, %s31
      %s129 = ssub.s32 %s127, %s128
      %p130 = scmp.eq.s32.totalorder %s129, 0
      %s132 = sadd.s32 %s131, 1
      %s133 = scalar_select %p130, %s131, %s132
      %p136 = pneg %p130
      %p137 = scmp.eq.s32.totalorder %s13, 7
      %p138 = por %p136, %p137
      %p139 = scmp.ne.s32.totalorder %s131, %s134
      %p140 = scmp.eq.s32.totalorder %s13, 0
      %p141 = por %p139, %p140
      %p142 = scmp.ne.s32.totalorder %s131, %s134
      %p143 = scmp.eq.s32.totalorder %s18, 7
      %p144 = por %p142, %p143
      %p145 = scmp.ne.s32.totalorder %s134, %s135
      %p146 = scmp.eq.s32.totalorder %s18, 0
      %p147 = por %p145, %p146
      %p148 = scmp.ne.s32.totalorder %s134, %s135
      %p149 = scmp.eq.s32.totalorder %s19, 7
      %p150 = por %p148, %p149
      %p152 = scmp.ne.s32.totalorder %s135, %s151
      %p153 = scmp.eq.s32.totalorder %s19, 0
      %p154 = por %p152, %p153
      %s155 = ssub.s32 1, %s21
      %s156 = ssub.s32 1, %s35
      %s157 = ssub.s32 %s20, %s39
      %s158 = ssub.s32 %s155, %s156
      %s159 = sor.u32 %s157, %s158
      %s160 = ssub.s32 %s22, %s31
      %s161 = sor.u32 %s159, %s160
      %p162 = scmp.eq.s32.totalorder %s161, 0
      %s164 = sadd.s32 %s163, 1
      %s165 = scalar_select %p162, %s163, %s164
      %p168 = pneg %p162
      %p169 = scmp.eq.s32.totalorder %s13, 7
      %p170 = por %p168, %p169
      %p171 = scmp.ne.s32.totalorder %s163, %s166
      %p172 = scmp.eq.s32.totalorder %s13, 0
      %p173 = por %p171, %p172
      %p174 = scmp.ne.s32.totalorder %s163, %s166
      %p175 = scmp.eq.s32.totalorder %s18, 7
      %p176 = por %p174, %p175
      %p177 = scmp.ne.s32.totalorder %s166, %s167
      %p178 = scmp.eq.s32.totalorder %s18, 0
      %p179 = por %p177, %p178
      %p180 = scmp.ne.s32.totalorder %s166, %s167
      %p181 = scmp.eq.s32.totalorder %s19, 7
      %p182 = por %p180, %p181
      %p184 = scmp.ne.s32.totalorder %s167, %s183
      %p185 = scmp.eq.s32.totalorder %s19, 0
      %p186 = por %p184, %p185
      %p187 = scmp.le.s32.totalorder 1, %s13
      %p188 = scmp.lt.s32.totalorder %s13, 9
      %p189 = pnand %p187, %p188
      %p190 = pneg %p189
      // Predicated region
      $region9: #{tpu_custom_call.1} parent=5 // pred_check
        _
      $region10: #{tpu_custom_call.1} parent=5 // pred_check_branch
        %192 = sbr.rel (%p189) target = $region12
      $region11: #{tpu_custom_call.1} parent=5 // pred_region
        %s193 = ssub.s32 %s13, 1
        // Predicated region
        $region13: #{tpu_custom_call.1} parent=11 // pred_check
          %p194 = pneg %p119
        $region14: #{tpu_custom_call.1} parent=11 // pred_check_branch
          %196 = sbr.rel (%p194) target = $region16
        $region15: #{tpu_custom_call.1} parent=11 // pred_region
          _
        $region16: #{tpu_custom_call.1} parent=11 // pred_fallthru
          _
      $region12: #{tpu_custom_call.1} parent=5 // pred_fallthru
        _
      %p197 = scmp.lt.s32.totalorder %s13, 8
      // Predicated region
      $region17: #{tpu_custom_call.1} parent=5 // pred_check
        %p198 = pneg %p197
      $region18: #{tpu_custom_call.1} parent=5 // pred_check_branch
        %200 = sbr.rel (%p198) target = $region20
      $region19: #{tpu_custom_call.1} parent=5 // pred_region
        // Predicated region
        $region21: #{tpu_custom_call.1} parent=19 // pred_check
          %p201 = pneg %p60
        $region22: #{tpu_custom_call.1} parent=19 // pred_check_branch
          %203 = sbr.rel (%p201) target = $region24
        $region23: #{tpu_custom_call.1} parent=19 // pred_region
          %s204 = ssub.s32 1, %s21
          %s205 = smul.u32 %s204, %s22
          %s206 = sadd.s32 %s205, %s21
          %p207 = scmp.lt.s32.totalorder %s20, 1
          %s208 = scalar_select %p207, %s20, 1
          %p209 = scmp.lt.s32.totalorder %s206, 1
          %s210 = scalar_select %p209, %s206, 1
          %s211 = smul.addr %s208, 2
          %s212 = sadd.s32 %s210, %s211
          %s213 = smul.addr %s212, 8
          %s214 = scalar_lea.vmem %s0, %s213
          %s215 = ssub.s32 1, %s21
          %s216 = smul.u32 %s215, %s22
          %s217 = sadd.s32 %s216, %s21
        $region24: #{tpu_custom_call.1} parent=19 // pred_fallthru
          _
        // Predicated region
        $region25: #{tpu_custom_call.1} parent=19 // pred_check
          %p218 = pneg %p92
        $region26: #{tpu_custom_call.1} parent=19 // pred_check_branch
          %220 = sbr.rel (%p218) target = $region28
        $region27: #{tpu_custom_call.1} parent=19 // pred_region
          %s221 = ssub.s32 1, %s21
          %s222 = smul.u32 %s221, %s22
          %s223 = sadd.s32 %s222, %s21
          %s224 = smul.u32 16, %s223
          %p225 = scmp.lt.s32.totalorder %s224, 31
          %s226 = scalar_select %p225, %s224, 31
          %s227 = smul.addr %s226, 8
          %s228 = scalar_lea.vmem %s1, %s227
          %s229 = ssub.s32 1, %s21
          %s230 = smul.u32 %s229, %s22
          %s231 = sadd.s32 %s230, %s21
          %s232 = smul.u32 16, %s231
        $region28: #{tpu_custom_call.1} parent=19 // pred_fallthru
          _
        // Predicated region
        $region29: #{tpu_custom_call.1} parent=19 // pred_check
          %p233 = pneg %p141
        $region30: #{tpu_custom_call.1} parent=19 // pred_check_branch
          %235 = sbr.rel (%p233) target = $region32
        $region31: #{tpu_custom_call.1} parent=19 // pred_region
          %s236 = sand.u32 %s131, 1
          %s237 = sand.u32 %s131, 1
          %s238 = smul.addr %s237, 56
          %s239 = scalar_lea.vmem [#allocation5], %s238
          %s240 = smul.u32 %s21, %s22
          %s241 = smul.addr %s240, 8
          %s242 = scalar_lea.vmem %s3, %s241
          // Predicated region
          $region33: #{tpu_custom_call.1} parent=31 // pred_check
            _
          $region34: #{tpu_custom_call.1} parent=31 // pred_check_branch
            %244 = sbr.rel (0) target = $region36
          $region35: #{tpu_custom_call.1} parent=31 // pred_region
            // Predicated region
            $region37: #{tpu_custom_call.1} parent=35 // pred_check
              _
            $region38: #{tpu_custom_call.1} parent=35 // pred_check_branch
              %246 = sbr.rel (0) target = $region40
            $region39: #{tpu_custom_call.1} parent=35 // pred_region
              // Predicated region
              $region52: #{tpu_custom_call.1} parent=39 // pred_check
                _
              $region53: #{tpu_custom_call.1} parent=39 // pred_check_branch
                %274 = sbr.rel (0) target = $region55
              $region54: #{tpu_custom_call.1} parent=39 // pred_region
                loop: start=0, step=1, limit=1
                $region56: #{tpu_custom_call.1} parent=54 // loop_pre_header
                  _
                $region57: #{tpu_custom_call.1} parent=54 // loop_header
                  %s276 = sphi 0, %s280
                  %p277 = scmp.ge.s32.totalorder %s276, 1
                  %s281 = sphi %s242, %s242
                  %s282 = sphi %s239, %s239
                $region58: #{tpu_custom_call.1} parent=54 // loop_header_branch
                  %279 = sbr.rel (%p277) target = $region62
                $region59: #{tpu_custom_call.1} parent=54 // loop_body
                  %v283 = vld [vmem:[%s281] sm:$0xff]
                  %284 = vst [vmem:[%s282] sm:$0xff] %v283
                  %v285 = vld [vmem:[%s281 + $0x10] sm:$0xff]
                  %286 = vst [vmem:[%s282 + $0x8] sm:$0xff] %v285
                  %v287 = vld [vmem:[%s281 + $0x20] sm:$0xff]
                  %288 = vst [vmem:[%s282 + $0x10] sm:$0xff] %v287
                  %v289 = vld [vmem:[%s281 + $0x30] sm:$0xff]
                  %290 = vst [vmem:[%s282 + $0x18] sm:$0xff] %v289
                  %v291 = vld [vmem:[%s281 + $0x40] sm:$0xff]
                  %292 = vst [vmem:[%s282 + $0x20] sm:$0xff] %v291
                  %v293 = vld [vmem:[%s281 + $0x50] sm:$0xff]
                  %294 = vst [vmem:[%s282 + $0x28] sm:$0xff] %v293
                  %v295 = vld [vmem:[%s281 + $0x60] sm:$0xff]
                  %296 = vst [vmem:[%s282 + $0x30] sm:$0xff] %v295
                $region60: #{tpu_custom_call.1} parent=54 // loop_footer
                  %s280 = sadd.s32 1, %s276
                $region61: #{tpu_custom_call.1} parent=54 // loop_footer_branch
                  %275 = sbr.rel target = $region57
                $region62: #{tpu_custom_call.1} parent=54 // loop_exit
                  _
              $region55: #{tpu_custom_call.1} parent=39 // pred_fallthru
                _
              // Predicated region
              $region63: #{tpu_custom_call.1} parent=39 // pred_check
                _
              $region64: #{tpu_custom_call.1} parent=39 // pred_check_branch
                %298 = sbr.rel target = $region66
              $region65: #{tpu_custom_call.1} parent=39 // pred_region
                _
              $region66: #{tpu_custom_call.1} parent=39 // pred_fallthru
                _
            $region40: #{tpu_custom_call.1} parent=35 // pred_fallthru
              _
            // Predicated region
            $region41: #{tpu_custom_call.1} parent=35 // pred_check
              _
            $region42: #{tpu_custom_call.1} parent=35 // pred_check_branch
              %248 = sbr.rel target = $region44
            $region43: #{tpu_custom_call.1} parent=35 // pred_region
              %s250 = ssub.s32 256, 1
              loop: start=0, step=1, limit=1
              $region45: #{tpu_custom_call.1} parent=43 // loop_pre_header
                _
              $region46: #{tpu_custom_call.1} parent=43 // loop_header
                %s252 = sphi 0, %s256
                %p253 = scmp.ge.s32.totalorder %s252, 1
                %s257 = sphi %s242, %s242
                %s258 = sphi %s239, %s239
              $region47: #{tpu_custom_call.1} parent=43 // loop_header_branch
                %255 = sbr.rel (%p253) target = $region51
              $region48: #{tpu_custom_call.1} parent=43 // loop_body
                %v259 = vld [vmem:[%s257] sm:%s250]
                %260 = vst [vmem:[%s258] sm:%s250] %v259
                %v261 = vld [vmem:[%s257 + $0x10] sm:%s250]
                %262 = vst [vmem:[%s258 + $0x8] sm:%s250] %v261
                %v263 = vld [vmem:[%s257 + $0x20] sm:%s250]
                %264 = vst [vmem:[%s258 + $0x10] sm:%s250] %v263
                %v265 = vld [vmem:[%s257 + $0x30] sm:%s250]
                %266 = vst [vmem:[%s258 + $0x18] sm:%s250] %v265
                %v267 = vld [vmem:[%s257 + $0x40] sm:%s250]
                %268 = vst [vmem:[%s258 + $0x20] sm:%s250] %v267
                %v269 = vld [vmem:[%s257 + $0x50] sm:%s250]
                %270 = vst [vmem:[%s258 + $0x28] sm:%s250] %v269
                %v271 = vld [vmem:[%s257 + $0x60] sm:%s250]
                %272 = vst [vmem:[%s258 + $0x30] sm:%s250] %v271
              $region49: #{tpu_custom_call.1} parent=43 // loop_footer
                %s256 = sadd.s32 1, %s252
              $region50: #{tpu_custom_call.1} parent=43 // loop_footer_branch
                %251 = sbr.rel target = $region46
              $region51: #{tpu_custom_call.1} parent=43 // loop_exit
                _
            $region44: #{tpu_custom_call.1} parent=35 // pred_fallthru
              _
          $region36: #{tpu_custom_call.1} parent=31 // pred_fallthru
            _
          %299 = vnop
        $region32: #{tpu_custom_call.1} parent=19 // pred_fallthru
          _
      $region20: #{tpu_custom_call.1} parent=5 // pred_fallthru
        _
      %p300 = scmp.le.s32.totalorder 1, %s13
      %p301 = scmp.lt.s32.totalorder %s13, 9
      %p302 = pnand %p300, %p301
      %p303 = pneg %p302
      // Predicated region
      $region67: #{tpu_custom_call.1} parent=5 // pred_check
        _
      $region68: #{tpu_custom_call.1} parent=5 // pred_check_branch
        %305 = sbr.rel (%p302) target = $region70
      $region69: #{tpu_custom_call.1} parent=5 // pred_region
        %s306 = ssub.s32 %s13, 1
        %s307 = sand.u32 %s134, 1
        %s308 = sand.u32 %s134, 1
        %s309 = smul.addr %s308, 56
        %s310 = scalar_lea.vmem [#allocation5], %s309
        // Predicated region
        $region71: #{tpu_custom_call.1} parent=69 // pred_check
          %p311 = pneg %p147
        $region72: #{tpu_custom_call.1} parent=69 // pred_check_branch
          %313 = sbr.rel (%p311) target = $region74
        $region73: #{tpu_custom_call.1} parent=69 // pred_region
          _
        $region74: #{tpu_custom_call.1} parent=69 // pred_fallthru
          _
        %s314 = ssub.s32 1, %s24
        %s315 = smul.u32 %s314, %s25
        %s316 = sadd.s32 %s315, %s24
        %p317 = scmp.lt.s32.totalorder %s23, 1
        %s318 = scalar_select %p317, %s23, 1
        %p319 = scmp.lt.s32.totalorder %s316, 1
        %s320 = scalar_select %p319, %s316, 1
        %s321 = smul.addr %s318, 2
        %s322 = sadd.s32 %s320, %s321
        %s323 = smul.addr %s322, 8
        %s324 = scalar_lea.vmem %s0, %s323
        %p325 = pneg %p66
        %p326 = pneg %p63
        %s327 = ssub.s32 1, %s24
        %s328 = smul.u32 %s327, %s25
        %s329 = sadd.s32 %s328, %s24
        %s330 = smul.u32 16, %s329
        %p331 = scmp.lt.s32.totalorder %s330, 31
        %s332 = scalar_select %p331, %s330, 31
        %s333 = smul.addr %s332, 8
        %s334 = scalar_lea.vmem %s1, %s333
        %p335 = pneg %p98
        %p336 = pneg %p95
        %p337 = pneg %p119
        %p338 = pneg %p116
        %s339 = sand.u32 %s134, 1
        %s340 = sand.u32 %s134, 1
        %s341 = smul.addr %s340, 56
        %s342 = scalar_lea.vmem [#allocation5], %s341
        %p343 = pneg %p147
        %p344 = pneg %p144
        %p345 = pneg %p179
        %p346 = pneg %p176
        %s347 = sand.u32 %s166, 1
        %s348 = scalar_lea.sflag [#allocation7], %s347
        %s349 = sand.u32 %s166, 1
        %s350 = smul.addr %s349, 8
        %s351 = scalar_lea.vmem [#allocation6], %s350
        %s352 = ssub.s32 1, %s24
        %s353 = smul.u32 %s352, %s25
        %s354 = sadd.s32 %s353, %s24
        %p355 = scmp.lt.s32.totalorder %s23, 1
        %s356 = scalar_select %p355, %s23, 1
        %p357 = scmp.lt.s32.totalorder %s354, 1
        %s358 = scalar_select %p357, %s354, 1
        %s359 = smul.addr %s356, 2
        %s360 = sadd.s32 %s358, %s359
        %s361 = smul.addr %s360, 8
        %s362 = scalar_lea.vmem %s0, %s361
        %s363 = ssub.s32 1, %s24
        %s364 = smul.u32 %s363, %s25
        %s365 = sadd.s32 %s364, %s24
        %s366 = ssub.s32 1, %s24
        %s367 = smul.u32 %s366, %s25
        %s368 = sadd.s32 %s367, %s24
        %s369 = smul.u32 16, %s368
        %p370 = scmp.lt.s32.totalorder %s369, 31
        %s371 = scalar_select %p370, %s369, 31
        %s372 = smul.addr %s371, 8
        %s373 = scalar_lea.vmem %s1, %s372
        %s374 = ssub.s32 1, %s24
        %s375 = smul.u32 %s374, %s25
        %s376 = sadd.s32 %s375, %s24
        %s377 = smul.u32 16, %s376
        %s378 = smul.u32 %s24, %s25
        %s379 = ssub.s32 1, %s24
        %p380 = scmp.eq.s32.totalorder %s24, 0
        // Predicated region
        $region75: #{tpu_custom_call.1} parent=69 // pred_check
          %p381 = pneg %p380
        $region76: #{tpu_custom_call.1} parent=69 // pred_check_branch
          %383 = sbr.rel (%p381) target = $region78
        $region77: #{tpu_custom_call.1} parent=69 // pred_region
          %p385 = scmp.lt.u32.totalorder 8, 8
          %p386 = pneg %p385
          // Predicated region
          $region79: #{tpu_custom_call.1} parent=77 // pred_check
            _
          $region80: #{tpu_custom_call.1} parent=77 // pred_check_branch
            %388 = sbr.rel (%p385) target = $region82
          $region81: #{tpu_custom_call.1} parent=77 // pred_region
            %s404 = sand.u32 8, 7
            %p405 = scmp.eq.s32.totalorder %s404, 0
            // Predicated region
            $region94: #{tpu_custom_call.1} parent=81 // pred_check
              %p406 = pneg %p405
            $region95: #{tpu_custom_call.1} parent=81 // pred_check_branch
              %408 = sbr.rel (%p406) target = $region97
            $region96: #{tpu_custom_call.1} parent=81 // pred_region
              loop: start=0, step=1, limit=1
              $region98: #{tpu_custom_call.1} parent=96 // loop_pre_header
                _
              $region99: #{tpu_custom_call.1} parent=96 // loop_header
                %s410 = sphi 0, %s414
                %p411 = scmp.ge.s32.totalorder %s410, 1
                %s415 = sphi %s362, %s362
                %s416 = sphi %s351, %s351
              $region100: #{tpu_custom_call.1} parent=96 // loop_header_branch
                %413 = sbr.rel (%p411) target = $region104
              $region101: #{tpu_custom_call.1} parent=96 // loop_body
                %v417 = vld [vmem:[%s415] sm:$0xff]
                %418 = vst [vmem:[%s416] sm:$0xff] %v417
              $region102: #{tpu_custom_call.1} parent=96 // loop_footer
                %s414 = sadd.s32 1, %s410
              $region103: #{tpu_custom_call.1} parent=96 // loop_footer_branch
                %409 = sbr.rel target = $region99
              $region104: #{tpu_custom_call.1} parent=96 // loop_exit
                _
            $region97: #{tpu_custom_call.1} parent=81 // pred_fallthru
              _
            %p419 = pneg %p405
            // Predicated region
            $region105: #{tpu_custom_call.1} parent=81 // pred_check
              _
            $region106: #{tpu_custom_call.1} parent=81 // pred_check_branch
              %421 = sbr.rel (%p405) target = $region108
            $region107: #{tpu_custom_call.1} parent=81 // pred_region
              %s422 = sand.u32 8, 7
            $region108: #{tpu_custom_call.1} parent=81 // pred_fallthru
              _
          $region82: #{tpu_custom_call.1} parent=77 // pred_fallthru
            _
          // Predicated region
          $region83: #{tpu_custom_call.1} parent=77 // pred_check
            %p389 = pneg %p385
          $region84: #{tpu_custom_call.1} parent=77 // pred_check_branch
            %391 = sbr.rel (%p389) target = $region86
          $region85: #{tpu_custom_call.1} parent=77 // pred_region
            %s392 = sshll.u32 1, 8
            %s393 = ssub.s32 %s392, 1
            loop: start=0, step=1, limit=1
            $region87: #{tpu_custom_call.1} parent=85 // loop_pre_header
              _
            $region88: #{tpu_custom_call.1} parent=85 // loop_header
              %s395 = sphi 0, %s399
              %p396 = scmp.ge.s32.totalorder %s395, 1
              %s400 = sphi %s362, %s362
              %s401 = sphi %s351, %s351
            $region89: #{tpu_custom_call.1} parent=85 // loop_header_branch
              %398 = sbr.rel (%p396) target = $region93
            $region90: #{tpu_custom_call.1} parent=85 // loop_body
              %v402 = vld [vmem:[%s400] sm:%s393]
              %403 = vst [vmem:[%s401] sm:%s393] %v402
            $region91: #{tpu_custom_call.1} parent=85 // loop_footer
              %s399 = sadd.s32 1, %s395
            $region92: #{tpu_custom_call.1} parent=85 // loop_footer_branch
              %394 = sbr.rel target = $region88
            $region93: #{tpu_custom_call.1} parent=85 // loop_exit
              _
          $region86: #{tpu_custom_call.1} parent=77 // pred_fallthru
            _
          // Predicated region
          $region109: #{tpu_custom_call.1} parent=77 // pred_check
            _
          $region110: #{tpu_custom_call.1} parent=77 // pred_check_branch
            %425 = sbr.rel (0) target = $region112
          $region111: #{tpu_custom_call.1} parent=77 // pred_region
            %426 = vsyncadd [#allocation4], 128
          $region112: #{tpu_custom_call.1} parent=77 // pred_fallthru
            _
          %p427 = scmp.eq.s32.totalorder %s25, 0
          // Predicated region
          $region113: #{tpu_custom_call.1} parent=77 // pred_check
            %p428 = pneg %p427
          $region114: #{tpu_custom_call.1} parent=77 // pred_check_branch
            %430 = sbr.rel (%p428) target = $region116
          $region115: #{tpu_custom_call.1} parent=77 // pred_region
            %vm431 = vcmask 408576
            %432 = vst.msk [vmem:[#allocation2] sm:$0xff] %vm431, 0.0
          $region116: #{tpu_custom_call.1} parent=77 // pred_fallthru
            _
          %v433 = vld [vmem:[#allocation2] sm:$0xff]
          %v434 = vld [vmem:[%s362] sm:$0xff]
          %v435 = vld [vmem:[%s373] sm:$0xff]
          %v436 = vld [vmem:[%s373 + $0x8] sm:$0xff]
          %v437 = vld [vmem:[%s373 + $0x10] sm:$0xff]
          %v438 = vld [vmem:[%s373 + $0x18] sm:$0xff]
          %v439 = vld [vmem:[%s373 + $0x20] sm:$0xff]
          %v440 = vld [vmem:[%s373 + $0x28] sm:$0xff]
          %v441 = vld [vmem:[%s373 + $0x30] sm:$0xff]
          %v442 = vld [vmem:[%s373 + $0x38] sm:$0xff]
          %v443 = vld [vmem:[%s373 + $0x40] sm:$0xff]
          %v444 = vld [vmem:[%s373 + $0x48] sm:$0xff]
          %v445 = vld [vmem:[%s373 + $0x50] sm:$0xff]
          %v446 = vld [vmem:[%s373 + $0x58] sm:$0xff]
          %v447 = vld [vmem:[%s373 + $0x60] sm:$0xff]
          %v448 = vld [vmem:[%s373 + $0x68] sm:$0xff]
          %v449 = vld [vmem:[%s373 + $0x70] sm:$0xff]
          %v450 = vld [vmem:[%s373 + $0x78] sm:$0xff]
          %451 = vmatprep.subr.mxu0 0.0
          %452 = vmatpush1.msra.mxu0 %v450
          %453 = vmatprep.subr.mxu0 0.0
          %454 = vmatpush1.msra.mxu0 %v449
          %455 = vmatprep.subr.mxu0 0.0
          %456 = vmatpush1.msra.mxu0 %v448
          %457 = vmatprep.subr.mxu0 0.0
          %458 = vmatpush1.msra.mxu0 %v447
          %459 = vmatprep.subr.mxu0 0.0
          %460 = vmatpush1.msra.mxu0 %v446
          %461 = vmatprep.subr.mxu0 0.0
          %462 = vmatpush1.msra.mxu0 %v445
          %463 = vmatprep.subr.mxu0 0.0
          %464 = vmatpush1.msra.mxu0 %v444
          %465 = vmatprep.subr.mxu0 0.0
          %466 = vmatpush1.msra.mxu0 %v443
          %467 = vmatprep.subr.mxu0 0.0
          %468 = vmatpush1.msra.mxu0 %v442
          %469 = vmatprep.subr.mxu0 0.0
          %470 = vmatpush1.msra.mxu0 %v441
          %471 = vmatprep.subr.mxu0 0.0
          %472 = vmatpush1.msra.mxu0 %v440
          %473 = vmatprep.subr.mxu0 0.0
          %474 = vmatpush1.msra.mxu0 %v439
          %475 = vmatprep.subr.mxu0 0.0
          %476 = vmatpush1.msra.mxu0 %v438
          %477 = vmatprep.subr.mxu0 0.0
          %478 = vmatpush1.msra.mxu0 %v437
          %479 = vmatprep.subr.mxu0 0.0
          %480 = vmatpush1.msra.mxu0 %v436
          %481 = vmatprep.subr.mxu0 0.0
          %482 = vmatpush1.msra.mxu0 %v435
          %483 = vmatprep.subr.mxu0 0.0
          %484 = vmatpush2.msra.mxu0 0.0
          %485 = vmatprep.subr.mxu0 0.0
          %486 = vmatpush2.msra.mxu0 0.0
          %487 = vmatprep.subr.mxu0 0.0
          %488 = vmatpush2.msra.mxu0 0.0
          %489 = vmatprep.subr.mxu0 0.0
          %490 = vmatpush2.msra.mxu0 0.0
          %491 = vmatprep.subr.mxu0 0.0
          %492 = vmatpush2.msra.mxu0 0.0
          %493 = vmatprep.subr.mxu0 0.0
          %494 = vmatpush2.msra.mxu0 0.0
          %495 = vmatprep.subr.mxu0 0.0
          %496 = vmatpush2.msra.mxu0 0.0
          %497 = vmatprep.subr.mxu0 0.0
          %498 = vmatpush2.msra.mxu0 0.0
          %499 = vmatprep.subr.mxu0 0.0
          %500 = vmatpush2.msra.mxu0 0.0
          %501 = vmatprep.subr.mxu0 0.0
          %502 = vmatpush2.msra.mxu0 0.0
          %503 = vmatprep.subr.mxu0 0.0
          %504 = vmatpush2.msra.mxu0 0.0
          %505 = vmatprep.subr.mxu0 0.0
          %506 = vmatpush2.msra.mxu0 0.0
          %507 = vmatprep.subr.mxu0 0.0
          %508 = vmatpush2.msra.mxu0 0.0
          %509 = vmatprep.subr.mxu0 0.0
          %510 = vmatpush2.msra.mxu0 0.0
          %511 = vmatprep.subr.mxu0 0.0
          %512 = vmatpush2.msra.mxu0 0.0
          %513 = vmatprep.subr.mxu0 0.0
          %514 = vmatpush2.msra.mxu0 0.0
          %515 = vmatprep.mubr.f32.mxu0 0.0
          %516 = vmatmul.mubr.f32.gmra.mxu0 %v434
          %v517 = vpop.f32.mrf.mxu0
          %v518 = vadd.f32 0.0, %v517
          %v519 = vpop.f32.mrf.mxu0
          %520 = vdwg.mxu0
          %v521 = vadd.f32 %v433, %v518
          %vm522 = vcmask 408576
          %523 = vst.msk [vmem:[#allocation2] sm:$0xff] %vm522, %v521
          %s524 = smul.u32 1, 8
          %s525 = smul.u32 %s524, 1
          %s526 = sshll.u32 %s525, 4
          %527 = dma.done [#allocation4], %s526
        $region78: #{tpu_custom_call.1} parent=69 // pred_fallthru
          _
        %p528 = scmp.eq.s32.totalorder %s24, 1
        %p529 = scmp.eq.s32.totalorder %s25, 0
        %p530 = pnand %p528, %p529
        %p531 = pneg %p530
        // Predicated region
        $region117: #{tpu_custom_call.1} parent=69 // pred_check
          _
        $region118: #{tpu_custom_call.1} parent=69 // pred_check_branch
          %533 = sbr.rel (%p530) target = $region120
        $region119: #{tpu_custom_call.1} parent=69 // pred_region
          %v534 = vld [vmem:[#allocation2] sm:$0xff]
          %v535 = vld [vmem:[%s2] sm:$0x3]
          %vm536 = vcmask 64512
          %v538 = vsel %vm536, %v535, 0
          %540 = vmatprep.subr.mxu0 0.0
          %541 = vmatpush1.msra.mxu0 0.0
          %542 = vmatprep.subr.mxu0 0.0
          %543 = vmatpush1.msra.mxu0 0.0
          %544 = vmatprep.subr.mxu0 0.0
          %545 = vmatpush1.msra.mxu0 0.0
          %546 = vmatprep.subr.mxu0 0.0
          %547 = vmatpush1.msra.mxu0 0.0
          %548 = vmatprep.subr.mxu0 0.0
          %549 = vmatpush1.msra.mxu0 0.0
          %550 = vmatprep.subr.mxu0 0.0
          %551 = vmatpush1.msra.mxu0 0.0
          %552 = vmatprep.subr.mxu0 0.0
          %553 = vmatpush1.msra.mxu0 0.0
          %554 = vmatprep.subr.mxu0 0.0
          %555 = vmatpush1.msra.mxu0 0.0
          %556 = vmatprep.subr.mxu0 0.0
          %557 = vmatpush1.msra.mxu0 0.0
          %558 = vmatprep.subr.mxu0 0.0
          %559 = vmatpush1.msra.mxu0 0.0
          %560 = vmatprep.subr.mxu0 0.0
          %561 = vmatpush1.msra.mxu0 0.0
          %562 = vmatprep.subr.mxu0 0.0
          %563 = vmatpush1.msra.mxu0 0.0
          %564 = vmatprep.subr.mxu0 0.0
          %565 = vmatpush1.msra.mxu0 0.0
          %566 = vmatprep.subr.mxu0 0.0
          %567 = vmatpush1.msra.mxu0 0.0
          %568 = vmatprep.subr.mxu0 0.0
          %569 = vmatpush1.msra.mxu0 0.0
          %570 = vmatprep.subr.mxu0 0.0
          %571 = vmatpush1.msra.mxu0 %v534
          %572 = vmatprep.subr.mxu0 0.0
          %573 = vmatpush2.msra.mxu0 0.0
          %574 = vmatprep.subr.mxu0 0.0
          %575 = vmatpush2.msra.mxu0 0.0
          %576 = vmatprep.subr.mxu0 0.0
          %577 = vmatpush2.msra.mxu0 0.0
          %578 = vmatprep.subr.mxu0 0.0
          %579 = vmatpush2.msra.mxu0 0.0
          %580 = vmatprep.subr.mxu0 0.0
          %581 = vmatpush2.msra.mxu0 0.0
          %582 = vmatprep.subr.mxu0 0.0
          %583 = vmatpush2.msra.mxu0 0.0
          %584 = vmatprep.subr.mxu0 0.0
          %585 = vmatpush2.msra.mxu0 0.0
          %586 = vmatprep.subr.mxu0 0.0
          %587 = vmatpush2.msra.mxu0 0.0
          %588 = vmatprep.subr.mxu0 0.0
          %589 = vmatpush2.msra.mxu0 0.0
          %590 = vmatprep.subr.mxu0 0.0
          %591 = vmatpush2.msra.mxu0 0.0
          %592 = vmatprep.subr.mxu0 0.0
          %593 = vmatpush2.msra.mxu0 0.0
          %594 = vmatprep.subr.mxu0 0.0
          %595 = vmatpush2.msra.mxu0 0.0
          %596 = vmatprep.subr.mxu0 0.0
          %597 = vmatpush2.msra.mxu0 0.0
          %598 = vmatprep.subr.mxu0 0.0
          %599 = vmatpush2.msra.mxu0 0.0
          %600 = vmatprep.subr.mxu0 0.0
          %601 = vmatpush2.msra.mxu0 0.0
          %602 = vmatprep.subr.mxu0 0.0
          %603 = vmatpush2.msra.mxu0 0.0
          %604 = vmatprep.mubr.f32.mxu0 0.0
          %605 = vmatmul.mubr.f32.gmra.mxu0 %v538
          %v606 = vpop.f32.mrf.mxu0
          %v607 = vadd.f32 0.0, %v606
          %v608 = vpop.f32.mrf.mxu0
          %609 = vdwg.mxu0
          %vm610 = vcmask 7168
          %v611 = vsel %vm610, %v607, 0.0
          %v612 = vld [vmem:[%s2 + $0x2] sm:$0x3]
          %614 = vrot.lane.b32.xlu0 %v534, 127
          %v615 = vpop.permute.xlu0 %614
          %v618 = vsel %vm536, %v612, 0
          %620 = vmatprep.subr.mxu0 0.0
          %621 = vmatpush1.msra.mxu0 0.0
          %622 = vmatprep.subr.mxu0 0.0
          %623 = vmatpush1.msra.mxu0 0.0
          %624 = vmatprep.subr.mxu0 0.0
          %625 = vmatpush1.msra.mxu0 0.0
          %626 = vmatprep.subr.mxu0 0.0
          %627 = vmatpush1.msra.mxu0 0.0
          %628 = vmatprep.subr.mxu0 0.0
          %629 = vmatpush1.msra.mxu0 0.0
          %630 = vmatprep.subr.mxu0 0.0
          %631 = vmatpush1.msra.mxu0 0.0
          %632 = vmatprep.subr.mxu0 0.0
          %633 = vmatpush1.msra.mxu0 0.0
          %634 = vmatprep.subr.mxu0 0.0
          %635 = vmatpush1.msra.mxu0 0.0
          %636 = vmatprep.subr.mxu0 0.0
          %637 = vmatpush1.msra.mxu0 0.0
          %638 = vmatprep.subr.mxu0 0.0
          %639 = vmatpush1.msra.mxu0 0.0
          %640 = vmatprep.subr.mxu0 0.0
          %641 = vmatpush1.msra.mxu0 0.0
          %642 = vmatprep.subr.mxu0 0.0
          %643 = vmatpush1.msra.mxu0 0.0
          %644 = vmatprep.subr.mxu0 0.0
          %645 = vmatpush1.msra.mxu0 0.0
          %646 = vmatprep.subr.mxu0 0.0
          %647 = vmatpush1.msra.mxu0 0.0
          %648 = vmatprep.subr.mxu0 0.0
          %649 = vmatpush1.msra.mxu0 0.0
          %650 = vmatprep.subr.mxu0 0.0
          %651 = vmatpush1.msra.mxu0 %v615
          %652 = vmatprep.subr.mxu0 0.0
          %653 = vmatpush2.msra.mxu0 0.0
          %654 = vmatprep.subr.mxu0 0.0
          %655 = vmatpush2.msra.mxu0 0.0
          %656 = vmatprep.subr.mxu0 0.0
          %657 = vmatpush2.msra.mxu0 0.0
          %658 = vmatprep.subr.mxu0 0.0
          %659 = vmatpush2.msra.mxu0 0.0
          %660 = vmatprep.subr.mxu0 0.0
          %661 = vmatpush2.msra.mxu0 0.0
          %662 = vmatprep.subr.mxu0 0.0
          %663 = vmatpush2.msra.mxu0 0.0
          %664 = vmatprep.subr.mxu0 0.0
          %665 = vmatpush2.msra.mxu0 0.0
          %666 = vmatprep.subr.mxu0 0.0
          %667 = vmatpush2.msra.mxu0 0.0
          %668 = vmatprep.subr.mxu0 0.0
          %669 = vmatpush2.msra.mxu0 0.0
          %670 = vmatprep.subr.mxu0 0.0
          %671 = vmatpush2.msra.mxu0 0.0
          %672 = vmatprep.subr.mxu0 0.0
          %673 = vmatpush2.msra.mxu0 0.0
          %674 = vmatprep.subr.mxu0 0.0
          %675 = vmatpush2.msra.mxu0 0.0
          %676 = vmatprep.subr.mxu0 0.0
          %677 = vmatpush2.msra.mxu0 0.0
          %678 = vmatprep.subr.mxu0 0.0
          %679 = vmatpush2.msra.mxu0 0.0
          %680 = vmatprep.subr.mxu0 0.0
          %681 = vmatpush2.msra.mxu0 0.0
          %682 = vmatprep.subr.mxu0 0.0
          %683 = vmatpush2.msra.mxu0 0.0
          %684 = vmatprep.mubr.f32.mxu0 0.0
          %685 = vmatmul.mubr.f32.gmra.mxu0 %v618
          %v686 = vpop.f32.mrf.mxu0
          %v687 = vadd.f32 0.0, %v686
          %v688 = vpop.f32.mrf.mxu0
          %689 = vdwg.mxu0
          %691 = vrot.lane.b32.xlu0 %v687, 1
          %v692 = vpop.permute.xlu0 %691
          %v694 = vsel %vm610, 0.0, %v692
          %vm695 = vcmask 39936
          %v696 = vsel %vm695, %v694, 0.0
          %v697 = vld [vmem:[%s2 + $0x4] sm:$0x3]
          %698 = vrot.lane.b32.xlu0 %v534, 123
          %v699 = vpop.permute.xlu0 %698
          %v702 = vsel %vm536, %v697, 0
          %704 = vmatprep.subr.mxu0 0.0
          %705 = vmatpush1.msra.mxu0 0.0
          %706 = vmatprep.subr.mxu0 0.0
          %707 = vmatpush1.msra.mxu0 0.0
          %708 = vmatprep.subr.mxu0 0.0
          %709 = vmatpush1.msra.mxu0 0.0
          %710 = vmatprep.subr.mxu0 0.0
          %711 = vmatpush1.msra.mxu0 0.0
          %712 = vmatprep.subr.mxu0 0.0
          %713 = vmatpush1.msra.mxu0 0.0
          %714 = vmatprep.subr.mxu0 0.0
          %715 = vmatpush1.msra.mxu0 0.0
          %716 = vmatprep.subr.mxu0 0.0
          %717 = vmatpush1.msra.mxu0 0.0
          %718 = vmatprep.subr.mxu0 0.0
          %719 = vmatpush1.msra.mxu0 0.0
          %720 = vmatprep.subr.mxu0 0.0
          %721 = vmatpush1.msra.mxu0 0.0
          %722 = vmatprep.subr.mxu0 0.0
          %723 = vmatpush1.msra.mxu0 0.0
          %724 = vmatprep.subr.mxu0 0.0
          %725 = vmatpush1.msra.mxu0 0.0
          %726 = vmatprep.subr.mxu0 0.0
          %727 = vmatpush1.msra.mxu0 0.0
          %728 = vmatprep.subr.mxu0 0.0
          %729 = vmatpush1.msra.mxu0 0.0
          %730 = vmatprep.subr.mxu0 0.0
          %731 = vmatpush1.msra.mxu0 0.0
          %732 = vmatprep.subr.mxu0 0.0
          %733 = vmatpush1.msra.mxu0 0.0
          %734 = vmatprep.subr.mxu0 0.0
          %735 = vmatpush1.msra.mxu0 %v699
          %736 = vmatprep.subr.mxu0 0.0
          %737 = vmatpush2.msra.mxu0 0.0
          %738 = vmatprep.subr.mxu0 0.0
          %739 = vmatpush2.msra.mxu0 0.0
          %740 = vmatprep.subr.mxu0 0.0
          %741 = vmatpush2.msra.mxu0 0.0
          %742 = vmatprep.subr.mxu0 0.0
          %743 = vmatpush2.msra.mxu0 0.0
          %744 = vmatprep.subr.mxu0 0.0
          %745 = vmatpush2.msra.mxu0 0.0
          %746 = vmatprep.subr.mxu0 0.0
          %747 = vmatpush2.msra.mxu0 0.0
          %748 = vmatprep.subr.mxu0 0.0
          %749 = vmatpush2.msra.mxu0 0.0
          %750 = vmatprep.subr.mxu0 0.0
          %751 = vmatpush2.msra.mxu0 0.0
          %752 = vmatprep.subr.mxu0 0.0
          %753 = vmatpush2.msra.mxu0 0.0
          %754 = vmatprep.subr.mxu0 0.0
          %755 = vmatpush2.msra.mxu0 0.0
          %756 = vmatprep.subr.mxu0 0.0
          %757 = vmatpush2.msra.mxu0 0.0
          %758 = vmatprep.subr.mxu0 0.0
          %759 = vmatpush2.msra.mxu0 0.0
          %760 = vmatprep.subr.mxu0 0.0
          %761 = vmatpush2.msra.mxu0 0.0
          %762 = vmatprep.subr.mxu0 0.0
          %763 = vmatpush2.msra.mxu0 0.0
          %764 = vmatprep.subr.mxu0 0.0
          %765 = vmatpush2.msra.mxu0 0.0
          %766 = vmatprep.subr.mxu0 0.0
          %767 = vmatpush2.msra.mxu0 0.0
          %768 = vmatprep.mubr.f32.mxu0 0.0
          %769 = vmatmul.mubr.f32.gmra.mxu0 %v702
          %v770 = vpop.f32.mrf.mxu0
          %v771 = vadd.f32 0.0, %v770
          %v772 = vpop.f32.mrf.mxu0
          %773 = vdwg.mxu0
          %775 = vrot.lane.b32.xlu0 %v771, 5
          %v776 = vpop.permute.xlu0 %775
          %v778 = vsel %vm695, 0.0, %v776
          %vm779 = vcmask 113664
          %v780 = vsel %vm779, %v778, 0.0
          %v781 = vld [vmem:[%s2 + $0x6] sm:$0x3]
          %782 = vrot.lane.b32.xlu0 %v534, 114
          %v783 = vpop.permute.xlu0 %782
          %v786 = vsel %vm536, %v781, 0
          %788 = vmatprep.subr.mxu0 0.0
          %789 = vmatpush1.msra.mxu0 0.0
          %790 = vmatprep.subr.mxu0 0.0
          %791 = vmatpush1.msra.mxu0 0.0
          %792 = vmatprep.subr.mxu0 0.0
          %793 = vmatpush1.msra.mxu0 0.0
          %794 = vmatprep.subr.mxu0 0.0
          %795 = vmatpush1.msra.mxu0 0.0
          %796 = vmatprep.subr.mxu0 0.0
          %797 = vmatpush1.msra.mxu0 0.0
          %798 = vmatprep.subr.mxu0 0.0
          %799 = vmatpush1.msra.mxu0 0.0
          %800 = vmatprep.subr.mxu0 0.0
          %801 = vmatpush1.msra.mxu0 0.0
          %802 = vmatprep.subr.mxu0 0.0
          %803 = vmatpush1.msra.mxu0 0.0
          %804 = vmatprep.subr.mxu0 0.0
          %805 = vmatpush1.msra.mxu0 0.0
          %806 = vmatprep.subr.mxu0 0.0
          %807 = vmatpush1.msra.mxu0 0.0
          %808 = vmatprep.subr.mxu0 0.0
          %809 = vmatpush1.msra.mxu0 0.0
          %810 = vmatprep.subr.mxu0 0.0
          %811 = vmatpush1.msra.mxu0 0.0
          %812 = vmatprep.subr.mxu0 0.0
          %813 = vmatpush1.msra.mxu0 0.0
          %814 = vmatprep.subr.mxu0 0.0
          %815 = vmatpush1.msra.mxu0 0.0
          %816 = vmatprep.subr.mxu0 0.0
          %817 = vmatpush1.msra.mxu0 0.0
          %818 = vmatprep.subr.mxu0 0.0
          %819 = vmatpush1.msra.mxu0 %v783
          %820 = vmatprep.subr.mxu0 0.0
          %821 = vmatpush2.msra.mxu0 0.0
          %822 = vmatprep.subr.mxu0 0.0
          %823 = vmatpush2.msra.mxu0 0.0
          %824 = vmatprep.subr.mxu0 0.0
          %825 = vmatpush2.msra.mxu0 0.0
          %826 = vmatprep.subr.mxu0 0.0
          %827 = vmatpush2.msra.mxu0 0.0
          %828 = vmatprep.subr.mxu0 0.0
          %829 = vmatpush2.msra.mxu0 0.0
          %830 = vmatprep.subr.mxu0 0.0
          %831 = vmatpush2.msra.mxu0 0.0
          %832 = vmatprep.subr.mxu0 0.0
          %833 = vmatpush2.msra.mxu0 0.0
          %834 = vmatprep.subr.mxu0 0.0
          %835 = vmatpush2.msra.mxu0 0.0
          %836 = vmatprep.subr.mxu0 0.0
          %837 = vmatpush2.msra.mxu0 0.0
          %838 = vmatprep.subr.mxu0 0.0
          %839 = vmatpush2.msra.mxu0 0.0
          %840 = vmatprep.subr.mxu0 0.0
          %841 = vmatpush2.msra.mxu0 0.0
          %842 = vmatprep.subr.mxu0 0.0
          %843 = vmatpush2.msra.mxu0 0.0
          %844 = vmatprep.subr.mxu0 0.0
          %845 = vmatpush2.msra.mxu0 0.0
          %846 = vmatprep.subr.mxu0 0.0
          %847 = vmatpush2.msra.mxu0 0.0
          %848 = vmatprep.subr.mxu0 0.0
          %849 = vmatpush2.msra.mxu0 0.0
          %850 = vmatprep.subr.mxu0 0.0
          %851 = vmatpush2.msra.mxu0 0.0
          %852 = vmatprep.mubr.f32.mxu0 0.0
          %853 = vmatmul.mubr.f32.gmra.mxu0 %v786
          %v854 = vpop.f32.mrf.mxu0
          %v855 = vadd.f32 0.0, %v854
          %v856 = vpop.f32.mrf.mxu0
          %857 = vdwg.mxu0
          %859 = vrot.lane.b32.xlu0 %v855, 14
          %v860 = vpop.permute.xlu0 %859
          %v862 = vsel %vm779, 0.0, %v860
          %v864 = vrot.slane %v696, 6
          %v867 = vrot.slane %v780, 4
          %v870 = vrot.slane %v862, 2
          %vm872 = vcmask 1041408
          %v873 = vsel %vm872, %v611, %v864
          %vm874 = vcmask 1043456
          %v875 = vsel %vm874, %v873, %v867
          %vm876 = vcmask 1045504
          %v877 = vsel %vm876, %v875, %v870
          %vm878 = vcmask 408576
          %879 = vst.msk [vmem:[#allocation3] sm:$0xff] %vm878, %v877
        $region120: #{tpu_custom_call.1} parent=69 // pred_fallthru
          _
        // Predicated region
        $region121: #{tpu_custom_call.1} parent=69 // pred_check
          %p880 = pneg %p528
        $region122: #{tpu_custom_call.1} parent=69 // pred_check_branch
          %882 = sbr.rel (%p880) target = $region124
        $region123: #{tpu_custom_call.1} parent=69 // pred_region
          %v883 = vld [vmem:[#allocation3] sm:$0xff]
          %v884 = vld [vmem:[%s310] sm:$0xff]
          %v885 = vld [vmem:[%s310 + $0x8] sm:$0xff]
          %v886 = vld [vmem:[%s310 + $0x10] sm:$0xff]
          %v887 = vld [vmem:[%s310 + $0x18] sm:$0xff]
          %v888 = vld [vmem:[%s310 + $0x20] sm:$0xff]
          %v889 = vld [vmem:[%s310 + $0x28] sm:$0xff]
          %v890 = vld [vmem:[%s310 + $0x30] sm:$0x3]
          %vm891 = vcmask 408576
          %v893 = vsel %vm891, %v883, 0
          %vm895 = vcmask 1041408
          %v897 = vsel %vm895, %v890, 0
          %899 = vmatprep.subr.mxu0 0.0
          %900 = vmatpush1.msra.mxu0 0.0
          %901 = vmatprep.subr.mxu0 0.0
          %902 = vmatpush1.msra.mxu0 0.0
          %903 = vmatprep.subr.mxu0 0.0
          %904 = vmatpush1.msra.mxu0 0.0
          %905 = vmatprep.subr.mxu0 0.0
          %906 = vmatpush1.msra.mxu0 0.0
          %907 = vmatprep.subr.mxu0 0.0
          %908 = vmatpush1.msra.mxu0 0.0
          %909 = vmatprep.subr.mxu0 0.0
          %910 = vmatpush1.msra.mxu0 0.0
          %911 = vmatprep.subr.mxu0 0.0
          %912 = vmatpush1.msra.mxu0 0.0
          %913 = vmatprep.subr.mxu0 0.0
          %914 = vmatpush1.msra.mxu0 0.0
          %915 = vmatprep.subr.mxu0 0.0
          %916 = vmatpush1.msra.mxu0 0.0
          %917 = vmatprep.subr.mxu0 0.0
          %918 = vmatpush1.msra.mxu0 %v897
          %919 = vmatprep.subr.mxu0 0.0
          %920 = vmatpush1.msra.mxu0 %v889
          %921 = vmatprep.subr.mxu0 0.0
          %922 = vmatpush1.msra.mxu0 %v888
          %923 = vmatprep.subr.mxu0 0.0
          %924 = vmatpush1.msra.mxu0 %v887
          %925 = vmatprep.subr.mxu0 0.0
          %926 = vmatpush1.msra.mxu0 %v886
          %927 = vmatprep.subr.mxu0 0.0
          %928 = vmatpush1.msra.mxu0 %v885
          %929 = vmatprep.subr.mxu0 0.0
          %930 = vmatpush1.msra.mxu0 %v884
          %931 = vmatprep.subr.mxu0 0.0
          %932 = vmatpush2.msra.mxu0 0.0
          %933 = vmatprep.subr.mxu0 0.0
          %934 = vmatpush2.msra.mxu0 0.0
          %935 = vmatprep.subr.mxu0 0.0
          %936 = vmatpush2.msra.mxu0 0.0
          %937 = vmatprep.subr.mxu0 0.0
          %938 = vmatpush2.msra.mxu0 0.0
          %939 = vmatprep.subr.mxu0 0.0
          %940 = vmatpush2.msra.mxu0 0.0
          %941 = vmatprep.subr.mxu0 0.0
          %942 = vmatpush2.msra.mxu0 0.0
          %943 = vmatprep.subr.mxu0 0.0
          %944 = vmatpush2.msra.mxu0 0.0
          %945 = vmatprep.subr.mxu0 0.0
          %946 = vmatpush2.msra.mxu0 0.0
          %947 = vmatprep.subr.mxu0 0.0
          %948 = vmatpush2.msra.mxu0 0.0
          %949 = vmatprep.subr.mxu0 0.0
          %950 = vmatpush2.msra.mxu0 0.0
          %951 = vmatprep.subr.mxu0 0.0
          %952 = vmatpush2.msra.mxu0 0.0
          %953 = vmatprep.subr.mxu0 0.0
          %954 = vmatpush2.msra.mxu0 0.0
          %955 = vmatprep.subr.mxu0 0.0
          %956 = vmatpush2.msra.mxu0 0.0
          %957 = vmatprep.subr.mxu0 0.0
          %958 = vmatpush2.msra.mxu0 0.0
          %959 = vmatprep.subr.mxu0 0.0
          %960 = vmatpush2.msra.mxu0 0.0
          %961 = vmatprep.subr.mxu0 0.0
          %962 = vmatpush2.msra.mxu0 0.0
          %963 = vmatprep.mubr.f32.mxu0 0.0
          %964 = vmatmul.mubr.f32.gmra.mxu0 %v893
          %v965 = vpop.f32.mrf.mxu0
          %v966 = vadd.f32 0.0, %v965
          %v967 = vpop.f32.mrf.mxu0
          %968 = vdwg.mxu0
          %969 = vst [vmem:[%s351] sm:$0xff] %v966
        $region124: #{tpu_custom_call.1} parent=69 // pred_fallthru
          _
        %s970 = sand.u32 %s166, 1
        %s971 = scalar_lea.sflag [#allocation7], %s970
        %s972 = sand.u32 %s166, 1
        %s973 = smul.addr %s972, 8
        %s974 = scalar_lea.vmem [#allocation6], %s973
        // Predicated region
        $region125: #{tpu_custom_call.1} parent=69 // pred_check
          %p975 = pneg %p176
        $region126: #{tpu_custom_call.1} parent=69 // pred_check_branch
          %977 = sbr.rel (%p975) target = $region128
        $region127: #{tpu_custom_call.1} parent=69 // pred_region
          %s978 = ssub.s32 1, %s24
          %s980 = ssub.s32 128, 128
          %981 = vsyncadd %s971, %s980
          %s982 = smul.addr %s978, 2
          %s983 = sadd.s32 %s25, %s982
          %s984 = smul.addr %s23, 4
          %s985 = sadd.s32 %s983, %s984
          %s986 = smul.addr %s985, 128
          %s987 = scalar_lea.hbm %s4, %s986
          %s989 = sshll.u32 %s974, 4
          %s990 = int_to_ptr.vmem [resolvable:$true] %s989
          %992 = dma.vmem_to_hbm [thread:$0]  %s990, 128, %s987, %s971
        $region128: #{tpu_custom_call.1} parent=69 // pred_fallthru
          _
      $region70: #{tpu_custom_call.1} parent=5 // pred_fallthru
        _
      %p993 = scmp.le.s32.totalorder 2, %s13
      // Predicated region
      $region129: #{tpu_custom_call.1} parent=5 // pred_check
        %p994 = pneg %p993
      $region130: #{tpu_custom_call.1} parent=5 // pred_check_branch
        %996 = sbr.rel (%p994) target = $region132
      $region131: #{tpu_custom_call.1} parent=5 // pred_region
        %s997 = ssub.s32 %s13, 2
        // Predicated region
        $region133: #{tpu_custom_call.1} parent=131 // pred_check
          %p998 = pneg %p182
        $region134: #{tpu_custom_call.1} parent=131 // pred_check_branch
          %1000 = sbr.rel (%p998) target = $region136
        $region135: #{tpu_custom_call.1} parent=131 // pred_region
          %s1001 = sand.u32 %s167, 1
          %s1002 = scalar_lea.sflag [#allocation7], %s1001
          %s1003 = sand.u32 %s167, 1
          %s1004 = smul.addr %s1003, 8
          %s1005 = scalar_lea.vmem [#allocation6], %s1004
          %1006 = dma.done %s1002, 128
        $region136: #{tpu_custom_call.1} parent=131 // pred_fallthru
          _
      $region132: #{tpu_custom_call.1} parent=5 // pred_fallthru
        _
    $region6: #{tpu_custom_call.1} parent=1 // loop_footer
      %s17 = sadd.s32 1, %s13
    $region7: #{tpu_custom_call.1} parent=1 // loop_footer_branch
      %12 = sbr.rel target = $region3
    $region8: #{tpu_custom_call.1} parent=1 // loop_exit
      _
    %1007 = vsyncpa [#allocation7], 1
    %s1008 = scalar_lea.sflag [#allocation7], 1
    %1009 = vsyncpa %s1008, 1
  %1010 = vsyncmov [#allocation4]
  %s1011 = vpop.sfrf %1010
  %p1012 = scmp.eq.s32.totalorder %s1011, 0
  %p1013 = pneg %p1012
  %1015 = shalt.err (%p1013)

// kernel: tpu_custom_call.1
$region0: #{tpu_custom_call.1}
  #allocation0 [shape = 'u32[]', space=smem, size = 0x4, offset = 0x4, fixed_abs, tag = 'smem constant byte address 0x4 - core index']
  #allocation1 [shape = 'u32[144,128]{1,0:T(1,128)}', space=vmem, size = 0x12000, scoped, tag = 'internal scratch']
  #allocation2 [shape = 'f32[8,50]{1,0:T(8,128)}', space=vmem, size = 0x1000, scoped, tag = 'scratch operand']
  #allocation3 [shape = 'f32[8,50]{1,0:T(8,128)}', space=vmem, size = 0x1000, scoped, tag = 'scratch operand']
  #allocation4 [shape = 's32[1]{0}', space=sflag, size = 0x4, scoped, tag = 'scratch operand']
  #allocation8 [shape = 's32[]', space=sflag, size = 0x4, offset = 0, fixed_abs, tag = 'sflag constant byte address 0x0 - dummy sync flag']
  %s0 = inlined_call_operand.vmem [shape: f32[2,8,256], index: 0, kind: input, shape index: {}]
  %s1 = inlined_call_operand.vmem [shape: f32[256,50], index: 1, kind: input, shape index: {}]
  %s2 = inlined_call_operand.vmem [shape: f32[8,8], index: 2, kind: input, shape index: {}]
  %s3 = inlined_call_operand.vmem [shape: f32[50,256], index: 3, kind: input, shape index: {}]
  %s4 = inlined_call_operand.hbm [shape: f32[2,16,256], index: 4, kind: output, shape index: {}]
  %s5 = sld [smem:[#allocation0]]
  $region137: #{tpu_custom_call.1} parent=0
    _
  %s7 = ssub.s32 1, %s5
  %s8 = scalar_select 0, %s7, %s5
  $region1: #{tpu_custom_call.1} parent=0
    #allocation5 [shape = 'u8[57344]{0}', space=vmem, size = 0xe000, scoped, tag = 'input window, operand 3']
    #allocation6 [shape = 'u8[8192]{0}', space=vmem, size = 0x2000, scoped, tag = 'output window, operand 0']
    #allocation7 [shape = 's32[2]{0}', space=sflag, size = 0x8, scoped, tag = 'scoped memory for tpu_custom_call.1']
    %9 = vsyncpa [#allocation7], 0
    %s10 = scalar_lea.sflag [#allocation7], 1
    %11 = vsyncpa %s10, 0
    loop: start=0, step=1, limit=10
    $region2: #{tpu_custom_call.1} parent=1 // loop_pre_header
      _
    $region3: #{tpu_custom_call.1} parent=1 // loop_header
      %s13 = sphi 0, %s17
      %p14 = scmp.ge.s32.totalorder %s13, 10
      %s20 = sphi 0, %s39
      %s21 = sphi 0, %s35
      %s22 = sphi 0, %s31
      %s23 = sphi 0, %s20
      %s24 = sphi 0, %s21
      %s25 = sphi 0, %s22
      %s26 = sphi 0, %s23
      %s27 = sphi 0, %s24
      %s28 = sphi 0, %s25
      %s50 = sphi 0, %s52
      %s53 = sphi 0, %s50
      %s54 = sphi 0, %s53
      %s70 = sphi 0, %s54
      %s82 = sphi 0, %s84
      %s85 = sphi 0, %s82
      %s86 = sphi 0, %s85
      %s102 = sphi 0, %s86
      %s106 = sphi 0, %s106
      %s108 = sphi 0, %s106
      %s109 = sphi 0, %s108
      %s123 = sphi 0, %s109
      %s131 = sphi 0, %s133
      %s134 = sphi 0, %s131
      %s135 = sphi 0, %s134
      %s151 = sphi 0, %s135
      %s163 = sphi 0, %s165
      %s166 = sphi 0, %s163
      %s167 = sphi 0, %s166
      %s183 = sphi 0, %s167
    $region4: #{tpu_custom_call.1} parent=1 // loop_header_branch
      %16 = sbr.rel (%p14) target = $region8
    $region5: #{tpu_custom_call.1} parent=1 // loop_body
      %s18 = ssub.s32 %s13, 1
      %s19 = ssub.s32 %s13, 2
      %s29 = sadd.s32 1, %s22
      %p30 = scmp.ge.s32.totalorder %s29, 2
      %s31 = scalar_select %p30, 0, %s29
      %s32 = sadd.s32 1, %s21
      %s33 = scalar_select %p30, %s32, %s21
      %p34 = scmp.ge.s32.totalorder %s33, 2
      %s35 = scalar_select %p34, 0, %s33
      %s36 = sadd.s32 1, %s20
      %s37 = scalar_select %p34, %s36, %s20
      %p38 = scmp.ge.s32.totalorder %s37, 2
      %s39 = scalar_select %p38, 0, %s37
      %s40 = ssub.s32 1, %s21
      %s41 = smul.u32 %s40, %s22
      %s42 = sadd.s32 %s41, %s21
      %s43 = ssub.s32 1, %s35
      %s44 = smul.u32 %s43, %s31
      %s45 = sadd.s32 %s44, %s35
      %s46 = ssub.s32 %s20, %s39
      %s47 = ssub.s32 %s42, %s45
      %s48 = sor.u32 %s46, %s47
      %p49 = scmp.eq.s32.totalorder %s48, 0
      %s51 = sadd.s32 %s50, 1
      %s52 = scalar_select %p49, %s50, %s51
      %p55 = pneg %p49
      %p56 = scmp.eq.s32.totalorder %s13, 7
      %p57 = por %p55, %p56
      %p58 = scmp.ne.s32.totalorder %s50, %s53
      %p59 = scmp.eq.s32.totalorder %s13, 0
      %p60 = por %p58, %p59
      %p61 = scmp.ne.s32.totalorder %s50, %s53
      %p62 = scmp.eq.s32.totalorder %s18, 7
      %p63 = por %p61, %p62
      %p64 = scmp.ne.s32.totalorder %s53, %s54
      %p65 = scmp.eq.s32.totalorder %s18, 0
      %p66 = por %p64, %p65
      %p67 = scmp.ne.s32.totalorder %s53, %s54
      %p68 = scmp.eq.s32.totalorder %s19, 7
      %p69 = por %p67, %p68
      %p71 = scmp.ne.s32.totalorder %s54, %s70
      %p72 = scmp.eq.s32.totalorder %s19, 0
      %p73 = por %p71, %p72
      %s74 = ssub.s32 1, %s21
      %s75 = smul.u32 %s74, %s22
      %s76 = sadd.s32 %s75, %s21
      %s77 = ssub.s32 1, %s35
      %s78 = smul.u32 %s77, %s31
      %s79 = sadd.s32 %s78, %s35
      %s80 = ssub.s32 %s76, %s79
      %p81 = scmp.eq.s32.totalorder %s80, 0
      %s83 = sadd.s32 %s82, 1
      %s84 = scalar_select %p81, %s82, %s83
      %p87 = pneg %p81
      %p88 = scmp.eq.s32.totalorder %s13, 7
      %p89 = por %p87, %p88
      %p90 = scmp.ne.s32.totalorder %s82, %s85
      %p91 = scmp.eq.s32.totalorder %s13, 0
      %p92 = por %p90, %p91
      %p93 = scmp.ne.s32.totalorder %s82, %s85
      %p94 = scmp.eq.s32.totalorder %s18, 7
      %p95 = por %p93, %p94
      %p96 = scmp.ne.s32.totalorder %s85, %s86
      %p97 = scmp.eq.s32.totalorder %s18, 0
      %p98 = por %p96, %p97
      %p99 = scmp.ne.s32.totalorder %s85, %s86
      %p100 = scmp.eq.s32.totalorder %s19, 7
      %p101 = por %p99, %p100
      %p103 = scmp.ne.s32.totalorder %s86, %s102
      %p104 = scmp.eq.s32.totalorder %s19, 0
      %p105 = por %p103, %p104
      %s107 = sadd.s32 %s106, 1
      %p110 = scmp.eq.s32.totalorder %s13, 7
      %p111 = scmp.ne.s32.totalorder %s106, %s108
      %p112 = scmp.eq.s32.totalorder %s13, 0
      %p113 = por %p111, %p112
      %p114 = scmp.ne.s32.totalorder %s106, %s108
      %p115 = scmp.eq.s32.totalorder %s18, 7
      %p116 = por %p114, %p115
      %p117 = scmp.ne.s32.totalorder %s108, %s109
      %p118 = scmp.eq.s32.totalorder %s18, 0
      %p119 = por %p117, %p118
      %p120 = scmp.ne.s32.totalorder %s108, %s109
      %p121 = scmp.eq.s32.totalorder %s19, 7
      %p122 = por %p120, %p121
      %p124 = scmp.ne.s32.totalorder %s109, %s123
      %p125 = scmp.eq.s32.totalorder %s19, 0
      %p126 = por %p124, %p125
      %s127 = smul.u32 %s21, %s22
      %s128 = smul.u32 %s35, %s31
      %s129 = ssub.s32 %s127, %s128
      %p130 = scmp.eq.s32.totalorder %s129, 0
      %s132 = sadd.s32 %s131, 1
      %s133 = scalar_select %p130, %s131, %s132
      %p136 = pneg %p130
      %p137 = scmp.eq.s32.totalorder %s13, 7
      %p138 = por %p136, %p137
      %p139 = scmp.ne.s32.totalorder %s131, %s134
      %p140 = scmp.eq.s32.totalorder %s13, 0
      %p141 = por %p139, %p140
      %p142 = scmp.ne.s32.totalorder %s131, %s134
      %p143 = scmp.eq.s32.totalorder %s18, 7
      %p144 = por %p142, %p143
      %p145 = scmp.ne.s32.totalorder %s134, %s135
      %p146 = scmp.eq.s32.totalorder %s18, 0
      %p147 = por %p145, %p146
      %p148 = scmp.ne.s32.totalorder %s134, %s135
      %p149 = scmp.eq.s32.totalorder %s19, 7
      %p150 = por %p148, %p149
      %p152 = scmp.ne.s32.totalorder %s135, %s151
      %p153 = scmp.eq.s32.totalorder %s19, 0
      %p154 = por %p152, %p153
      %s155 = ssub.s32 1, %s21
      %s156 = ssub.s32 1, %s35
      %s157 = ssub.s32 %s20, %s39
      %s158 = ssub.s32 %s155, %s156
      %s159 = sor.u32 %s157, %s158
      %s160 = ssub.s32 %s22, %s31
      %s161 = sor.u32 %s159, %s160
      %p162 = scmp.eq.s32.totalorder %s161, 0
      %s164 = sadd.s32 %s163, 1
      %s165 = scalar_select %p162, %s163, %s164
      %p168 = pneg %p162
      %p169 = scmp.eq.s32.totalorder %s13, 7
      %p170 = por %p168, %p169
      %p171 = scmp.ne.s32.totalorder %s163, %s166
      %p172 = scmp.eq.s32.totalorder %s13, 0
      %p173 = por %p171, %p172
      %p174 = scmp.ne.s32.totalorder %s163, %s166
      %p175 = scmp.eq.s32.totalorder %s18, 7
      %p176 = por %p174, %p175
      %p177 = scmp.ne.s32.totalorder %s166, %s167
      %p178 = scmp.eq.s32.totalorder %s18, 0
      %p179 = por %p177, %p178
      %p180 = scmp.ne.s32.totalorder %s166, %s167
      %p181 = scmp.eq.s32.totalorder %s19, 7
      %p182 = por %p180, %p181
      %p184 = scmp.ne.s32.totalorder %s167, %s183
      %p185 = scmp.eq.s32.totalorder %s19, 0
      %p186 = por %p184, %p185
      %p187 = scmp.le.s32.totalorder 1, %s13
      %p188 = scmp.lt.s32.totalorder %s13, 9
      %p189 = pnand %p187, %p188
      %p190 = pneg %p189
      // Predicated region
      $region9: #{tpu_custom_call.1} parent=5 // pred_check
        _
      $region10: #{tpu_custom_call.1} parent=5 // pred_check_branch
        %192 = sbr.rel (%p189) target = $region12
      $region11: #{tpu_custom_call.1} parent=5 // pred_region
        %s193 = ssub.s32 %s13, 1
        // Predicated region
        $region13: #{tpu_custom_call.1} parent=11 // pred_check
          %p194 = pneg %p119
        $region14: #{tpu_custom_call.1} parent=11 // pred_check_branch
          %196 = sbr.rel (%p194) target = $region16
        $region15: #{tpu_custom_call.1} parent=11 // pred_region
          _
        $region16: #{tpu_custom_call.1} parent=11 // pred_fallthru
          _
      $region12: #{tpu_custom_call.1} parent=5 // pred_fallthru
        _
      %p197 = scmp.lt.s32.totalorder %s13, 8
      // Predicated region
      $region17: #{tpu_custom_call.1} parent=5 // pred_check
        %p198 = pneg %p197
      $region18: #{tpu_custom_call.1} parent=5 // pred_check_branch
        %200 = sbr.rel (%p198) target = $region20
      $region19: #{tpu_custom_call.1} parent=5 // pred_region
        // Predicated region
        $region21: #{tpu_custom_call.1} parent=19 // pred_check
          %p201 = pneg %p60
        $region22: #{tpu_custom_call.1} parent=19 // pred_check_branch
          %203 = sbr.rel (%p201) target = $region24
        $region23: #{tpu_custom_call.1} parent=19 // pred_region
          %s204 = ssub.s32 1, %s21
          %s205 = smul.u32 %s204, %s22
          %s206 = sadd.s32 %s205, %s21
          %p207 = scmp.lt.s32.totalorder %s20, 1
          %s208 = scalar_select %p207, %s20, 1
          %p209 = scmp.lt.s32.totalorder %s206, 1
          %s210 = scalar_select %p209, %s206, 1
          %s211 = smul.addr %s208, 2
          %s212 = sadd.s32 %s210, %s211
          %s213 = smul.addr %s212, 8
          %s214 = scalar_lea.vmem %s0, %s213
          %s215 = ssub.s32 1, %s21
          %s216 = smul.u32 %s215, %s22
          %s217 = sadd.s32 %s216, %s21
        $region24: #{tpu_custom_call.1} parent=19 // pred_fallthru
          _
        // Predicated region
        $region25: #{tpu_custom_call.1} parent=19 // pred_check
          %p218 = pneg %p92
        $region26: #{tpu_custom_call.1} parent=19 // pred_check_branch
          %220 = sbr.rel (%p218) target = $region28
        $region27: #{tpu_custom_call.1} parent=19 // pred_region
          %s221 = ssub.s32 1, %s21
          %s222 = smul.u32 %s221, %s22
          %s223 = sadd.s32 %s222, %s21
          %s224 = smul.u32 16, %s223
          %p225 = scmp.lt.s32.totalorder %s224, 31
          %s226 = scalar_select %p225, %s224, 31
          %s227 = smul.addr %s226, 8
          %s228 = scalar_lea.vmem %s1, %s227
          %s229 = ssub.s32 1, %s21
          %s230 = smul.u32 %s229, %s22
          %s231 = sadd.s32 %s230, %s21
          %s232 = smul.u32 16, %s231
        $region28: #{tpu_custom_call.1} parent=19 // pred_fallthru
          _
        // Predicated region
        $region29: #{tpu_custom_call.1} parent=19 // pred_check
          %p233 = pneg %p141
        $region30: #{tpu_custom_call.1} parent=19 // pred_check_branch
          %235 = sbr.rel (%p233) target = $region32
        $region31: #{tpu_custom_call.1} parent=19 // pred_region
          %s236 = sand.u32 %s131, 1
          %s237 = sand.u32 %s131, 1
          %s238 = smul.addr %s237, 56
          %s239 = scalar_lea.vmem [#allocation5], %s238
          %s240 = smul.u32 %s21, %s22
          %s241 = smul.addr %s240, 8
          %s242 = scalar_lea.vmem %s3, %s241
          // Predicated region
          $region33: #{tpu_custom_call.1} parent=31 // pred_check
            _
          $region34: #{tpu_custom_call.1} parent=31 // pred_check_branch
            %244 = sbr.rel (0) target = $region36
          $region35: #{tpu_custom_call.1} parent=31 // pred_region
            // Predicated region
            $region37: #{tpu_custom_call.1} parent=35 // pred_check
              _
            $region38: #{tpu_custom_call.1} parent=35 // pred_check_branch
              %246 = sbr.rel (0) target = $region40
            $region39: #{tpu_custom_call.1} parent=35 // pred_region
              // Predicated region
              $region52: #{tpu_custom_call.1} parent=39 // pred_check
                _
              $region53: #{tpu_custom_call.1} parent=39 // pred_check_branch
                %274 = sbr.rel (0) target = $region55
              $region54: #{tpu_custom_call.1} parent=39 // pred_region
                loop: start=0, step=1, limit=1
                $region56: #{tpu_custom_call.1} parent=54 // loop_pre_header
                  _
                $region57: #{tpu_custom_call.1} parent=54 // loop_header
                  %s276 = sphi 0, %s280
                  %p277 = scmp.ge.s32.totalorder %s276, 1
                  %s281 = sphi %s242, %s242
                  %s282 = sphi %s239, %s239
                $region58: #{tpu_custom_call.1} parent=54 // loop_header_branch
                  %279 = sbr.rel (%p277) target = $region62
                $region59: #{tpu_custom_call.1} parent=54 // loop_body
                  %v283 = vld [vmem:[%s281] sm:$0xff]
                  %284 = vst [vmem:[%s282] sm:$0xff] %v283
                  %v285 = vld [vmem:[%s281 + $0x10] sm:$0xff]
                  %286 = vst [vmem:[%s282 + $0x8] sm:$0xff] %v285
                  %v287 = vld [vmem:[%s281 + $0x20] sm:$0xff]
                  %288 = vst [vmem:[%s282 + $0x10] sm:$0xff] %v287
                  %v289 = vld [vmem:[%s281 + $0x30] sm:$0xff]
                  %290 = vst [vmem:[%s282 + $0x18] sm:$0xff] %v289
                  %v291 = vld [vmem:[%s281 + $0x40] sm:$0xff]
                  %292 = vst [vmem:[%s282 + $0x20] sm:$0xff] %v291
                  %v293 = vld [vmem:[%s281 + $0x50] sm:$0xff]
                  %294 = vst [vmem:[%s282 + $0x28] sm:$0xff] %v293
                  %v295 = vld [vmem:[%s281 + $0x60] sm:$0xff]
                  %296 = vst [vmem:[%s282 + $0x30] sm:$0xff] %v295
                $region60: #{tpu_custom_call.1} parent=54 // loop_footer
                  %s280 = sadd.s32 1, %s276
                $region61: #{tpu_custom_call.1} parent=54 // loop_footer_branch
                  %275 = sbr.rel target = $region57
                $region62: #{tpu_custom_call.1} parent=54 // loop_exit
                  _
              $region55: #{tpu_custom_call.1} parent=39 // pred_fallthru
                _
              // Predicated region
              $region63: #{tpu_custom_call.1} parent=39 // pred_check
                _
              $region64: #{tpu_custom_call.1} parent=39 // pred_check_branch
                %298 = sbr.rel target = $region66
              $region65: #{tpu_custom_call.1} parent=39 // pred_region
                _
              $region66: #{tpu_custom_call.1} parent=39 // pred_fallthru
                _
            $region40: #{tpu_custom_call.1} parent=35 // pred_fallthru
              _
            // Predicated region
            $region41: #{tpu_custom_call.1} parent=35 // pred_check
              _
            $region42: #{tpu_custom_call.1} parent=35 // pred_check_branch
              %248 = sbr.rel target = $region44
            $region43: #{tpu_custom_call.1} parent=35 // pred_region
              %s250 = ssub.s32 256, 1
              loop: start=0, step=1, limit=1
              $region45: #{tpu_custom_call.1} parent=43 // loop_pre_header
                _
              $region46: #{tpu_custom_call.1} parent=43 // loop_header
                %s252 = sphi 0, %s256
                %p253 = scmp.ge.s32.totalorder %s252, 1
                %s257 = sphi %s242, %s242
                %s258 = sphi %s239, %s239
              $region47: #{tpu_custom_call.1} parent=43 // loop_header_branch
                %255 = sbr.rel (%p253) target = $region51
              $region48: #{tpu_custom_call.1} parent=43 // loop_body
                %v259 = vld [vmem:[%s257] sm:%s250]
                %260 = vst [vmem:[%s258] sm:%s250] %v259
                %v261 = vld [vmem:[%s257 + $0x10] sm:%s250]
                %262 = vst [vmem:[%s258 + $0x8] sm:%s250] %v261
                %v263 = vld [vmem:[%s257 + $0x20] sm:%s250]
                %264 = vst [vmem:[%s258 + $0x10] sm:%s250] %v263
                %v265 = vld [vmem:[%s257 + $0x30] sm:%s250]
                %266 = vst [vmem:[%s258 + $0x18] sm:%s250] %v265
                %v267 = vld [vmem:[%s257 + $0x40] sm:%s250]
                %268 = vst [vmem:[%s258 + $0x20] sm:%s250] %v267
                %v269 = vld [vmem:[%s257 + $0x50] sm:%s250]
                %270 = vst [vmem:[%s258 + $0x28] sm:%s250] %v269
                %v271 = vld [vmem:[%s257 + $0x60] sm:%s250]
                %272 = vst [vmem:[%s258 + $0x30] sm:%s250] %v271
              $region49: #{tpu_custom_call.1} parent=43 // loop_footer
                %s256 = sadd.s32 1, %s252
              $region50: #{tpu_custom_call.1} parent=43 // loop_footer_branch
                %251 = sbr.rel target = $region46
              $region51: #{tpu_custom_call.1} parent=43 // loop_exit
                _
            $region44: #{tpu_custom_call.1} parent=35 // pred_fallthru
              _
          $region36: #{tpu_custom_call.1} parent=31 // pred_fallthru
            _
          %299 = vnop
        $region32: #{tpu_custom_call.1} parent=19 // pred_fallthru
          _
      $region20: #{tpu_custom_call.1} parent=5 // pred_fallthru
        _
      %p300 = scmp.le.s32.totalorder 1, %s13
      %p301 = scmp.lt.s32.totalorder %s13, 9
      %p302 = pnand %p300, %p301
      %p303 = pneg %p302
      // Predicated region
      $region67: #{tpu_custom_call.1} parent=5 // pred_check
        _
      $region68: #{tpu_custom_call.1} parent=5 // pred_check_branch
        %305 = sbr.rel (%p302) target = $region70
      $region69: #{tpu_custom_call.1} parent=5 // pred_region
        %s306 = ssub.s32 %s13, 1
        %s307 = sand.u32 %s134, 1
        %s308 = sand.u32 %s134, 1
        %s309 = smul.addr %s308, 56
        %s310 = scalar_lea.vmem [#allocation5], %s309
        // Predicated region
        $region71: #{tpu_custom_call.1} parent=69 // pred_check
          %p311 = pneg %p147
        $region72: #{tpu_custom_call.1} parent=69 // pred_check_branch
          %313 = sbr.rel (%p311) target = $region74
        $region73: #{tpu_custom_call.1} parent=69 // pred_region
          _
        $region74: #{tpu_custom_call.1} parent=69 // pred_fallthru
          _
        %s314 = ssub.s32 1, %s24
        %s315 = smul.u32 %s314, %s25
        %s316 = sadd.s32 %s315, %s24
        %p317 = scmp.lt.s32.totalorder %s23, 1
        %s318 = scalar_select %p317, %s23, 1
        %p319 = scmp.lt.s32.totalorder %s316, 1
        %s320 = scalar_select %p319, %s316, 1
        %s321 = smul.addr %s318, 2
        %s322 = sadd.s32 %s320, %s321
        %s323 = smul.addr %s322, 8
        %s324 = scalar_lea.vmem %s0, %s323
        %p325 = pneg %p66
        %p326 = pneg %p63
        %s327 = ssub.s32 1, %s24
        %s328 = smul.u32 %s327, %s25
        %s329 = sadd.s32 %s328, %s24
        %s330 = smul.u32 16, %s329
        %p331 = scmp.lt.s32.totalorder %s330, 31
        %s332 = scalar_select %p331, %s330, 31
        %s333 = smul.addr %s332, 8
        %s334 = scalar_lea.vmem %s1, %s333
        %p335 = pneg %p98
        %p336 = pneg %p95
        %p337 = pneg %p119
        %p338 = pneg %p116
        %s339 = sand.u32 %s134, 1
        %s340 = sand.u32 %s134, 1
        %s341 = smul.addr %s340, 56
        %s342 = scalar_lea.vmem [#allocation5], %s341
        %p343 = pneg %p147
        %p344 = pneg %p144
        %p345 = pneg %p179
        %p346 = pneg %p176
        %s347 = sand.u32 %s166, 1
        %s348 = scalar_lea.sflag [#allocation7], %s347
        %s349 = sand.u32 %s166, 1
        %s350 = smul.addr %s349, 8
        %s351 = scalar_lea.vmem [#allocation6], %s350
        %s352 = ssub.s32 1, %s24
        %s353 = smul.u32 %s352, %s25
        %s354 = sadd.s32 %s353, %s24
        %p355 = scmp.lt.s32.totalorder %s23, 1
        %s356 = scalar_select %p355, %s23, 1
        %p357 = scmp.lt.s32.totalorder %s354, 1
        %s358 = scalar_select %p357, %s354, 1
        %s359 = smul.addr %s356, 2
        %s360 = sadd.s32 %s358, %s359
        %s361 = smul.addr %s360, 8
        %s362 = scalar_lea.vmem %s0, %s361
        %s363 = ssub.s32 1, %s24
        %s364 = smul.u32 %s363, %s25
        %s365 = sadd.s32 %s364, %s24
        %s366 = ssub.s32 1, %s24
        %s367 = smul.u32 %s366, %s25
        %s368 = sadd.s32 %s367, %s24
        %s369 = smul.u32 16, %s368
        %p370 = scmp.lt.s32.totalorder %s369, 31
        %s371 = scalar_select %p370, %s369, 31
        %s372 = smul.addr %s371, 8
        %s373 = scalar_lea.vmem %s1, %s372
        %s374 = ssub.s32 1, %s24
        %s375 = smul.u32 %s374, %s25
        %s376 = sadd.s32 %s375, %s24
        %s377 = smul.u32 16, %s376
        %s378 = smul.u32 %s24, %s25
        %s379 = ssub.s32 1, %s24
        %p380 = scmp.eq.s32.totalorder %s24, 0
        // Predicated region
        $region75: #{tpu_custom_call.1} parent=69 // pred_check
          %p381 = pneg %p380
        $region76: #{tpu_custom_call.1} parent=69 // pred_check_branch
          %383 = sbr.rel (%p381) target = $region78
        $region77: #{tpu_custom_call.1} parent=69 // pred_region
          %p385 = scmp.lt.u32.totalorder 8, 8
          %p386 = pneg %p385
          // Predicated region
          $region79: #{tpu_custom_call.1} parent=77 // pred_check
            _
          $region80: #{tpu_custom_call.1} parent=77 // pred_check_branch
            %388 = sbr.rel (%p385) target = $region82
          $region81: #{tpu_custom_call.1} parent=77 // pred_region
            %s404 = sand.u32 8, 7
            %p405 = scmp.eq.s32.totalorder %s404, 0
            // Predicated region
            $region94: #{tpu_custom_call.1} parent=81 // pred_check
              %p406 = pneg %p405
            $region95: #{tpu_custom_call.1} parent=81 // pred_check_branch
              %408 = sbr.rel (%p406) target = $region97
            $region96: #{tpu_custom_call.1} parent=81 // pred_region
              loop: start=0, step=1, limit=1
              $region98: #{tpu_custom_call.1} parent=96 // loop_pre_header
                _
              $region99: #{tpu_custom_call.1} parent=96 // loop_header
                %s410 = sphi 0, %s414
                %p411 = scmp.ge.s32.totalorder %s410, 1
                %s415 = sphi %s362, %s362
                %s416 = sphi %s351, %s351
              $region100: #{tpu_custom_call.1} parent=96 // loop_header_branch
                %413 = sbr.rel (%p411) target = $region104
              $region101: #{tpu_custom_call.1} parent=96 // loop_body
                %v417 = vld [vmem:[%s415] sm:$0xff]
                %418 = vst [vmem:[%s416] sm:$0xff] %v417
              $region102: #{tpu_custom_call.1} parent=96 // loop_footer
                %s414 = sadd.s32 1, %s410
              $region103: #{tpu_custom_call.1} parent=96 // loop_footer_branch
                %409 = sbr.rel target = $region99
              $region104: #{tpu_custom_call.1} parent=96 // loop_exit
                _
            $region97: #{tpu_custom_call.1} parent=81 // pred_fallthru
              _
            %p419 = pneg %p405
            // Predicated region
            $region105: #{tpu_custom_call.1} parent=81 // pred_check
              _
            $region106: #{tpu_custom_call.1} parent=81 // pred_check_branch
              %421 = sbr.rel (%p405) target = $region108
            $region107: #{tpu_custom_call.1} parent=81 // pred_region
              %s422 = sand.u32 8, 7
            $region108: #{tpu_custom_call.1} parent=81 // pred_fallthru
              _
          $region82: #{tpu_custom_call.1} parent=77 // pred_fallthru
            _
          // Predicated region
          $region83: #{tpu_custom_call.1} parent=77 // pred_check
            %p389 = pneg %p385
          $region84: #{tpu_custom_call.1} parent=77 // pred_check_branch
            %391 = sbr.rel (%p389) target = $region86
          $region85: #{tpu_custom_call.1} parent=77 // pred_region
            %s392 = sshll.u32 1, 8
            %s393 = ssub.s32 %s392, 1
            loop: start=0, step=1, limit=1
            $region87: #{tpu_custom_call.1} parent=85 // loop_pre_header
              _
            $region88: #{tpu_custom_call.1} parent=85 // loop_header
              %s395 = sphi 0, %s399
              %p396 = scmp.ge.s32.totalorder %s395, 1
              %s400 = sphi %s362, %s362
              %s401 = sphi %s351, %s351
            $region89: #{tpu_custom_call.1} parent=85 // loop_header_branch
              %398 = sbr.rel (%p396) target = $region93
            $region90: #{tpu_custom_call.1} parent=85 // loop_body
              %v402 = vld [vmem:[%s400] sm:%s393]
              %403 = vst [vmem:[%s401] sm:%s393] %v402
            $region91: #{tpu_custom_call.1} parent=85 // loop_footer
              %s399 = sadd.s32 1, %s395
            $region92: #{tpu_custom_call.1} parent=85 // loop_footer_branch
              %394 = sbr.rel target = $region88
            $region93: #{tpu_custom_call.1} parent=85 // loop_exit
              _
          $region86: #{tpu_custom_call.1} parent=77 // pred_fallthru
            _
          // Predicated region
          $region109: #{tpu_custom_call.1} parent=77 // pred_check
            _
          $region110: #{tpu_custom_call.1} parent=77 // pred_check_branch
            %425 = sbr.rel (0) target = $region112
          $region111: #{tpu_custom_call.1} parent=77 // pred_region
            %426 = vsyncadd [#allocation4], 128
          $region112: #{tpu_custom_call.1} parent=77 // pred_fallthru
            _
          %p427 = scmp.eq.s32.totalorder %s25, 0
          // Predicated region
          $region113: #{tpu_custom_call.1} parent=77 // pred_check
            %p428 = pneg %p427
          $region114: #{tpu_custom_call.1} parent=77 // pred_check_branch
            %430 = sbr.rel (%p428) target = $region116
          $region115: #{tpu_custom_call.1} parent=77 // pred_region
            %vm431 = vcmask 408576
            %432 = vst.msk [vmem:[#allocation2] sm:$0xff] %vm431, 0.0
          $region116: #{tpu_custom_call.1} parent=77 // pred_fallthru
            _
          %v433 = vld [vmem:[#allocation2] sm:$0xff]
          %v434 = vld [vmem:[%s362] sm:$0xff]
          %v435 = vld [vmem:[%s373] sm:$0xff]
          %v436 = vld [vmem:[%s373 + $0x8] sm:$0xff]
          %v437 = vld [vmem:[%s373 + $0x10] sm:$0xff]
          %v438 = vld [vmem:[%s373 + $0x18] sm:$0xff]
          %v439 = vld [vmem:[%s373 + $0x20] sm:$0xff]
          %v440 = vld [vmem:[%s373 + $0x28] sm:$0xff]
          %v441 = vld [vmem:[%s373 + $0x30] sm:$0xff]
          %v442 = vld [vmem:[%s373 + $0x38] sm:$0xff]
          %v443 = vld [vmem:[%s373 + $0x40] sm:$0xff]
          %v444 = vld [vmem:[%s373 + $0x48] sm:$0xff]
          %v445 = vld [vmem:[%s373 + $0x50] sm:$0xff]
          %v446 = vld [vmem:[%s373 + $0x58] sm:$0xff]
          %v447 = vld [vmem:[%s373 + $0x60] sm:$0xff]
          %v448 = vld [vmem:[%s373 + $0x68] sm:$0xff]
          %v449 = vld [vmem:[%s373 + $0x70] sm:$0xff]
          %v450 = vld [vmem:[%s373 + $0x78] sm:$0xff]
          %451 = vmatprep.subr.mxu0 0.0
          %452 = vmatpush1.msra.mxu0 %v450
          %453 = vmatprep.subr.mxu0 0.0
          %454 = vmatpush1.msra.mxu0 %v449
          %455 = vmatprep.subr.mxu0 0.0
          %456 = vmatpush1.msra.mxu0 %v448
          %457 = vmatprep.subr.mxu0 0.0
          %458 = vmatpush1.msra.mxu0 %v447
          %459 = vmatprep.subr.mxu0 0.0
          %460 = vmatpush1.msra.mxu0 %v446
          %461 = vmatprep.subr.mxu0 0.0
          %462 = vmatpush1.msra.mxu0 %v445
          %463 = vmatprep.subr.mxu0 0.0
          %464 = vmatpush1.msra.mxu0 %v444
          %465 = vmatprep.subr.mxu0 0.0
          %466 = vmatpush1.msra.mxu0 %v443
          %467 = vmatprep.subr.mxu0 0.0
          %468 = vmatpush1.msra.mxu0 %v442
          %469 = vmatprep.subr.mxu0 0.0
          %470 = vmatpush1.msra.mxu0 %v441
          %471 = vmatprep.subr.mxu0 0.0
          %472 = vmatpush1.msra.mxu0 %v440
          %473 = vmatprep.subr.mxu0 0.0
          %474 = vmatpush1.msra.mxu0 %v439
          %475 = vmatprep.subr.mxu0 0.0
          %476 = vmatpush1.msra.mxu0 %v438
          %477 = vmatprep.subr.mxu0 0.0
          %478 = vmatpush1.msra.mxu0 %v437
          %479 = vmatprep.subr.mxu0 0.0
          %480 = vmatpush1.msra.mxu0 %v436
          %481 = vmatprep.subr.mxu0 0.0
          %482 = vmatpush1.msra.mxu0 %v435
          %483 = vmatprep.subr.mxu0 0.0
          %484 = vmatpush2.msra.mxu0 0.0
          %485 = vmatprep.subr.mxu0 0.0
          %486 = vmatpush2.msra.mxu0 0.0
          %487 = vmatprep.subr.mxu0 0.0
          %488 = vmatpush2.msra.mxu0 0.0
          %489 = vmatprep.subr.mxu0 0.0
          %490 = vmatpush2.msra.mxu0 0.0
          %491 = vmatprep.subr.mxu0 0.0
          %492 = vmatpush2.msra.mxu0 0.0
          %493 = vmatprep.subr.mxu0 0.0
          %494 = vmatpush2.msra.mxu0 0.0
          %495 = vmatprep.subr.mxu0 0.0
          %496 = vmatpush2.msra.mxu0 0.0
          %497 = vmatprep.subr.mxu0 0.0
          %498 = vmatpush2.msra.mxu0 0.0
          %499 = vmatprep.subr.mxu0 0.0
          %500 = vmatpush2.msra.mxu0 0.0
          %501 = vmatprep.subr.mxu0 0.0
          %502 = vmatpush2.msra.mxu0 0.0
          %503 = vmatprep.subr.mxu0 0.0
          %504 = vmatpush2.msra.mxu0 0.0
          %505 = vmatprep.subr.mxu0 0.0
          %506 = vmatpush2.msra.mxu0 0.0
          %507 = vmatprep.subr.mxu0 0.0
          %508 = vmatpush2.msra.mxu0 0.0
          %509 = vmatprep.subr.mxu0 0.0
          %510 = vmatpush2.msra.mxu0 0.0
          %511 = vmatprep.subr.mxu0 0.0
          %512 = vmatpush2.msra.mxu0 0.0
          %513 = vmatprep.subr.mxu0 0.0
          %514 = vmatpush2.msra.mxu0 0.0
          %515 = vmatprep.mubr.f32.mxu0 0.0
          %516 = vmatmul.mubr.f32.gmra.mxu0 %v434
          %v517 = vpop.f32.mrf.mxu0
          %v518 = vadd.f32 0.0, %v517
          %v519 = vpop.f32.mrf.mxu0
          %520 = vdwg.mxu0
          %v521 = vadd.f32 %v433, %v518
          %vm522 = vcmask 408576
          %523 = vst.msk [vmem:[#allocation2] sm:$0xff] %vm522, %v521
          %s524 = smul.u32 1, 8
          %s525 = smul.u32 %s524, 1
          %s526 = sshll.u32 %s525, 4
          %527 = dma.done [#allocation4], %s526
        $region78: #{tpu_custom_call.1} parent=69 // pred_fallthru
          _
        %p528 = scmp.eq.s32.totalorder %s24, 1
        %p529 = scmp.eq.s32.totalorder %s25, 0
        %p530 = pnand %p528, %p529
        %p531 = pneg %p530
        // Predicated region
        $region117: #{tpu_custom_call.1} parent=69 // pred_check
          _
        $region118: #{tpu_custom_call.1} parent=69 // pred_check_branch
          %533 = sbr.rel (%p530) target = $region120
        $region119: #{tpu_custom_call.1} parent=69 // pred_region
          %v534 = vld [vmem:[#allocation2] sm:$0xff]
          %v535 = vld [vmem:[%s2] sm:$0x3]
          %vm536 = vcmask 64512
          %v538 = vsel %vm536, %v535, 0
          %540 = vmatprep.subr.mxu0 0.0
          %541 = vmatpush1.msra.mxu0 0.0
          %542 = vmatprep.subr.mxu0 0.0
          %543 = vmatpush1.msra.mxu0 0.0
          %544 = vmatprep.subr.mxu0 0.0
          %545 = vmatpush1.msra.mxu0 0.0
          %546 = vmatprep.subr.mxu0 0.0
          %547 = vmatpush1.msra.mxu0 0.0
          %548 = vmatprep.subr.mxu0 0.0
          %549 = vmatpush1.msra.mxu0 0.0
          %550 = vmatprep.subr.mxu0 0.0
          %551 = vmatpush1.msra.mxu0 0.0
          %552 = vmatprep.subr.mxu0 0.0
          %553 = vmatpush1.msra.mxu0 0.0
          %554 = vmatprep.subr.mxu0 0.0
          %555 = vmatpush1.msra.mxu0 0.0
          %556 = vmatprep.subr.mxu0 0.0
          %557 = vmatpush1.msra.mxu0 0.0
          %558 = vmatprep.subr.mxu0 0.0
          %559 = vmatpush1.msra.mxu0 0.0
          %560 = vmatprep.subr.mxu0 0.0
          %561 = vmatpush1.msra.mxu0 0.0
          %562 = vmatprep.subr.mxu0 0.0
          %563 = vmatpush1.msra.mxu0 0.0
          %564 = vmatprep.subr.mxu0 0.0
          %565 = vmatpush1.msra.mxu0 0.0
          %566 = vmatprep.subr.mxu0 0.0
          %567 = vmatpush1.msra.mxu0 0.0
          %568 = vmatprep.subr.mxu0 0.0
          %569 = vmatpush1.msra.mxu0 0.0
          %570 = vmatprep.subr.mxu0 0.0
          %571 = vmatpush1.msra.mxu0 %v534
          %572 = vmatprep.subr.mxu0 0.0
          %573 = vmatpush2.msra.mxu0 0.0
          %574 = vmatprep.subr.mxu0 0.0
          %575 = vmatpush2.msra.mxu0 0.0
          %576 = vmatprep.subr.mxu0 0.0
          %577 = vmatpush2.msra.mxu0 0.0
          %578 = vmatprep.subr.mxu0 0.0
          %579 = vmatpush2.msra.mxu0 0.0
          %580 = vmatprep.subr.mxu0 0.0
          %581 = vmatpush2.msra.mxu0 0.0
          %582 = vmatprep.subr.mxu0 0.0
          %583 = vmatpush2.msra.mxu0 0.0
          %584 = vmatprep.subr.mxu0 0.0
          %585 = vmatpush2.msra.mxu0 0.0
          %586 = vmatprep.subr.mxu0 0.0
          %587 = vmatpush2.msra.mxu0 0.0
          %588 = vmatprep.subr.mxu0 0.0
          %589 = vmatpush2.msra.mxu0 0.0
          %590 = vmatprep.subr.mxu0 0.0
          %591 = vmatpush2.msra.mxu0 0.0
          %592 = vmatprep.subr.mxu0 0.0
          %593 = vmatpush2.msra.mxu0 0.0
          %594 = vmatprep.subr.mxu0 0.0
          %595 = vmatpush2.msra.mxu0 0.0
          %596 = vmatprep.subr.mxu0 0.0
          %597 = vmatpush2.msra.mxu0 0.0
          %598 = vmatprep.subr.mxu0 0.0
          %599 = vmatpush2.msra.mxu0 0.0
          %600 = vmatprep.subr.mxu0 0.0
          %601 = vmatpush2.msra.mxu0 0.0
          %602 = vmatprep.subr.mxu0 0.0
          %603 = vmatpush2.msra.mxu0 0.0
          %604 = vmatprep.mubr.f32.mxu0 0.0
          %605 = vmatmul.mubr.f32.gmra.mxu0 %v538
          %v606 = vpop.f32.mrf.mxu0
          %v607 = vadd.f32 0.0, %v606
          %v608 = vpop.f32.mrf.mxu0
          %609 = vdwg.mxu0
          %vm610 = vcmask 7168
          %v611 = vsel %vm610, %v607, 0.0
          %v612 = vld [vmem:[%s2 + $0x2] sm:$0x3]
          %614 = vrot.lane.b32.xlu0 %v534, 127
          %v615 = vpop.permute.xlu0 %614
          %v618 = vsel %vm536, %v612, 0
          %620 = vmatprep.subr.mxu0 0.0
          %621 = vmatpush1.msra.mxu0 0.0
          %622 = vmatprep.subr.mxu0 0.0
          %623 = vmatpush1.msra.mxu0 0.0
          %624 = vmatprep.subr.mxu0 0.0
          %625 = vmatpush1.msra.mxu0 0.0
          %626 = vmatprep.subr.mxu0 0.0
          %627 = vmatpush1.msra.mxu0 0.0
          %628 = vmatprep.subr.mxu0 0.0
          %629 = vmatpush1.msra.mxu0 0.0
          %630 = vmatprep.subr.mxu0 0.0
          %631 = vmatpush1.msra.mxu0 0.0
          %632 = vmatprep.subr.mxu0 0.0
          %633 = vmatpush1.msra.mxu0 0.0
          %634 = vmatprep.subr.mxu0 0.0
          %635 = vmatpush1.msra.mxu0 0.0
          %636 = vmatprep.subr.mxu0 0.0
          %637 = vmatpush1.msra.mxu0 0.0
          %638 = vmatprep.subr.mxu0 0.0
          %639 = vmatpush1.msra.mxu0 0.0
          %640 = vmatprep.subr.mxu0 0.0
          %641 = vmatpush1.msra.mxu0 0.0
          %642 = vmatprep.subr.mxu0 0.0
          %643 = vmatpush1.msra.mxu0 0.0
          %644 = vmatprep.subr.mxu0 0.0
          %645 = vmatpush1.msra.mxu0 0.0
          %646 = vmatprep.subr.mxu0 0.0
          %647 = vmatpush1.msra.mxu0 0.0
          %648 = vmatprep.subr.mxu0 0.0
          %649 = vmatpush1.msra.mxu0 0.0
          %650 = vmatprep.subr.mxu0 0.0
          %651 = vmatpush1.msra.mxu0 %v615
          %652 = vmatprep.subr.mxu0 0.0
          %653 = vmatpush2.msra.mxu0 0.0
          %654 = vmatprep.subr.mxu0 0.0
          %655 = vmatpush2.msra.mxu0 0.0
          %656 = vmatprep.subr.mxu0 0.0
          %657 = vmatpush2.msra.mxu0 0.0
          %658 = vmatprep.subr.mxu0 0.0
          %659 = vmatpush2.msra.mxu0 0.0
          %660 = vmatprep.subr.mxu0 0.0
          %661 = vmatpush2.msra.mxu0 0.0
          %662 = vmatprep.subr.mxu0 0.0
          %663 = vmatpush2.msra.mxu0 0.0
          %664 = vmatprep.subr.mxu0 0.0
          %665 = vmatpush2.msra.mxu0 0.0
          %666 = vmatprep.subr.mxu0 0.0
          %667 = vmatpush2.msra.mxu0 0.0
          %668 = vmatprep.subr.mxu0 0.0
          %669 = vmatpush2.msra.mxu0 0.0
          %670 = vmatprep.subr.mxu0 0.0
          %671 = vmatpush2.msra.mxu0 0.0
          %672 = vmatprep.subr.mxu0 0.0
          %673 = vmatpush2.msra.mxu0 0.0
          %674 = vmatprep.subr.mxu0 0.0
          %675 = vmatpush2.msra.mxu0 0.0
          %676 = vmatprep.subr.mxu0 0.0
          %677 = vmatpush2.msra.mxu0 0.0
          %678 = vmatprep.subr.mxu0 0.0
          %679 = vmatpush2.msra.mxu0 0.0
          %680 = vmatprep.subr.mxu0 0.0
          %681 = vmatpush2.msra.mxu0 0.0
          %682 = vmatprep.subr.mxu0 0.0
          %683 = vmatpush2.msra.mxu0 0.0
          %684 = vmatprep.mubr.f32.mxu0 0.0
          %685 = vmatmul.mubr.f32.gmra.mxu0 %v618
          %v686 = vpop.f32.mrf.mxu0
          %v687 = vadd.f32 0.0, %v686
          %v688 = vpop.f32.mrf.mxu0
          %689 = vdwg.mxu0
          %691 = vrot.lane.b32.xlu0 %v687, 1
          %v692 = vpop.permute.xlu0 %691
          %v694 = vsel %vm610, 0.0, %v692
          %vm695 = vcmask 39936
          %v696 = vsel %vm695, %v694, 0.0
          %v697 = vld [vmem:[%s2 + $0x4] sm:$0x3]
          %698 = vrot.lane.b32.xlu0 %v534, 123
          %v699 = vpop.permute.xlu0 %698
          %v702 = vsel %vm536, %v697, 0
          %704 = vmatprep.subr.mxu0 0.0
          %705 = vmatpush1.msra.mxu0 0.0
          %706 = vmatprep.subr.mxu0 0.0
          %707 = vmatpush1.msra.mxu0 0.0
          %708 = vmatprep.subr.mxu0 0.0
          %709 = vmatpush1.msra.mxu0 0.0
          %710 = vmatprep.subr.mxu0 0.0
          %711 = vmatpush1.msra.mxu0 0.0
          %712 = vmatprep.subr.mxu0 0.0
          %713 = vmatpush1.msra.mxu0 0.0
          %714 = vmatprep.subr.mxu0 0.0
          %715 = vmatpush1.msra.mxu0 0.0
          %716 = vmatprep.subr.mxu0 0.0
          %717 = vmatpush1.msra.mxu0 0.0
          %718 = vmatprep.subr.mxu0 0.0
          %719 = vmatpush1.msra.mxu0 0.0
          %720 = vmatprep.subr.mxu0 0.0
          %721 = vmatpush1.msra.mxu0 0.0
          %722 = vmatprep.subr.mxu0 0.0
          %723 = vmatpush1.msra.mxu0 0.0
          %724 = vmatprep.subr.mxu0 0.0
          %725 = vmatpush1.msra.mxu0 0.0
          %726 = vmatprep.subr.mxu0 0.0
          %727 = vmatpush1.msra.mxu0 0.0
          %728 = vmatprep.subr.mxu0 0.0
          %729 = vmatpush1.msra.mxu0 0.0
          %730 = vmatprep.subr.mxu0 0.0
          %731 = vmatpush1.msra.mxu0 0.0
          %732 = vmatprep.subr.mxu0 0.0
          %733 = vmatpush1.msra.mxu0 0.0
          %734 = vmatprep.subr.mxu0 0.0
          %735 = vmatpush1.msra.mxu0 %v699
          %736 = vmatprep.subr.mxu0 0.0
          %737 = vmatpush2.msra.mxu0 0.0
          %738 = vmatprep.subr.mxu0 0.0
          %739 = vmatpush2.msra.mxu0 0.0
          %740 = vmatprep.subr.mxu0 0.0
          %741 = vmatpush2.msra.mxu0 0.0
          %742 = vmatprep.subr.mxu0 0.0
          %743 = vmatpush2.msra.mxu0 0.0
          %744 = vmatprep.subr.mxu0 0.0
          %745 = vmatpush2.msra.mxu0 0.0
          %746 = vmatprep.subr.mxu0 0.0
          %747 = vmatpush2.msra.mxu0 0.0
          %748 = vmatprep.subr.mxu0 0.0
          %749 = vmatpush2.msra.mxu0 0.0
          %750 = vmatprep.subr.mxu0 0.0
          %751 = vmatpush2.msra.mxu0 0.0
          %752 = vmatprep.subr.mxu0 0.0
          %753 = vmatpush2.msra.mxu0 0.0
          %754 = vmatprep.subr.mxu0 0.0
          %755 = vmatpush2.msra.mxu0 0.0
          %756 = vmatprep.subr.mxu0 0.0
          %757 = vmatpush2.msra.mxu0 0.0
          %758 = vmatprep.subr.mxu0 0.0
          %759 = vmatpush2.msra.mxu0 0.0
          %760 = vmatprep.subr.mxu0 0.0
          %761 = vmatpush2.msra.mxu0 0.0
          %762 = vmatprep.subr.mxu0 0.0
          %763 = vmatpush2.msra.mxu0 0.0
          %764 = vmatprep.subr.mxu0 0.0
          %765 = vmatpush2.msra.mxu0 0.0
          %766 = vmatprep.subr.mxu0 0.0
          %767 = vmatpush2.msra.mxu0 0.0
          %768 = vmatprep.mubr.f32.mxu0 0.0
          %769 = vmatmul.mubr.f32.gmra.mxu0 %v702
          %v770 = vpop.f32.mrf.mxu0
          %v771 = vadd.f32 0.0, %v770
          %v772 = vpop.f32.mrf.mxu0
          %773 = vdwg.mxu0
          %775 = vrot.lane.b32.xlu0 %v771, 5
          %v776 = vpop.permute.xlu0 %775
          %v778 = vsel %vm695, 0.0, %v776
          %vm779 = vcmask 113664
          %v780 = vsel %vm779, %v778, 0.0
          %v781 = vld [vmem:[%s2 + $0x6] sm:$0x3]
          %782 = vrot.lane.b32.xlu0 %v534, 114
          %v783 = vpop.permute.xlu0 %782
          %v786 = vsel %vm536, %v781, 0
          %788 = vmatprep.subr.mxu0 0.0
          %789 = vmatpush1.msra.mxu0 0.0
          %790 = vmatprep.subr.mxu0 0.0
          %791 = vmatpush1.msra.mxu0 0.0
          %792 = vmatprep.subr.mxu0 0.0
          %793 = vmatpush1.msra.mxu0 0.0
          %794 = vmatprep.subr.mxu0 0.0
          %795 = vmatpush1.msra.mxu0 0.0
          %796 = vmatprep.subr.mxu0 0.0
          %797 = vmatpush1.msra.mxu0 0.0
          %798 = vmatprep.subr.mxu0 0.0
          %799 = vmatpush1.msra.mxu0 0.0
          %800 = vmatprep.subr.mxu0 0.0
          %801 = vmatpush1.msra.mxu0 0.0
          %802 = vmatprep.subr.mxu0 0.0
          %803 = vmatpush1.msra.mxu0 0.0
          %804 = vmatprep.subr.mxu0 0.0
          %805 = vmatpush1.msra.mxu0 0.0
          %806 = vmatprep.subr.mxu0 0.0
          %807 = vmatpush1.msra.mxu0 0.0
          %808 = vmatprep.subr.mxu0 0.0
          %809 = vmatpush1.msra.mxu0 0.0
          %810 = vmatprep.subr.mxu0 0.0
          %811 = vmatpush1.msra.mxu0 0.0
          %812 = vmatprep.subr.mxu0 0.0
          %813 = vmatpush1.msra.mxu0 0.0
          %814 = vmatprep.subr.mxu0 0.0
          %815 = vmatpush1.msra.mxu0 0.0
          %816 = vmatprep.subr.mxu0 0.0
          %817 = vmatpush1.msra.mxu0 0.0
          %818 = vmatprep.subr.mxu0 0.0
          %819 = vmatpush1.msra.mxu0 %v783
          %820 = vmatprep.subr.mxu0 0.0
          %821 = vmatpush2.msra.mxu0 0.0
          %822 = vmatprep.subr.mxu0 0.0
          %823 = vmatpush2.msra.mxu0 0.0
          %824 = vmatprep.subr.mxu0 0.0
          %825 = vmatpush2.msra.mxu0 0.0
          %826 = vmatprep.subr.mxu0 0.0
          %827 = vmatpush2.msra.mxu0 0.0
          %828 = vmatprep.subr.mxu0 0.0
          %829 = vmatpush2.msra.mxu0 0.0
          %830 = vmatprep.subr.mxu0 0.0
          %831 = vmatpush2.msra.mxu0 0.0
          %832 = vmatprep.subr.mxu0 0.0
          %833 = vmatpush2.msra.mxu0 0.0
          %834 = vmatprep.subr.mxu0 0.0
          %835 = vmatpush2.msra.mxu0 0.0
          %836 = vmatprep.subr.mxu0 0.0
          %837 = vmatpush2.msra.mxu0 0.0
          %838 = vmatprep.subr.mxu0 0.0
          %839 = vmatpush2.msra.mxu0 0.0
          %840 = vmatprep.subr.mxu0 0.0
          %841 = vmatpush2.msra.mxu0 0.0
          %842 = vmatprep.subr.mxu0 0.0
          %843 = vmatpush2.msra.mxu0 0.0
          %844 = vmatprep.subr.mxu0 0.0
          %845 = vmatpush2.msra.mxu0 0.0
          %846 = vmatprep.subr.mxu0 0.0
          %847 = vmatpush2.msra.mxu0 0.0
          %848 = vmatprep.subr.mxu0 0.0
          %849 = vmatpush2.msra.mxu0 0.0
          %850 = vmatprep.subr.mxu0 0.0
          %851 = vmatpush2.msra.mxu0 0.0
          %852 = vmatprep.mubr.f32.mxu0 0.0
          %853 = vmatmul.mubr.f32.gmra.mxu0 %v786
          %v854 = vpop.f32.mrf.mxu0
          %v855 = vadd.f32 0.0, %v854
          %v856 = vpop.f32.mrf.mxu0
          %857 = vdwg.mxu0
          %859 = vrot.lane.b32.xlu0 %v855, 14
          %v860 = vpop.permute.xlu0 %859
          %v862 = vsel %vm779, 0.0, %v860
          %v864 = vrot.slane %v696, 6
          %v867 = vrot.slane %v780, 4
          %v870 = vrot.slane %v862, 2
          %vm872 = vcmask 1041408
          %v873 = vsel %vm872, %v611, %v864
          %vm874 = vcmask 1043456
          %v875 = vsel %vm874, %v873, %v867
          %vm876 = vcmask 1045504
          %v877 = vsel %vm876, %v875, %v870
          %vm878 = vcmask 408576
          %879 = vst.msk [vmem:[#allocation3] sm:$0xff] %vm878, %v877
        $region120: #{tpu_custom_call.1} parent=69 // pred_fallthru
          _
        // Predicated region
        $region121: #{tpu_custom_call.1} parent=69 // pred_check
          %p880 = pneg %p528
        $region122: #{tpu_custom_call.1} parent=69 // pred_check_branch
          %882 = sbr.rel (%p880) target = $region124
        $region123: #{tpu_custom_call.1} parent=69 // pred_region
          %v883 = vld [vmem:[#allocation3] sm:$0xff]
          %v884 = vld [vmem:[%s310] sm:$0xff]
          %v885 = vld [vmem:[%s310 + $0x8] sm:$0xff]
          %v886 = vld [vmem:[%s310 + $0x10] sm:$0xff]
          %v887 = vld [vmem:[%s310 + $0x18] sm:$0xff]
          %v888 = vld [vmem:[%s310 + $0x20] sm:$0xff]
          %v889 = vld [vmem:[%s310 + $0x28] sm:$0xff]
          %v890 = vld [vmem:[%s310 + $0x30] sm:$0x3]
          %vm891 = vcmask 408576
          %v893 = vsel %vm891, %v883, 0
          %vm895 = vcmask 1041408
          %v897 = vsel %vm895, %v890, 0
          %899 = vmatprep.subr.mxu0 0.0
          %900 = vmatpush1.msra.mxu0 0.0
          %901 = vmatprep.subr.mxu0 0.0
          %902 = vmatpush1.msra.mxu0 0.0
          %903 = vmatprep.subr.mxu0 0.0
          %904 = vmatpush1.msra.mxu0 0.0
          %905 = vmatprep.subr.mxu0 0.0
          %906 = vmatpush1.msra.mxu0 0.0
          %907 = vmatprep.subr.mxu0 0.0
          %908 = vmatpush1.msra.mxu0 0.0
          %909 = vmatprep.subr.mxu0 0.0
          %910 = vmatpush1.msra.mxu0 0.0
          %911 = vmatprep.subr.mxu0 0.0
          %912 = vmatpush1.msra.mxu0 0.0
          %913 = vmatprep.subr.mxu0 0.0
          %914 = vmatpush1.msra.mxu0 0.0
          %915 = vmatprep.subr.mxu0 0.0
          %916 = vmatpush1.msra.mxu0 0.0
          %917 = vmatprep.subr.mxu0 0.0
          %918 = vmatpush1.msra.mxu0 %v897
          %919 = vmatprep.subr.mxu0 0.0
          %920 = vmatpush1.msra.mxu0 %v889
          %921 = vmatprep.subr.mxu0 0.0
          %922 = vmatpush1.msra.mxu0 %v888
          %923 = vmatprep.subr.mxu0 0.0
          %924 = vmatpush1.msra.mxu0 %v887
          %925 = vmatprep.subr.mxu0 0.0
          %926 = vmatpush1.msra.mxu0 %v886
          %927 = vmatprep.subr.mxu0 0.0
          %928 = vmatpush1.msra.mxu0 %v885
          %929 = vmatprep.subr.mxu0 0.0
          %930 = vmatpush1.msra.mxu0 %v884
          %931 = vmatprep.subr.mxu0 0.0
          %932 = vmatpush2.msra.mxu0 0.0
          %933 = vmatprep.subr.mxu0 0.0
          %934 = vmatpush2.msra.mxu0 0.0
          %935 = vmatprep.subr.mxu0 0.0
          %936 = vmatpush2.msra.mxu0 0.0
          %937 = vmatprep.subr.mxu0 0.0
          %938 = vmatpush2.msra.mxu0 0.0
          %939 = vmatprep.subr.mxu0 0.0
          %940 = vmatpush2.msra.mxu0 0.0
          %941 = vmatprep.subr.mxu0 0.0
          %942 = vmatpush2.msra.mxu0 0.0
          %943 = vmatprep.subr.mxu0 0.0
          %944 = vmatpush2.msra.mxu0 0.0
          %945 = vmatprep.subr.mxu0 0.0
          %946 = vmatpush2.msra.mxu0 0.0
          %947 = vmatprep.subr.mxu0 0.0
          %948 = vmatpush2.msra.mxu0 0.0
          %949 = vmatprep.subr.mxu0 0.0
          %950 = vmatpush2.msra.mxu0 0.0
          %951 = vmatprep.subr.mxu0 0.0
          %952 = vmatpush2.msra.mxu0 0.0
          %953 = vmatprep.subr.mxu0 0.0
          %954 = vmatpush2.msra.mxu0 0.0
          %955 = vmatprep.subr.mxu0 0.0
          %956 = vmatpush2.msra.mxu0 0.0
          %957 = vmatprep.subr.mxu0 0.0
          %958 = vmatpush2.msra.mxu0 0.0
          %959 = vmatprep.subr.mxu0 0.0
          %960 = vmatpush2.msra.mxu0 0.0
          %961 = vmatprep.subr.mxu0 0.0
          %962 = vmatpush2.msra.mxu0 0.0
          %963 = vmatprep.mubr.f32.mxu0 0.0
          %964 = vmatmul.mubr.f32.gmra.mxu0 %v893
          %v965 = vpop.f32.mrf.mxu0
          %v966 = vadd.f32 0.0, %v965
          %v967 = vpop.f32.mrf.mxu0
          %968 = vdwg.mxu0
          %969 = vst [vmem:[%s351] sm:$0xff] %v966
        $region124: #{tpu_custom_call.1} parent=69 // pred_fallthru
          _
        %s970 = sand.u32 %s166, 1
        %s971 = scalar_lea.sflag [#allocation7], %s970
        %s972 = sand.u32 %s166, 1
        %s973 = smul.addr %s972, 8
        %s974 = scalar_lea.vmem [#allocation6], %s973
        // Predicated region
        $region125: #{tpu_custom_call.1} parent=69 // pred_check
          %p975 = pneg %p176
        $region126: #{tpu_custom_call.1} parent=69 // pred_check_branch
          %977 = sbr.rel (%p975) target = $region128
        $region127: #{tpu_custom_call.1} parent=69 // pred_region
          %s978 = ssub.s32 1, %s24
          %s980 = ssub.s32 128, 128
          %981 = vsyncadd %s971, %s980
          %s982 = smul.addr %s978, 2
          %s983 = sadd.s32 %s25, %s982
          %s984 = smul.addr %s23, 4
          %s985 = sadd.s32 %s983, %s984
          %s986 = smul.addr %s985, 128
          %s987 = scalar_lea.hbm %s4, %s986
          %s989 = sshll.u32 %s974, 4
          %s990 = int_to_ptr.vmem [resolvable:$true] %s989
          %992 = dma.vmem_to_hbm [thread:$0]  %s990, 128, %s987, %s971
        $region128: #{tpu_custom_call.1} parent=69 // pred_fallthru
          _
      $region70: #{tpu_custom_call.1} parent=5 // pred_fallthru
        _
      %p993 = scmp.le.s32.totalorder 2, %s13
      // Predicated region
      $region129: #{tpu_custom_call.1} parent=5 // pred_check
        %p994 = pneg %p993
      $region130: #{tpu_custom_call.1} parent=5 // pred_check_branch
        %996 = sbr.rel (%p994) target = $region132
      $region131: #{tpu_custom_call.1} parent=5 // pred_region
        %s997 = ssub.s32 %s13, 2
        // Predicated region
        $region133: #{tpu_custom_call.1} parent=131 // pred_check
          %p998 = pneg %p182
        $region134: #{tpu_custom_call.1} parent=131 // pred_check_branch
          %1000 = sbr.rel (%p998) target = $region136
        $region135: #{tpu_custom_call.1} parent=131 // pred_region
          %s1001 = sand.u32 %s167, 1
          %s1002 = scalar_lea.sflag [#allocation7], %s1001
          %s1003 = sand.u32 %s167, 1
          %s1004 = smul.addr %s1003, 8
          %s1005 = scalar_lea.vmem [#allocation6], %s1004
          %1006 = dma.done %s1002, 128
        $region136: #{tpu_custom_call.1} parent=131 // pred_fallthru
          _
      $region132: #{tpu_custom_call.1} parent=5 // pred_fallthru
        _
    $region6: #{tpu_custom_call.1} parent=1 // loop_footer
      %s17 = sadd.s32 1, %s13
    $region7: #{tpu_custom_call.1} parent=1 // loop_footer_branch
      %12 = sbr.rel target = $region3
    $region8: #{tpu_custom_call.1} parent=1 // loop_exit
      _
    %1007 = vsyncpa [#allocation7], 1
    %s1008 = scalar_lea.sflag [#allocation7], 1
    %1009 = vsyncpa %s1008, 1
  %1010 = vsyncmov [#allocation4]
  %s1011 = vpop.sfrf %1010
  %p1012 = scmp.eq.s32.totalorder %s1011, 0
  %p1013 = pneg %p1012
  %1015 = shalt.err (%p1013)

// kernel: tpu_custom_call.1
$region0: #{tpu_custom_call.1}
  #allocation0 [shape = 'u32[]', space=smem, size = 0x4, offset = 0x4, fixed_abs, tag = 'smem constant byte address 0x4 - core index']
  #allocation1 [shape = 'u32[144,128]{1,0:T(1,128)}', space=vmem, size = 0x12000, scoped, tag = 'internal scratch']
  #allocation2 [shape = 'f32[8,50]{1,0:T(8,128)}', space=vmem, size = 0x1000, scoped, tag = 'scratch operand']
  #allocation3 [shape = 'f32[8,50]{1,0:T(8,128)}', space=vmem, size = 0x1000, scoped, tag = 'scratch operand']
  #allocation4 [shape = 's32[1]{0}', space=sflag, size = 0x4, scoped, tag = 'scratch operand']
  %s0 = inlined_call_operand.vmem [shape: f32[2,8,256], index: 0, kind: input, shape index: {}]
  %s1 = inlined_call_operand.vmem [shape: f32[256,50], index: 1, kind: input, shape index: {}]
  %s2 = inlined_call_operand.vmem [shape: f32[8,8], index: 2, kind: input, shape index: {}]
  %s3 = inlined_call_operand.vmem [shape: f32[50,256], index: 3, kind: input, shape index: {}]
  %s4 = inlined_call_operand.hbm [shape: f32[2,16,256], index: 4, kind: output, shape index: {}]
  %s5 = sld [smem:[#allocation0]]
  $region103: #{tpu_custom_call.1} parent=0
    _
  %s7 = ssub.s32 1, %s5
  %s8 = scalar_select 0, %s7, %s5
  $region1: #{tpu_custom_call.1} parent=0
    #allocation5 [shape = 'u8[57344]{0}', space=vmem, size = 0xe000, scoped, tag = 'input window, operand 3']
    #allocation6 [shape = 'u8[8192]{0}', space=vmem, size = 0x2000, scoped, tag = 'output window, operand 0']
    #allocation7 [shape = 's32[2]{0}', space=sflag, size = 0x8, scoped, tag = 'scoped memory for tpu_custom_call.1']
    %9 = vsyncpa [#allocation7], 0
    %s10 = scalar_lea.sflag [#allocation7], 1
    %11 = vsyncpa %s10, 0
    loop: start=0, step=1, limit=10
    $region2: #{tpu_custom_call.1} parent=1 // loop_pre_header
      _
    $region3: #{tpu_custom_call.1} parent=1 // loop_header
      %s13 = sphi 0, %s17
      %p14 = scmp.ge.s32.totalorder %s13, 10
      %s20 = sphi 0, %s39
      %s21 = sphi 0, %s35
      %s22 = sphi 0, %s31
      %s23 = sphi 0, %s20
      %s24 = sphi 0, %s21
      %s25 = sphi 0, %s22
      %s26 = sphi 0, %s23
      %s27 = sphi 0, %s24
      %s28 = sphi 0, %s25
      %s50 = sphi 0, %s52
      %s53 = sphi 0, %s50
      %s54 = sphi 0, %s53
      %s70 = sphi 0, %s54
      %s82 = sphi 0, %s84
      %s85 = sphi 0, %s82
      %s86 = sphi 0, %s85
      %s102 = sphi 0, %s86
      %s106 = sphi 0, %s106
      %s108 = sphi 0, %s106
      %s109 = sphi 0, %s108
      %s123 = sphi 0, %s109
      %s131 = sphi 0, %s133
      %s134 = sphi 0, %s131
      %s135 = sphi 0, %s134
      %s151 = sphi 0, %s135
      %s163 = sphi 0, %s165
      %s166 = sphi 0, %s163
      %s167 = sphi 0, %s166
      %s183 = sphi 0, %s167
    $region4: #{tpu_custom_call.1} parent=1 // loop_header_branch
      %16 = sbr.rel (%p14) target = $region8
    $region5: #{tpu_custom_call.1} parent=1 // loop_body
      %s18 = ssub.s32 %s13, 1
      %s19 = ssub.s32 %s13, 2
      %s29 = sadd.s32 1, %s22
      %p30 = scmp.ge.s32.totalorder %s29, 2
      %s31 = scalar_select %p30, 0, %s29
      %s32 = sadd.s32 1, %s21
      %s33 = scalar_select %p30, %s32, %s21
      %p34 = scmp.ge.s32.totalorder %s33, 2
      %s35 = scalar_select %p34, 0, %s33
      %s36 = sadd.s32 1, %s20
      %s37 = scalar_select %p34, %s36, %s20
      %p38 = scmp.ge.s32.totalorder %s37, 2
      %s39 = scalar_select %p38, 0, %s37
      %s40 = ssub.s32 1, %s21
      %s41 = smul.u32 %s40, %s22
      %s42 = sadd.s32 %s41, %s21
      %s43 = ssub.s32 1, %s35
      %s44 = smul.u32 %s43, %s31
      %s45 = sadd.s32 %s44, %s35
      %s46 = ssub.s32 %s20, %s39
      %s47 = ssub.s32 %s42, %s45
      %s48 = sor.u32 %s46, %s47
      %p49 = scmp.eq.s32.totalorder %s48, 0
      %s51 = sadd.s32 %s50, 1
      %s52 = scalar_select %p49, %s50, %s51
      %p55 = pneg %p49
      %p56 = scmp.eq.s32.totalorder %s13, 7
      %p57 = por %p55, %p56
      %p58 = scmp.ne.s32.totalorder %s50, %s53
      %p59 = scmp.eq.s32.totalorder %s13, 0
      %p60 = por %p58, %p59
      %p61 = scmp.ne.s32.totalorder %s50, %s53
      %p62 = scmp.eq.s32.totalorder %s18, 7
      %p63 = por %p61, %p62
      %p64 = scmp.ne.s32.totalorder %s53, %s54
      %p65 = scmp.eq.s32.totalorder %s18, 0
      %p66 = por %p64, %p65
      %p67 = scmp.ne.s32.totalorder %s53, %s54
      %p68 = scmp.eq.s32.totalorder %s19, 7
      %p69 = por %p67, %p68
      %p71 = scmp.ne.s32.totalorder %s54, %s70
      %p72 = scmp.eq.s32.totalorder %s19, 0
      %p73 = por %p71, %p72
      %s74 = ssub.s32 1, %s21
      %s75 = smul.u32 %s74, %s22
      %s76 = sadd.s32 %s75, %s21
      %s77 = ssub.s32 1, %s35
      %s78 = smul.u32 %s77, %s31
      %s79 = sadd.s32 %s78, %s35
      %s80 = ssub.s32 %s76, %s79
      %p81 = scmp.eq.s32.totalorder %s80, 0
      %s83 = sadd.s32 %s82, 1
      %s84 = scalar_select %p81, %s82, %s83
      %p87 = pneg %p81
      %p88 = scmp.eq.s32.totalorder %s13, 7
      %p89 = por %p87, %p88
      %p90 = scmp.ne.s32.totalorder %s82, %s85
      %p91 = scmp.eq.s32.totalorder %s13, 0
      %p92 = por %p90, %p91
      %p93 = scmp.ne.s32.totalorder %s82, %s85
      %p94 = scmp.eq.s32.totalorder %s18, 7
      %p95 = por %p93, %p94
      %p96 = scmp.ne.s32.totalorder %s85, %s86
      %p97 = scmp.eq.s32.totalorder %s18, 0
      %p98 = por %p96, %p97
      %p99 = scmp.ne.s32.totalorder %s85, %s86
      %p100 = scmp.eq.s32.totalorder %s19, 7
      %p101 = por %p99, %p100
      %p103 = scmp.ne.s32.totalorder %s86, %s102
      %p104 = scmp.eq.s32.totalorder %s19, 0
      %p105 = por %p103, %p104
      %s107 = sadd.s32 %s106, 1
      %p110 = scmp.eq.s32.totalorder %s13, 7
      %p111 = scmp.ne.s32.totalorder %s106, %s108
      %p112 = scmp.eq.s32.totalorder %s13, 0
      %p113 = por %p111, %p112
      %p114 = scmp.ne.s32.totalorder %s106, %s108
      %p115 = scmp.eq.s32.totalorder %s18, 7
      %p116 = por %p114, %p115
      %p117 = scmp.ne.s32.totalorder %s108, %s109
      %p118 = scmp.eq.s32.totalorder %s18, 0
      %p119 = por %p117, %p118
      %p120 = scmp.ne.s32.totalorder %s108, %s109
      %p121 = scmp.eq.s32.totalorder %s19, 7
      %p122 = por %p120, %p121
      %p124 = scmp.ne.s32.totalorder %s109, %s123
      %p125 = scmp.eq.s32.totalorder %s19, 0
      %p126 = por %p124, %p125
      %s127 = smul.u32 %s21, %s22
      %s128 = smul.u32 %s35, %s31
      %s129 = ssub.s32 %s127, %s128
      %p130 = scmp.eq.s32.totalorder %s129, 0
      %s132 = sadd.s32 %s131, 1
      %s133 = scalar_select %p130, %s131, %s132
      %p136 = pneg %p130
      %p137 = scmp.eq.s32.totalorder %s13, 7
      %p138 = por %p136, %p137
      %p139 = scmp.ne.s32.totalorder %s131, %s134
      %p140 = scmp.eq.s32.totalorder %s13, 0
      %p141 = por %p139, %p140
      %p142 = scmp.ne.s32.totalorder %s131, %s134
      %p143 = scmp.eq.s32.totalorder %s18, 7
      %p144 = por %p142, %p143
      %p145 = scmp.ne.s32.totalorder %s134, %s135
      %p146 = scmp.eq.s32.totalorder %s18, 0
      %p147 = por %p145, %p146
      %p148 = scmp.ne.s32.totalorder %s134, %s135
      %p149 = scmp.eq.s32.totalorder %s19, 7
      %p150 = por %p148, %p149
      %p152 = scmp.ne.s32.totalorder %s135, %s151
      %p153 = scmp.eq.s32.totalorder %s19, 0
      %p154 = por %p152, %p153
      %s155 = ssub.s32 1, %s21
      %s156 = ssub.s32 1, %s35
      %s157 = ssub.s32 %s20, %s39
      %s158 = ssub.s32 %s155, %s156
      %s159 = sor.u32 %s157, %s158
      %s160 = ssub.s32 %s22, %s31
      %s161 = sor.u32 %s159, %s160
      %p162 = scmp.eq.s32.totalorder %s161, 0
      %s164 = sadd.s32 %s163, 1
      %s165 = scalar_select %p162, %s163, %s164
      %p168 = pneg %p162
      %p169 = scmp.eq.s32.totalorder %s13, 7
      %p170 = por %p168, %p169
      %p171 = scmp.ne.s32.totalorder %s163, %s166
      %p172 = scmp.eq.s32.totalorder %s13, 0
      %p173 = por %p171, %p172
      %p174 = scmp.ne.s32.totalorder %s163, %s166
      %p175 = scmp.eq.s32.totalorder %s18, 7
      %p176 = por %p174, %p175
      %p177 = scmp.ne.s32.totalorder %s166, %s167
      %p178 = scmp.eq.s32.totalorder %s18, 0
      %p179 = por %p177, %p178
      %p180 = scmp.ne.s32.totalorder %s166, %s167
      %p181 = scmp.eq.s32.totalorder %s19, 7
      %p182 = por %p180, %p181
      %p184 = scmp.ne.s32.totalorder %s167, %s183
      %p185 = scmp.eq.s32.totalorder %s19, 0
      %p186 = por %p184, %p185
      %p187 = scmp.le.s32.totalorder 1, %s13
      %p188 = scmp.lt.s32.totalorder %s13, 9
      %p189 = pnand %p187, %p188
      %p190 = pneg %p189
      // Predicated region
      $region9: #{tpu_custom_call.1} parent=5 // pred_check
        _
      $region10: #{tpu_custom_call.1} parent=5 // pred_check_branch
        %192 = sbr.rel (%p189) target = $region12
      $region11: #{tpu_custom_call.1} parent=5 // pred_region
        %s193 = ssub.s32 %s13, 1
        // Predicated region
        $region13: #{tpu_custom_call.1} parent=11 // pred_check
          %p194 = pneg %p119
        $region14: #{tpu_custom_call.1} parent=11 // pred_check_branch
          %196 = sbr.rel (%p194) target = $region16
        $region15: #{tpu_custom_call.1} parent=11 // pred_region
          _
        $region16: #{tpu_custom_call.1} parent=11 // pred_fallthru
          _
      $region12: #{tpu_custom_call.1} parent=5 // pred_fallthru
        _
      %p197 = scmp.lt.s32.totalorder %s13, 8
      // Predicated region
      $region17: #{tpu_custom_call.1} parent=5 // pred_check
        %p198 = pneg %p197
      $region18: #{tpu_custom_call.1} parent=5 // pred_check_branch
        %200 = sbr.rel (%p198) target = $region20
      $region19: #{tpu_custom_call.1} parent=5 // pred_region
        // Predicated region
        $region21: #{tpu_custom_call.1} parent=19 // pred_check
          %p201 = pneg %p60
        $region22: #{tpu_custom_call.1} parent=19 // pred_check_branch
          %203 = sbr.rel (%p201) target = $region24
        $region23: #{tpu_custom_call.1} parent=19 // pred_region
          %s204 = ssub.s32 1, %s21
          %s205 = smul.u32 %s204, %s22
          %s206 = sadd.s32 %s205, %s21
          %p207 = scmp.lt.s32.totalorder %s20, 1
          %s208 = scalar_select %p207, %s20, 1
          %p209 = scmp.lt.s32.totalorder %s206, 1
          %s210 = scalar_select %p209, %s206, 1
          %s211 = smul.addr %s208, 2
          %s212 = sadd.s32 %s210, %s211
          %s213 = smul.addr %s212, 8
          %s214 = scalar_lea.vmem %s0, %s213
          %s215 = ssub.s32 1, %s21
          %s216 = smul.u32 %s215, %s22
          %s217 = sadd.s32 %s216, %s21
        $region24: #{tpu_custom_call.1} parent=19 // pred_fallthru
          _
        // Predicated region
        $region25: #{tpu_custom_call.1} parent=19 // pred_check
          %p218 = pneg %p92
        $region26: #{tpu_custom_call.1} parent=19 // pred_check_branch
          %220 = sbr.rel (%p218) target = $region28
        $region27: #{tpu_custom_call.1} parent=19 // pred_region
          %s221 = ssub.s32 1, %s21
          %s222 = smul.u32 %s221, %s22
          %s223 = sadd.s32 %s222, %s21
          %s224 = smul.u32 16, %s223
          %p225 = scmp.lt.s32.totalorder %s224, 31
          %s226 = scalar_select %p225, %s224, 31
          %s227 = smul.addr %s226, 8
          %s228 = scalar_lea.vmem %s1, %s227
          %s229 = ssub.s32 1, %s21
          %s230 = smul.u32 %s229, %s22
          %s231 = sadd.s32 %s230, %s21
          %s232 = smul.u32 16, %s231
        $region28: #{tpu_custom_call.1} parent=19 // pred_fallthru
          _
        // Predicated region
        $region29: #{tpu_custom_call.1} parent=19 // pred_check
          %p233 = pneg %p141
        $region30: #{tpu_custom_call.1} parent=19 // pred_check_branch
          %235 = sbr.rel (%p233) target = $region32
        $region31: #{tpu_custom_call.1} parent=19 // pred_region
          %s236 = sand.u32 %s131, 1
          %s237 = sand.u32 %s131, 1
          %s238 = smul.addr %s237, 56
          %s239 = scalar_lea.vmem [#allocation5], %s238
          %s240 = smul.u32 %s21, %s22
          %s241 = smul.addr %s240, 8
          %s242 = scalar_lea.vmem %s3, %s241
          // Predicated region
          $region33: #{tpu_custom_call.1} parent=31 // pred_check
            _
          $region34: #{tpu_custom_call.1} parent=31 // pred_check_branch
            %244 = sbr.rel (0) target = $region36
          $region35: #{tpu_custom_call.1} parent=31 // pred_region
            // Predicated region
            $region37: #{tpu_custom_call.1} parent=35 // pred_check
              _
            $region38: #{tpu_custom_call.1} parent=35 // pred_check_branch
              %246 = sbr.rel (0) target = $region40
            $region39: #{tpu_custom_call.1} parent=35 // pred_region
              // Predicated region
              $region52: #{tpu_custom_call.1} parent=39 // pred_check
                _
              $region53: #{tpu_custom_call.1} parent=39 // pred_check_branch
                %274 = sbr.rel (0) target = $region55
              $region54: #{tpu_custom_call.1} parent=39 // pred_region
                loop: start=0, step=1, limit=1
                $region56: #{tpu_custom_call.1} parent=54 // loop_pre_header
                  _
                $region57: #{tpu_custom_call.1} parent=54 // loop_header
                  %s276 = sphi 0, %s280
                  %p277 = scmp.ge.s32.totalorder %s276, 1
                  %s281 = sphi %s242, %s242
                  %s282 = sphi %s239, %s239
                $region58: #{tpu_custom_call.1} parent=54 // loop_header_branch
                  %279 = sbr.rel (%p277) target = $region62
                $region59: #{tpu_custom_call.1} parent=54 // loop_body
                  %v283 = vld [vmem:[%s281] sm:$0xff]
                  %284 = vst [vmem:[%s282] sm:$0xff] %v283
                  %v285 = vld [vmem:[%s281 + $0x10] sm:$0xff]
                  %286 = vst [vmem:[%s282 + $0x8] sm:$0xff] %v285
                  %v287 = vld [vmem:[%s281 + $0x20] sm:$0xff]
                  %288 = vst [vmem:[%s282 + $0x10] sm:$0xff] %v287
                  %v289 = vld [vmem:[%s281 + $0x30] sm:$0xff]
                  %290 = vst [vmem:[%s282 + $0x18] sm:$0xff] %v289
                  %v291 = vld [vmem:[%s281 + $0x40] sm:$0xff]
                  %292 = vst [vmem:[%s282 + $0x20] sm:$0xff] %v291
                  %v293 = vld [vmem:[%s281 + $0x50] sm:$0xff]
                  %294 = vst [vmem:[%s282 + $0x28] sm:$0xff] %v293
                  %v295 = vld [vmem:[%s281 + $0x60] sm:$0xff]
                  %296 = vst [vmem:[%s282 + $0x30] sm:$0xff] %v295
                $region60: #{tpu_custom_call.1} parent=54 // loop_footer
                  %s280 = sadd.s32 1, %s276
                $region61: #{tpu_custom_call.1} parent=54 // loop_footer_branch
                  %275 = sbr.rel target = $region57
                $region62: #{tpu_custom_call.1} parent=54 // loop_exit
                  _
              $region55: #{tpu_custom_call.1} parent=39 // pred_fallthru
                _
              // Predicated region
              $region63: #{tpu_custom_call.1} parent=39 // pred_check
                _
              $region64: #{tpu_custom_call.1} parent=39 // pred_check_branch
                %298 = sbr.rel target = $region66
              $region65: #{tpu_custom_call.1} parent=39 // pred_region
                _
              $region66: #{tpu_custom_call.1} parent=39 // pred_fallthru
                _
            $region40: #{tpu_custom_call.1} parent=35 // pred_fallthru
              _
            // Predicated region
            $region41: #{tpu_custom_call.1} parent=35 // pred_check
              _
            $region42: #{tpu_custom_call.1} parent=35 // pred_check_branch
              %248 = sbr.rel target = $region44
            $region43: #{tpu_custom_call.1} parent=35 // pred_region
              %s250 = ssub.s32 256, 1
              loop: start=0, step=1, limit=1
              $region45: #{tpu_custom_call.1} parent=43 // loop_pre_header
                _
              $region46: #{tpu_custom_call.1} parent=43 // loop_header
                %s252 = sphi 0, %s256
                %p253 = scmp.ge.s32.totalorder %s252, 1
                %s257 = sphi %s242, %s242
                %s258 = sphi %s239, %s239
              $region47: #{tpu_custom_call.1} parent=43 // loop_header_branch
                %255 = sbr.rel (%p253) target = $region51
              $region48: #{tpu_custom_call.1} parent=43 // loop_body
                %v259 = vld [vmem:[%s257] sm:%s250]
                %260 = vst [vmem:[%s258] sm:%s250] %v259
                %v261 = vld [vmem:[%s257 + $0x10] sm:%s250]
                %262 = vst [vmem:[%s258 + $0x8] sm:%s250] %v261
                %v263 = vld [vmem:[%s257 + $0x20] sm:%s250]
                %264 = vst [vmem:[%s258 + $0x10] sm:%s250] %v263
                %v265 = vld [vmem:[%s257 + $0x30] sm:%s250]
                %266 = vst [vmem:[%s258 + $0x18] sm:%s250] %v265
                %v267 = vld [vmem:[%s257 + $0x40] sm:%s250]
                %268 = vst [vmem:[%s258 + $0x20] sm:%s250] %v267
                %v269 = vld [vmem:[%s257 + $0x50] sm:%s250]
                %270 = vst [vmem:[%s258 + $0x28] sm:%s250] %v269
                %v271 = vld [vmem:[%s257 + $0x60] sm:%s250]
                %272 = vst [vmem:[%s258 + $0x30] sm:%s250] %v271
              $region49: #{tpu_custom_call.1} parent=43 // loop_footer
                %s256 = sadd.s32 1, %s252
              $region50: #{tpu_custom_call.1} parent=43 // loop_footer_branch
                %251 = sbr.rel target = $region46
              $region51: #{tpu_custom_call.1} parent=43 // loop_exit
                _
            $region44: #{tpu_custom_call.1} parent=35 // pred_fallthru
              _
          $region36: #{tpu_custom_call.1} parent=31 // pred_fallthru
            _
          %299 = vnop
        $region32: #{tpu_custom_call.1} parent=19 // pred_fallthru
          _
      $region20: #{tpu_custom_call.1} parent=5 // pred_fallthru
        _
      %p300 = scmp.le.s32.totalorder 1, %s13
      %p301 = scmp.lt.s32.totalorder %s13, 9
      %p302 = pnand %p300, %p301
      %p303 = pneg %p302
      // Predicated region
      $region67: #{tpu_custom_call.1} parent=5 // pred_check
        _
      $region68: #{tpu_custom_call.1} parent=5 // pred_check_branch
        %305 = sbr.rel (%p302) target = $region70
      $region69: #{tpu_custom_call.1} parent=5 // pred_region
        %s306 = ssub.s32 %s13, 1
        %s307 = sand.u32 %s134, 1
        %s308 = sand.u32 %s134, 1
        %s309 = smul.addr %s308, 56
        %s310 = scalar_lea.vmem [#allocation5], %s309
        // Predicated region
        $region71: #{tpu_custom_call.1} parent=69 // pred_check
          %p311 = pneg %p147
        $region72: #{tpu_custom_call.1} parent=69 // pred_check_branch
          %313 = sbr.rel (%p311) target = $region74
        $region73: #{tpu_custom_call.1} parent=69 // pred_region
          _
        $region74: #{tpu_custom_call.1} parent=69 // pred_fallthru
          _
        %s314 = ssub.s32 1, %s24
        %s315 = smul.u32 %s314, %s25
        %s316 = sadd.s32 %s315, %s24
        %p317 = scmp.lt.s32.totalorder %s23, 1
        %s318 = scalar_select %p317, %s23, 1
        %p319 = scmp.lt.s32.totalorder %s316, 1
        %s320 = scalar_select %p319, %s316, 1
        %s321 = smul.addr %s318, 2
        %s322 = sadd.s32 %s320, %s321
        %s323 = smul.addr %s322, 8
        %s324 = scalar_lea.vmem %s0, %s323
        %p325 = pneg %p66
        %p326 = pneg %p63
        %s327 = ssub.s32 1, %s24
        %s328 = smul.u32 %s327, %s25
        %s329 = sadd.s32 %s328, %s24
        %s330 = smul.u32 16, %s329
        %p331 = scmp.lt.s32.totalorder %s330, 31
        %s332 = scalar_select %p331, %s330, 31
        %s333 = smul.addr %s332, 8
        %s334 = scalar_lea.vmem %s1, %s333
        %p335 = pneg %p98
        %p336 = pneg %p95
        %p337 = pneg %p119
        %p338 = pneg %p116
        %s339 = sand.u32 %s134, 1
        %s340 = sand.u32 %s134, 1
        %s341 = smul.addr %s340, 56
        %s342 = scalar_lea.vmem [#allocation5], %s341
        %p343 = pneg %p147
        %p344 = pneg %p144
        %p345 = pneg %p179
        %p346 = pneg %p176
        %s347 = sand.u32 %s166, 1
        %s348 = scalar_lea.sflag [#allocation7], %s347
        %s349 = sand.u32 %s166, 1
        %s350 = smul.addr %s349, 8
        %s351 = scalar_lea.vmem [#allocation6], %s350
        %s352 = ssub.s32 1, %s24
        %s353 = smul.u32 %s352, %s25
        %s354 = sadd.s32 %s353, %s24
        %p355 = scmp.lt.s32.totalorder %s23, 1
        %s356 = scalar_select %p355, %s23, 1
        %p357 = scmp.lt.s32.totalorder %s354, 1
        %s358 = scalar_select %p357, %s354, 1
        %s359 = smul.addr %s356, 2
        %s360 = sadd.s32 %s358, %s359
        %s361 = smul.addr %s360, 8
        %s362 = scalar_lea.vmem %s0, %s361
        %s363 = ssub.s32 1, %s24
        %s364 = smul.u32 %s363, %s25
        %s365 = sadd.s32 %s364, %s24
        %s366 = ssub.s32 1, %s24
        %s367 = smul.u32 %s366, %s25
        %s368 = sadd.s32 %s367, %s24
        %s369 = smul.u32 16, %s368
        %p370 = scmp.lt.s32.totalorder %s369, 31
        %s371 = scalar_select %p370, %s369, 31
        %s372 = smul.addr %s371, 8
        %s373 = scalar_lea.vmem %s1, %s372
        %s374 = ssub.s32 1, %s24
        %s375 = smul.u32 %s374, %s25
        %s376 = sadd.s32 %s375, %s24
        %s377 = smul.u32 16, %s376
        %s378 = smul.u32 %s24, %s25
        %s379 = ssub.s32 1, %s24
        %p380 = scmp.eq.s32.totalorder %s24, 0
        // Predicated region
        $region75: #{tpu_custom_call.1} parent=69 // pred_check
          %p381 = pneg %p380
        $region76: #{tpu_custom_call.1} parent=69 // pred_check_branch
          %383 = sbr.rel (%p381) target = $region78
        $region77: #{tpu_custom_call.1} parent=69 // pred_region
          %p384 = scmp.eq.s32.totalorder %s25, 0
          // Predicated region
          $region79: #{tpu_custom_call.1} parent=77 // pred_check
            %p385 = pneg %p384
          $region80: #{tpu_custom_call.1} parent=77 // pred_check_branch
            %387 = sbr.rel (%p385) target = $region82
          $region81: #{tpu_custom_call.1} parent=77 // pred_region
            %vm388 = vcmask 408576
            %389 = vst.msk [vmem:[#allocation2] sm:$0xff] %vm388, 0.0
          $region82: #{tpu_custom_call.1} parent=77 // pred_fallthru
            _
          %v390 = vld [vmem:[#allocation2] sm:$0xff]
          %v391 = vld [vmem:[%s362] sm:$0xff]
          %v392 = vld [vmem:[%s373] sm:$0xff]
          %v393 = vld [vmem:[%s373 + $0x8] sm:$0xff]
          %v394 = vld [vmem:[%s373 + $0x10] sm:$0xff]
          %v395 = vld [vmem:[%s373 + $0x18] sm:$0xff]
          %v396 = vld [vmem:[%s373 + $0x20] sm:$0xff]
          %v397 = vld [vmem:[%s373 + $0x28] sm:$0xff]
          %v398 = vld [vmem:[%s373 + $0x30] sm:$0xff]
          %v399 = vld [vmem:[%s373 + $0x38] sm:$0xff]
          %v400 = vld [vmem:[%s373 + $0x40] sm:$0xff]
          %v401 = vld [vmem:[%s373 + $0x48] sm:$0xff]
          %v402 = vld [vmem:[%s373 + $0x50] sm:$0xff]
          %v403 = vld [vmem:[%s373 + $0x58] sm:$0xff]
          %v404 = vld [vmem:[%s373 + $0x60] sm:$0xff]
          %v405 = vld [vmem:[%s373 + $0x68] sm:$0xff]
          %v406 = vld [vmem:[%s373 + $0x70] sm:$0xff]
          %v407 = vld [vmem:[%s373 + $0x78] sm:$0xff]
          %408 = vmatprep.subr.mxu0 0.0
          %409 = vmatpush1.msra.mxu0 %v407
          %410 = vmatprep.subr.mxu0 0.0
          %411 = vmatpush1.msra.mxu0 %v406
          %412 = vmatprep.subr.mxu0 0.0
          %413 = vmatpush1.msra.mxu0 %v405
          %414 = vmatprep.subr.mxu0 0.0
          %415 = vmatpush1.msra.mxu0 %v404
          %416 = vmatprep.subr.mxu0 0.0
          %417 = vmatpush1.msra.mxu0 %v403
          %418 = vmatprep.subr.mxu0 0.0
          %419 = vmatpush1.msra.mxu0 %v402
          %420 = vmatprep.subr.mxu0 0.0
          %421 = vmatpush1.msra.mxu0 %v401
          %422 = vmatprep.subr.mxu0 0.0
          %423 = vmatpush1.msra.mxu0 %v400
          %424 = vmatprep.subr.mxu0 0.0
          %425 = vmatpush1.msra.mxu0 %v399
          %426 = vmatprep.subr.mxu0 0.0
          %427 = vmatpush1.msra.mxu0 %v398
          %428 = vmatprep.subr.mxu0 0.0
          %429 = vmatpush1.msra.mxu0 %v397
          %430 = vmatprep.subr.mxu0 0.0
          %431 = vmatpush1.msra.mxu0 %v396
          %432 = vmatprep.subr.mxu0 0.0
          %433 = vmatpush1.msra.mxu0 %v395
          %434 = vmatprep.subr.mxu0 0.0
          %435 = vmatpush1.msra.mxu0 %v394
          %436 = vmatprep.subr.mxu0 0.0
          %437 = vmatpush1.msra.mxu0 %v393
          %438 = vmatprep.subr.mxu0 0.0
          %439 = vmatpush1.msra.mxu0 %v392
          %440 = vmatprep.subr.mxu0 0.0
          %441 = vmatpush2.msra.mxu0 0.0
          %442 = vmatprep.subr.mxu0 0.0
          %443 = vmatpush2.msra.mxu0 0.0
          %444 = vmatprep.subr.mxu0 0.0
          %445 = vmatpush2.msra.mxu0 0.0
          %446 = vmatprep.subr.mxu0 0.0
          %447 = vmatpush2.msra.mxu0 0.0
          %448 = vmatprep.subr.mxu0 0.0
          %449 = vmatpush2.msra.mxu0 0.0
          %450 = vmatprep.subr.mxu0 0.0
          %451 = vmatpush2.msra.mxu0 0.0
          %452 = vmatprep.subr.mxu0 0.0
          %453 = vmatpush2.msra.mxu0 0.0
          %454 = vmatprep.subr.mxu0 0.0
          %455 = vmatpush2.msra.mxu0 0.0
          %456 = vmatprep.subr.mxu0 0.0
          %457 = vmatpush2.msra.mxu0 0.0
          %458 = vmatprep.subr.mxu0 0.0
          %459 = vmatpush2.msra.mxu0 0.0
          %460 = vmatprep.subr.mxu0 0.0
          %461 = vmatpush2.msra.mxu0 0.0
          %462 = vmatprep.subr.mxu0 0.0
          %463 = vmatpush2.msra.mxu0 0.0
          %464 = vmatprep.subr.mxu0 0.0
          %465 = vmatpush2.msra.mxu0 0.0
          %466 = vmatprep.subr.mxu0 0.0
          %467 = vmatpush2.msra.mxu0 0.0
          %468 = vmatprep.subr.mxu0 0.0
          %469 = vmatpush2.msra.mxu0 0.0
          %470 = vmatprep.subr.mxu0 0.0
          %471 = vmatpush2.msra.mxu0 0.0
          %472 = vmatprep.mubr.f32.mxu0 0.0
          %473 = vmatmul.mubr.f32.gmra.mxu0 %v391
          %v474 = vpop.f32.mrf.mxu0
          %v475 = vadd.f32 0.0, %v474
          %v476 = vpop.f32.mrf.mxu0
          %477 = vdwg.mxu0
          %v478 = vadd.f32 %v390, %v475
          %vm479 = vcmask 408576
          %480 = vst.msk [vmem:[#allocation2] sm:$0xff] %vm479, %v478
          %v481 = vld [vmem:[%s362] sm:$0xff]
          %482 = vst [vmem:[%s351] sm:$0xff] %v481
        $region78: #{tpu_custom_call.1} parent=69 // pred_fallthru
          _
        %p483 = scmp.eq.s32.totalorder %s24, 1
        %p484 = scmp.eq.s32.totalorder %s25, 0
        %p485 = pnand %p483, %p484
        %p486 = pneg %p485
        // Predicated region
        $region83: #{tpu_custom_call.1} parent=69 // pred_check
          _
        $region84: #{tpu_custom_call.1} parent=69 // pred_check_branch
          %488 = sbr.rel (%p485) target = $region86
        $region85: #{tpu_custom_call.1} parent=69 // pred_region
          %v489 = vld [vmem:[#allocation2] sm:$0xff]
          %v490 = vld [vmem:[%s2] sm:$0x3]
          %vm491 = vcmask 64512
          %v493 = vsel %vm491, %v490, 0
          %495 = vmatprep.subr.mxu0 0.0
          %496 = vmatpush1.msra.mxu0 0.0
          %497 = vmatprep.subr.mxu0 0.0
          %498 = vmatpush1.msra.mxu0 0.0
          %499 = vmatprep.subr.mxu0 0.0
          %500 = vmatpush1.msra.mxu0 0.0
          %501 = vmatprep.subr.mxu0 0.0
          %502 = vmatpush1.msra.mxu0 0.0
          %503 = vmatprep.subr.mxu0 0.0
          %504 = vmatpush1.msra.mxu0 0.0
          %505 = vmatprep.subr.mxu0 0.0
          %506 = vmatpush1.msra.mxu0 0.0
          %507 = vmatprep.subr.mxu0 0.0
          %508 = vmatpush1.msra.mxu0 0.0
          %509 = vmatprep.subr.mxu0 0.0
          %510 = vmatpush1.msra.mxu0 0.0
          %511 = vmatprep.subr.mxu0 0.0
          %512 = vmatpush1.msra.mxu0 0.0
          %513 = vmatprep.subr.mxu0 0.0
          %514 = vmatpush1.msra.mxu0 0.0
          %515 = vmatprep.subr.mxu0 0.0
          %516 = vmatpush1.msra.mxu0 0.0
          %517 = vmatprep.subr.mxu0 0.0
          %518 = vmatpush1.msra.mxu0 0.0
          %519 = vmatprep.subr.mxu0 0.0
          %520 = vmatpush1.msra.mxu0 0.0
          %521 = vmatprep.subr.mxu0 0.0
          %522 = vmatpush1.msra.mxu0 0.0
          %523 = vmatprep.subr.mxu0 0.0
          %524 = vmatpush1.msra.mxu0 0.0
          %525 = vmatprep.subr.mxu0 0.0
          %526 = vmatpush1.msra.mxu0 %v489
          %527 = vmatprep.subr.mxu0 0.0
          %528 = vmatpush2.msra.mxu0 0.0
          %529 = vmatprep.subr.mxu0 0.0
          %530 = vmatpush2.msra.mxu0 0.0
          %531 = vmatprep.subr.mxu0 0.0
          %532 = vmatpush2.msra.mxu0 0.0
          %533 = vmatprep.subr.mxu0 0.0
          %534 = vmatpush2.msra.mxu0 0.0
          %535 = vmatprep.subr.mxu0 0.0
          %536 = vmatpush2.msra.mxu0 0.0
          %537 = vmatprep.subr.mxu0 0.0
          %538 = vmatpush2.msra.mxu0 0.0
          %539 = vmatprep.subr.mxu0 0.0
          %540 = vmatpush2.msra.mxu0 0.0
          %541 = vmatprep.subr.mxu0 0.0
          %542 = vmatpush2.msra.mxu0 0.0
          %543 = vmatprep.subr.mxu0 0.0
          %544 = vmatpush2.msra.mxu0 0.0
          %545 = vmatprep.subr.mxu0 0.0
          %546 = vmatpush2.msra.mxu0 0.0
          %547 = vmatprep.subr.mxu0 0.0
          %548 = vmatpush2.msra.mxu0 0.0
          %549 = vmatprep.subr.mxu0 0.0
          %550 = vmatpush2.msra.mxu0 0.0
          %551 = vmatprep.subr.mxu0 0.0
          %552 = vmatpush2.msra.mxu0 0.0
          %553 = vmatprep.subr.mxu0 0.0
          %554 = vmatpush2.msra.mxu0 0.0
          %555 = vmatprep.subr.mxu0 0.0
          %556 = vmatpush2.msra.mxu0 0.0
          %557 = vmatprep.subr.mxu0 0.0
          %558 = vmatpush2.msra.mxu0 0.0
          %559 = vmatprep.mubr.f32.mxu0 0.0
          %560 = vmatmul.mubr.f32.gmra.mxu0 %v493
          %v561 = vpop.f32.mrf.mxu0
          %v562 = vadd.f32 0.0, %v561
          %v563 = vpop.f32.mrf.mxu0
          %564 = vdwg.mxu0
          %vm565 = vcmask 7168
          %v566 = vsel %vm565, %v562, 0.0
          %v567 = vld [vmem:[%s2 + $0x2] sm:$0x3]
          %569 = vrot.lane.b32.xlu0 %v489, 127
          %v570 = vpop.permute.xlu0 %569
          %v573 = vsel %vm491, %v567, 0
          %575 = vmatprep.subr.mxu0 0.0
          %576 = vmatpush1.msra.mxu0 0.0
          %577 = vmatprep.subr.mxu0 0.0
          %578 = vmatpush1.msra.mxu0 0.0
          %579 = vmatprep.subr.mxu0 0.0
          %580 = vmatpush1.msra.mxu0 0.0
          %581 = vmatprep.subr.mxu0 0.0
          %582 = vmatpush1.msra.mxu0 0.0
          %583 = vmatprep.subr.mxu0 0.0
          %584 = vmatpush1.msra.mxu0 0.0
          %585 = vmatprep.subr.mxu0 0.0
          %586 = vmatpush1.msra.mxu0 0.0
          %587 = vmatprep.subr.mxu0 0.0
          %588 = vmatpush1.msra.mxu0 0.0
          %589 = vmatprep.subr.mxu0 0.0
          %590 = vmatpush1.msra.mxu0 0.0
          %591 = vmatprep.subr.mxu0 0.0
          %592 = vmatpush1.msra.mxu0 0.0
          %593 = vmatprep.subr.mxu0 0.0
          %594 = vmatpush1.msra.mxu0 0.0
          %595 = vmatprep.subr.mxu0 0.0
          %596 = vmatpush1.msra.mxu0 0.0
          %597 = vmatprep.subr.mxu0 0.0
          %598 = vmatpush1.msra.mxu0 0.0
          %599 = vmatprep.subr.mxu0 0.0
          %600 = vmatpush1.msra.mxu0 0.0
          %601 = vmatprep.subr.mxu0 0.0
          %602 = vmatpush1.msra.mxu0 0.0
          %603 = vmatprep.subr.mxu0 0.0
          %604 = vmatpush1.msra.mxu0 0.0
          %605 = vmatprep.subr.mxu0 0.0
          %606 = vmatpush1.msra.mxu0 %v570
          %607 = vmatprep.subr.mxu0 0.0
          %608 = vmatpush2.msra.mxu0 0.0
          %609 = vmatprep.subr.mxu0 0.0
          %610 = vmatpush2.msra.mxu0 0.0
          %611 = vmatprep.subr.mxu0 0.0
          %612 = vmatpush2.msra.mxu0 0.0
          %613 = vmatprep.subr.mxu0 0.0
          %614 = vmatpush2.msra.mxu0 0.0
          %615 = vmatprep.subr.mxu0 0.0
          %616 = vmatpush2.msra.mxu0 0.0
          %617 = vmatprep.subr.mxu0 0.0
          %618 = vmatpush2.msra.mxu0 0.0
          %619 = vmatprep.subr.mxu0 0.0
          %620 = vmatpush2.msra.mxu0 0.0
          %621 = vmatprep.subr.mxu0 0.0
          %622 = vmatpush2.msra.mxu0 0.0
          %623 = vmatprep.subr.mxu0 0.0
          %624 = vmatpush2.msra.mxu0 0.0
          %625 = vmatprep.subr.mxu0 0.0
          %626 = vmatpush2.msra.mxu0 0.0
          %627 = vmatprep.subr.mxu0 0.0
          %628 = vmatpush2.msra.mxu0 0.0
          %629 = vmatprep.subr.mxu0 0.0
          %630 = vmatpush2.msra.mxu0 0.0
          %631 = vmatprep.subr.mxu0 0.0
          %632 = vmatpush2.msra.mxu0 0.0
          %633 = vmatprep.subr.mxu0 0.0
          %634 = vmatpush2.msra.mxu0 0.0
          %635 = vmatprep.subr.mxu0 0.0
          %636 = vmatpush2.msra.mxu0 0.0
          %637 = vmatprep.subr.mxu0 0.0
          %638 = vmatpush2.msra.mxu0 0.0
          %639 = vmatprep.mubr.f32.mxu0 0.0
          %640 = vmatmul.mubr.f32.gmra.mxu0 %v573
          %v641 = vpop.f32.mrf.mxu0
          %v642 = vadd.f32 0.0, %v641
          %v643 = vpop.f32.mrf.mxu0
          %644 = vdwg.mxu0
          %646 = vrot.lane.b32.xlu0 %v642, 1
          %v647 = vpop.permute.xlu0 %646
          %v649 = vsel %vm565, 0.0, %v647
          %vm650 = vcmask 39936
          %v651 = vsel %vm650, %v649, 0.0
          %v652 = vld [vmem:[%s2 + $0x4] sm:$0x3]
          %653 = vrot.lane.b32.xlu0 %v489, 123
          %v654 = vpop.permute.xlu0 %653
          %v657 = vsel %vm491, %v652, 0
          %659 = vmatprep.subr.mxu0 0.0
          %660 = vmatpush1.msra.mxu0 0.0
          %661 = vmatprep.subr.mxu0 0.0
          %662 = vmatpush1.msra.mxu0 0.0
          %663 = vmatprep.subr.mxu0 0.0
          %664 = vmatpush1.msra.mxu0 0.0
          %665 = vmatprep.subr.mxu0 0.0
          %666 = vmatpush1.msra.mxu0 0.0
          %667 = vmatprep.subr.mxu0 0.0
          %668 = vmatpush1.msra.mxu0 0.0
          %669 = vmatprep.subr.mxu0 0.0
          %670 = vmatpush1.msra.mxu0 0.0
          %671 = vmatprep.subr.mxu0 0.0
          %672 = vmatpush1.msra.mxu0 0.0
          %673 = vmatprep.subr.mxu0 0.0
          %674 = vmatpush1.msra.mxu0 0.0
          %675 = vmatprep.subr.mxu0 0.0
          %676 = vmatpush1.msra.mxu0 0.0
          %677 = vmatprep.subr.mxu0 0.0
          %678 = vmatpush1.msra.mxu0 0.0
          %679 = vmatprep.subr.mxu0 0.0
          %680 = vmatpush1.msra.mxu0 0.0
          %681 = vmatprep.subr.mxu0 0.0
          %682 = vmatpush1.msra.mxu0 0.0
          %683 = vmatprep.subr.mxu0 0.0
          %684 = vmatpush1.msra.mxu0 0.0
          %685 = vmatprep.subr.mxu0 0.0
          %686 = vmatpush1.msra.mxu0 0.0
          %687 = vmatprep.subr.mxu0 0.0
          %688 = vmatpush1.msra.mxu0 0.0
          %689 = vmatprep.subr.mxu0 0.0
          %690 = vmatpush1.msra.mxu0 %v654
          %691 = vmatprep.subr.mxu0 0.0
          %692 = vmatpush2.msra.mxu0 0.0
          %693 = vmatprep.subr.mxu0 0.0
          %694 = vmatpush2.msra.mxu0 0.0
          %695 = vmatprep.subr.mxu0 0.0
          %696 = vmatpush2.msra.mxu0 0.0
          %697 = vmatprep.subr.mxu0 0.0
          %698 = vmatpush2.msra.mxu0 0.0
          %699 = vmatprep.subr.mxu0 0.0
          %700 = vmatpush2.msra.mxu0 0.0
          %701 = vmatprep.subr.mxu0 0.0
          %702 = vmatpush2.msra.mxu0 0.0
          %703 = vmatprep.subr.mxu0 0.0
          %704 = vmatpush2.msra.mxu0 0.0
          %705 = vmatprep.subr.mxu0 0.0
          %706 = vmatpush2.msra.mxu0 0.0
          %707 = vmatprep.subr.mxu0 0.0
          %708 = vmatpush2.msra.mxu0 0.0
          %709 = vmatprep.subr.mxu0 0.0
          %710 = vmatpush2.msra.mxu0 0.0
          %711 = vmatprep.subr.mxu0 0.0
          %712 = vmatpush2.msra.mxu0 0.0
          %713 = vmatprep.subr.mxu0 0.0
          %714 = vmatpush2.msra.mxu0 0.0
          %715 = vmatprep.subr.mxu0 0.0
          %716 = vmatpush2.msra.mxu0 0.0
          %717 = vmatprep.subr.mxu0 0.0
          %718 = vmatpush2.msra.mxu0 0.0
          %719 = vmatprep.subr.mxu0 0.0
          %720 = vmatpush2.msra.mxu0 0.0
          %721 = vmatprep.subr.mxu0 0.0
          %722 = vmatpush2.msra.mxu0 0.0
          %723 = vmatprep.mubr.f32.mxu0 0.0
          %724 = vmatmul.mubr.f32.gmra.mxu0 %v657
          %v725 = vpop.f32.mrf.mxu0
          %v726 = vadd.f32 0.0, %v725
          %v727 = vpop.f32.mrf.mxu0
          %728 = vdwg.mxu0
          %730 = vrot.lane.b32.xlu0 %v726, 5
          %v731 = vpop.permute.xlu0 %730
          %v733 = vsel %vm650, 0.0, %v731
          %vm734 = vcmask 113664
          %v735 = vsel %vm734, %v733, 0.0
          %v736 = vld [vmem:[%s2 + $0x6] sm:$0x3]
          %737 = vrot.lane.b32.xlu0 %v489, 114
          %v738 = vpop.permute.xlu0 %737
          %v741 = vsel %vm491, %v736, 0
          %743 = vmatprep.subr.mxu0 0.0
          %744 = vmatpush1.msra.mxu0 0.0
          %745 = vmatprep.subr.mxu0 0.0
          %746 = vmatpush1.msra.mxu0 0.0
          %747 = vmatprep.subr.mxu0 0.0
          %748 = vmatpush1.msra.mxu0 0.0
          %749 = vmatprep.subr.mxu0 0.0
          %750 = vmatpush1.msra.mxu0 0.0
          %751 = vmatprep.subr.mxu0 0.0
          %752 = vmatpush1.msra.mxu0 0.0
          %753 = vmatprep.subr.mxu0 0.0
          %754 = vmatpush1.msra.mxu0 0.0
          %755 = vmatprep.subr.mxu0 0.0
          %756 = vmatpush1.msra.mxu0 0.0
          %757 = vmatprep.subr.mxu0 0.0
          %758 = vmatpush1.msra.mxu0 0.0
          %759 = vmatprep.subr.mxu0 0.0
          %760 = vmatpush1.msra.mxu0 0.0
          %761 = vmatprep.subr.mxu0 0.0
          %762 = vmatpush1.msra.mxu0 0.0
          %763 = vmatprep.subr.mxu0 0.0
          %764 = vmatpush1.msra.mxu0 0.0
          %765 = vmatprep.subr.mxu0 0.0
          %766 = vmatpush1.msra.mxu0 0.0
          %767 = vmatprep.subr.mxu0 0.0
          %768 = vmatpush1.msra.mxu0 0.0
          %769 = vmatprep.subr.mxu0 0.0
          %770 = vmatpush1.msra.mxu0 0.0
          %771 = vmatprep.subr.mxu0 0.0
          %772 = vmatpush1.msra.mxu0 0.0
          %773 = vmatprep.subr.mxu0 0.0
          %774 = vmatpush1.msra.mxu0 %v738
          %775 = vmatprep.subr.mxu0 0.0
          %776 = vmatpush2.msra.mxu0 0.0
          %777 = vmatprep.subr.mxu0 0.0
          %778 = vmatpush2.msra.mxu0 0.0
          %779 = vmatprep.subr.mxu0 0.0
          %780 = vmatpush2.msra.mxu0 0.0
          %781 = vmatprep.subr.mxu0 0.0
          %782 = vmatpush2.msra.mxu0 0.0
          %783 = vmatprep.subr.mxu0 0.0
          %784 = vmatpush2.msra.mxu0 0.0
          %785 = vmatprep.subr.mxu0 0.0
          %786 = vmatpush2.msra.mxu0 0.0
          %787 = vmatprep.subr.mxu0 0.0
          %788 = vmatpush2.msra.mxu0 0.0
          %789 = vmatprep.subr.mxu0 0.0
          %790 = vmatpush2.msra.mxu0 0.0
          %791 = vmatprep.subr.mxu0 0.0
          %792 = vmatpush2.msra.mxu0 0.0
          %793 = vmatprep.subr.mxu0 0.0
          %794 = vmatpush2.msra.mxu0 0.0
          %795 = vmatprep.subr.mxu0 0.0
          %796 = vmatpush2.msra.mxu0 0.0
          %797 = vmatprep.subr.mxu0 0.0
          %798 = vmatpush2.msra.mxu0 0.0
          %799 = vmatprep.subr.mxu0 0.0
          %800 = vmatpush2.msra.mxu0 0.0
          %801 = vmatprep.subr.mxu0 0.0
          %802 = vmatpush2.msra.mxu0 0.0
          %803 = vmatprep.subr.mxu0 0.0
          %804 = vmatpush2.msra.mxu0 0.0
          %805 = vmatprep.subr.mxu0 0.0
          %806 = vmatpush2.msra.mxu0 0.0
          %807 = vmatprep.mubr.f32.mxu0 0.0
          %808 = vmatmul.mubr.f32.gmra.mxu0 %v741
          %v809 = vpop.f32.mrf.mxu0
          %v810 = vadd.f32 0.0, %v809
          %v811 = vpop.f32.mrf.mxu0
          %812 = vdwg.mxu0
          %814 = vrot.lane.b32.xlu0 %v810, 14
          %v815 = vpop.permute.xlu0 %814
          %v817 = vsel %vm734, 0.0, %v815
          %v819 = vrot.slane %v651, 6
          %v822 = vrot.slane %v735, 4
          %v825 = vrot.slane %v817, 2
          %vm827 = vcmask 1041408
          %v828 = vsel %vm827, %v566, %v819
          %vm829 = vcmask 1043456
          %v830 = vsel %vm829, %v828, %v822
          %vm831 = vcmask 1045504
          %v832 = vsel %vm831, %v830, %v825
          %vm833 = vcmask 408576
          %834 = vst.msk [vmem:[#allocation3] sm:$0xff] %vm833, %v832
        $region86: #{tpu_custom_call.1} parent=69 // pred_fallthru
          _
        // Predicated region
        $region87: #{tpu_custom_call.1} parent=69 // pred_check
          %p835 = pneg %p483
        $region88: #{tpu_custom_call.1} parent=69 // pred_check_branch
          %837 = sbr.rel (%p835) target = $region90
        $region89: #{tpu_custom_call.1} parent=69 // pred_region
          %v838 = vld [vmem:[#allocation3] sm:$0xff]
          %v839 = vld [vmem:[%s310] sm:$0xff]
          %v840 = vld [vmem:[%s310 + $0x8] sm:$0xff]
          %v841 = vld [vmem:[%s310 + $0x10] sm:$0xff]
          %v842 = vld [vmem:[%s310 + $0x18] sm:$0xff]
          %v843 = vld [vmem:[%s310 + $0x20] sm:$0xff]
          %v844 = vld [vmem:[%s310 + $0x28] sm:$0xff]
          %v845 = vld [vmem:[%s310 + $0x30] sm:$0x3]
          %vm846 = vcmask 408576
          %v848 = vsel %vm846, %v838, 0
          %vm850 = vcmask 1041408
          %v852 = vsel %vm850, %v845, 0
          %854 = vmatprep.subr.mxu0 0.0
          %855 = vmatpush1.msra.mxu0 0.0
          %856 = vmatprep.subr.mxu0 0.0
          %857 = vmatpush1.msra.mxu0 0.0
          %858 = vmatprep.subr.mxu0 0.0
          %859 = vmatpush1.msra.mxu0 0.0
          %860 = vmatprep.subr.mxu0 0.0
          %861 = vmatpush1.msra.mxu0 0.0
          %862 = vmatprep.subr.mxu0 0.0
          %863 = vmatpush1.msra.mxu0 0.0
          %864 = vmatprep.subr.mxu0 0.0
          %865 = vmatpush1.msra.mxu0 0.0
          %866 = vmatprep.subr.mxu0 0.0
          %867 = vmatpush1.msra.mxu0 0.0
          %868 = vmatprep.subr.mxu0 0.0
          %869 = vmatpush1.msra.mxu0 0.0
          %870 = vmatprep.subr.mxu0 0.0
          %871 = vmatpush1.msra.mxu0 0.0
          %872 = vmatprep.subr.mxu0 0.0
          %873 = vmatpush1.msra.mxu0 %v852
          %874 = vmatprep.subr.mxu0 0.0
          %875 = vmatpush1.msra.mxu0 %v844
          %876 = vmatprep.subr.mxu0 0.0
          %877 = vmatpush1.msra.mxu0 %v843
          %878 = vmatprep.subr.mxu0 0.0
          %879 = vmatpush1.msra.mxu0 %v842
          %880 = vmatprep.subr.mxu0 0.0
          %881 = vmatpush1.msra.mxu0 %v841
          %882 = vmatprep.subr.mxu0 0.0
          %883 = vmatpush1.msra.mxu0 %v840
          %884 = vmatprep.subr.mxu0 0.0
          %885 = vmatpush1.msra.mxu0 %v839
          %886 = vmatprep.subr.mxu0 0.0
          %887 = vmatpush2.msra.mxu0 0.0
          %888 = vmatprep.subr.mxu0 0.0
          %889 = vmatpush2.msra.mxu0 0.0
          %890 = vmatprep.subr.mxu0 0.0
          %891 = vmatpush2.msra.mxu0 0.0
          %892 = vmatprep.subr.mxu0 0.0
          %893 = vmatpush2.msra.mxu0 0.0
          %894 = vmatprep.subr.mxu0 0.0
          %895 = vmatpush2.msra.mxu0 0.0
          %896 = vmatprep.subr.mxu0 0.0
          %897 = vmatpush2.msra.mxu0 0.0
          %898 = vmatprep.subr.mxu0 0.0
          %899 = vmatpush2.msra.mxu0 0.0
          %900 = vmatprep.subr.mxu0 0.0
          %901 = vmatpush2.msra.mxu0 0.0
          %902 = vmatprep.subr.mxu0 0.0
          %903 = vmatpush2.msra.mxu0 0.0
          %904 = vmatprep.subr.mxu0 0.0
          %905 = vmatpush2.msra.mxu0 0.0
          %906 = vmatprep.subr.mxu0 0.0
          %907 = vmatpush2.msra.mxu0 0.0
          %908 = vmatprep.subr.mxu0 0.0
          %909 = vmatpush2.msra.mxu0 0.0
          %910 = vmatprep.subr.mxu0 0.0
          %911 = vmatpush2.msra.mxu0 0.0
          %912 = vmatprep.subr.mxu0 0.0
          %913 = vmatpush2.msra.mxu0 0.0
          %914 = vmatprep.subr.mxu0 0.0
          %915 = vmatpush2.msra.mxu0 0.0
          %916 = vmatprep.subr.mxu0 0.0
          %917 = vmatpush2.msra.mxu0 0.0
          %918 = vmatprep.mubr.f32.mxu0 0.0
          %919 = vmatmul.mubr.f32.gmra.mxu0 %v848
          %v920 = vpop.f32.mrf.mxu0
          %v921 = vadd.f32 0.0, %v920
          %v922 = vpop.f32.mrf.mxu0
          %923 = vdwg.mxu0
          %924 = vst [vmem:[%s351] sm:$0xff] %v921
        $region90: #{tpu_custom_call.1} parent=69 // pred_fallthru
          _
        %s925 = sand.u32 %s166, 1
        %s926 = scalar_lea.sflag [#allocation7], %s925
        %s927 = sand.u32 %s166, 1
        %s928 = smul.addr %s927, 8
        %s929 = scalar_lea.vmem [#allocation6], %s928
        // Predicated region
        $region91: #{tpu_custom_call.1} parent=69 // pred_check
          %p930 = pneg %p176
        $region92: #{tpu_custom_call.1} parent=69 // pred_check_branch
          %932 = sbr.rel (%p930) target = $region94
        $region93: #{tpu_custom_call.1} parent=69 // pred_region
          %s933 = ssub.s32 1, %s24
          %s935 = ssub.s32 128, 128
          %936 = vsyncadd %s926, %s935
          %s937 = smul.addr %s933, 2
          %s938 = sadd.s32 %s25, %s937
          %s939 = smul.addr %s23, 4
          %s940 = sadd.s32 %s938, %s939
          %s941 = smul.addr %s940, 128
          %s942 = scalar_lea.hbm %s4, %s941
          %s944 = sshll.u32 %s929, 4
          %s945 = int_to_ptr.vmem [resolvable:$true] %s944
          %947 = dma.vmem_to_hbm [thread:$0]  %s945, 128, %s942, %s926
        $region94: #{tpu_custom_call.1} parent=69 // pred_fallthru
          _
      $region70: #{tpu_custom_call.1} parent=5 // pred_fallthru
        _
      %p948 = scmp.le.s32.totalorder 2, %s13
      // Predicated region
      $region95: #{tpu_custom_call.1} parent=5 // pred_check
        %p949 = pneg %p948
      $region96: #{tpu_custom_call.1} parent=5 // pred_check_branch
        %951 = sbr.rel (%p949) target = $region98
      $region97: #{tpu_custom_call.1} parent=5 // pred_region
        %s952 = ssub.s32 %s13, 2
        // Predicated region
        $region99: #{tpu_custom_call.1} parent=97 // pred_check
          %p953 = pneg %p182
        $region100: #{tpu_custom_call.1} parent=97 // pred_check_branch
          %955 = sbr.rel (%p953) target = $region102
        $region101: #{tpu_custom_call.1} parent=97 // pred_region
          %s956 = sand.u32 %s167, 1
          %s957 = scalar_lea.sflag [#allocation7], %s956
          %s958 = sand.u32 %s167, 1
          %s959 = smul.addr %s958, 8
          %s960 = scalar_lea.vmem [#allocation6], %s959
          %961 = dma.done %s957, 128
        $region102: #{tpu_custom_call.1} parent=97 // pred_fallthru
          _
      $region98: #{tpu_custom_call.1} parent=5 // pred_fallthru
        _
    $region6: #{tpu_custom_call.1} parent=1 // loop_footer
      %s17 = sadd.s32 1, %s13
    $region7: #{tpu_custom_call.1} parent=1 // loop_footer_branch
      %12 = sbr.rel target = $region3
    $region8: #{tpu_custom_call.1} parent=1 // loop_exit
      _
    %962 = vsyncpa [#allocation7], 1
    %s963 = scalar_lea.sflag [#allocation7], 1
    %964 = vsyncpa %s963, 1
  %965 = vsyncmov [#allocation4]
  %s966 = vpop.sfrf %965
  %p967 = scmp.eq.s32.totalorder %s966, 0
  %p968 = pneg %p967
  %970 = shalt.err (%p968)

</llo_original>
